<compile_context>
chip_gen: v7x
topology: tpu7x:2x2x1
jax: 0.10.0
libtpu: 0.0.40
codegen_flags: <defaults>
</compile_context>

<pallas_src>
import math

import jax
import jax.numpy as jnp
from jax.experimental import pallas as pl
from jax.experimental.pallas import tpu as pltpu


def _round_up(n, m):
    return ((n + m - 1) // m) * m


# ------------------------------ fused kernel --------------------------------

def _text_rnn_kernel(x_ref, wih_ref, whh_ref, b_ref, h0_ref, c0_ref,
                     w1_ref, b1_ref, w2_ref, b2_ref, o_ref, *scratch):
    """x_ref:   (S*Bp, D)  bf16  time-major embedded input (rows t*Bp..+Bp).
    wih_ref: (L, D, 4D) bf16  padded W_ih^T per layer (gate order i,f,g,o).
    whh_ref: (L, D, 4D) bf16  padded W_hh^T per layer.
    b_ref:   (L, 1, 4D) f32   b_ih + b_hh, padded lanes zero.
    h0/c0:   (L, Bp, D) f32   padded lanes/rows zero.
    fc1/fc2 weights padded & transposed (bf16), biases f32.
    o_ref:   (Bp, Cp)   f32   lane-dense output (sliced to (B, C) outside).
    scratch: [min(2, L-1) seq buffers (S*Bp, D) f32] + [xproj, h_scr, c_scr].
    """
    *seq_bufs, xproj, h_scr, c_scr = scratch
    Bp = h_scr.shape[0]
    D = h_scr.shape[1]
    S = x_ref.shape[0] // Bp
    L = wih_ref.shape[0]

    for layer in range(L):                       # static unroll over layers
        # ---- hoisted input projection (off the serial critical path) -------
        # One batched (S*Bp, D) @ (D, 4D) bf16 matmul per layer; bias folded
        # in here once instead of per step.
        if layer == 0:
            seq = x_ref[...]                                         # bf16
        else:
            seq = seq_bufs[(layer - 1) % len(seq_bufs)][...].astype(
                jnp.bfloat16)
        xproj[...] = (jnp.dot(seq, wih_ref[layer],
                              preferred_element_type=jnp.float32)
                      + b_ref[layer])                                # f32

        w_hh = whh_ref[layer]                    # (D, 4D) bf16, loaded once
        dst = None if layer == L - 1 else seq_bufs[layer % len(seq_bufs)]

        h_scr[...] = h0_ref[layer]
        c_scr[...] = c0_ref[layer]

        def step(t, carry, w_hh=w_hh, dst=dst):
            row = pl.multiple_of(t * Bp, Bp)     # (8,128)-tile aligned offset
            # recurrent half only: gates = h @ W_hh + (x @ W_ih + b)[t]
            gates = (jnp.dot(h_scr[...].astype(jnp.bfloat16), w_hh,
                             preferred_element_type=jnp.float32)
                     + xproj[pl.ds(row, Bp), :])                 # (Bp, 4D) f32
            # lane-aligned whole-vreg gate slices, PyTorch order i, f, g, o;
            # elementwise gate math kept f32 (v5e-safe; EUP slot anyway).
            i_g = jax.nn.sigmoid(gates[:, 0 * D:1 * D])
            f_g = jax.nn.sigmoid(gates[:, 1 * D:2 * D])
            g_g = jnp.tanh(gates[:, 2 * D:3 * D])
            o_g = jax.nn.sigmoid(gates[:, 3 * D:4 * D])
            c_new = f_g * c_scr[...] + i_g * g_g
            h_new = o_g * jnp.tanh(c_new)
            c_scr[...] = c_new
            h_scr[...] = h_new
            if dst is not None:
                dst[pl.ds(row, Bp), :] = h_new
            return carry

        # Full unroll for short static S (LLO scheduling visibility); partial
        # unroll for long S to avoid code-size / vreg-pressure blowup.
        jax.lax.fori_loop(0, S, step, 0, unroll=(True if S <= 32 else 8))

    # ---- classifier head on outputs[-1] == final h of the last layer -------
    last = h_scr[...].astype(jnp.bfloat16)                           # (Bp, D)
    z = (jnp.dot(last, w1_ref[...], preferred_element_type=jnp.float32)
         + b1_ref[...])
    # TODO(synk): dropout_prob > 0 would need pltpu.prng_seed/prng_random_bits
    # and a train/eval flag; p == 0.0 here so dropout is identity.
    z = jnp.maximum(z, 0.0)                                          # F.relu
    o_ref[...] = (jnp.dot(z.astype(jnp.bfloat16), w2_ref[...],
                          preferred_element_type=jnp.float32)
                  + b2_ref[...]).astype(o_ref.dtype)


# ------------------------- one-time weight packing ---------------------------

def prepare_params(params, num_layers, embed_dim, hidden_dim, num_classes):
    """Pack / pad / transpose / bf16-cast all weights once (not per forward)."""
    H = hidden_dim
    D = _round_up(max(embed_dim, hidden_dim), 128)   # padded feature width
    Cp = _round_up(num_classes, 128)                 # padded class width

    vocab = params["embedding"].shape[0]
    emb_p = jnp.zeros((vocab, D), jnp.float32).at[:, :embed_dim].set(
        params["embedding"])

    wihs, whhs, biases = [], [], []
    for l in range(num_layers):
        w_ih = params[f"w_ih_l{l}"]                  # (4H, In)
        w_hh = params[f"w_hh_l{l}"]                  # (4H, H)
        b = params[f"b_ih_l{l}"] + params[f"b_hh_l{l}"]
        in_dim = w_ih.shape[1]
        wih_p = jnp.zeros((D, 4 * D), jnp.float32)
        whh_p = jnp.zeros((D, 4 * D), jnp.float32)
        bvec = jnp.zeros((1, 4 * D), jnp.float32)
        for g in range(4):                           # gate order i, f, g, o
            wih_p = wih_p.at[:in_dim, g * D:g * D + H].set(
                w_ih[g * H:(g + 1) * H, :].T)
            whh_p = whh_p.at[:H, g * D:g * D + H].set(
                w_hh[g * H:(g + 1) * H, :].T)
            bvec = bvec.at[0, g * D:g * D + H].set(b[g * H:(g + 1) * H])
        wihs.append(wih_p)
        whhs.append(whh_p)
        biases.append(bvec)

    w1p = jnp.zeros((D, D), jnp.float32).at[:H, :H].set(params["fc1_w"].T)
    b1p = jnp.zeros((1, D), jnp.float32).at[0, :H].set(params["fc1_b"])
    w2p = jnp.zeros((D, Cp), jnp.float32).at[:H, :num_classes].set(
        params["fc2_w"].T)
    b2p = jnp.zeros((1, Cp), jnp.float32).at[0, :num_classes].set(
        params["fc2_b"])

    return {
        "embedding": emb_p,                                   # (V, D) f32
        "wih": jnp.stack(wihs).astype(jnp.bfloat16),          # (L, D, 4D) bf16
        "whh": jnp.stack(whhs).astype(jnp.bfloat16),          # (L, D, 4D) bf16
        "bias": jnp.stack(biases),                            # (L, 1, 4D) f32
        "fc1_w": w1p.astype(jnp.bfloat16), "fc1_b": b1p,
        "fc2_w": w2p.astype(jnp.bfloat16), "fc2_b": b2p,
        "D": D, "Cp": Cp, "hidden_dim": H, "num_classes": num_classes,
        "num_layers": num_layers,
    }


# -------------------------------- full forward --------------------------------

def text_rnn_forward(prepped, inputs, hidden):
    """inputs: (B, S) int32 token ids; hidden = (h0, c0), each (L, B, H)."""
    B, S = inputs.shape
    D, Cp = prepped["D"], prepped["Cp"]
    H, C = prepped["hidden_dim"], prepped["num_classes"]
    L = prepped["num_layers"]
    Bp = _round_up(max(B, 8), 8)     # pad batch: MXU fill + unmasked stores

    # Embedding gather (plain-JAX glue). Transpose the tiny id matrix (not the
    # activations) so the gather is already time-major, pad batch rows with
    # id 0 (discarded at the end), flatten to (S*Bp, D), and feed bf16 to the
    # kernel (only ever used as bf16 matmul LHS; halves HBM->VMEM DMA).
    ids = jnp.zeros((S, Bp), jnp.int32).at[:, :B].set(inputs.T)
    x = prepped["embedding"][ids].reshape(S * Bp, D).astype(jnp.bfloat16)

    h0, c0 = hidden
    pad = ((0, 0), (0, Bp - B), (0, D - H))
    h0p = jnp.pad(h0.astype(jnp.float32), pad)                 # (L, Bp, D)
    c0p = jnp.pad(c0.astype(jnp.float32), pad)

    n_seq = min(2, max(L - 1, 0))    # only allocate the buffers actually used
    scratch = (
        [pltpu.VMEM((S * Bp, D), jnp.float32) for _ in range(n_seq)]
        + [pltpu.VMEM((S * Bp, 4 * D), jnp.float32),   # hoisted x-projection
           pltpu.VMEM((Bp, D), jnp.float32),           # h carry
           pltpu.VMEM((Bp, D), jnp.float32)])          # c carry

    # NOTE: at realistic H/L, raise vmem_limit_bytes on v5e/v6e (128 MiB
    # physical) to keep all layer weights resident, and on v7x (64 MiB) stream
    # per-layer weight slabs via memory_space=pl.ANY + make_async_copy; a
    # batch grid axis with dimension_semantics=("parallel",) would use both
    # v7x TensorCores.  Unnecessary at these toy sizes.
    out = pl.pallas_call(
        _text_rnn_kernel,
        out_shape=jax.ShapeDtypeStruct((Bp, Cp), jnp.float32),
        scratch_shapes=scratch,
        compiler_params=pltpu.CompilerParams(
            vmem_limit_bytes=32 * 1024 * 1024),
    )(x, prepped["wih"], prepped["whh"], prepped["bias"], h0p, c0p,
      prepped["fc1_w"], prepped["fc1_b"], prepped["fc2_w"], prepped["fc2_b"])

    return out[:B, :C]                                          # (B, num_classes)


# ------------------------------- parameter init -------------------------------

def init_params(key, vocab_size, embed_dim, hidden_dim, num_layers, num_classes):
    params = {}
    k = 1.0 / math.sqrt(hidden_dim)
    keys = jax.random.split(key, 6 + 4 * num_layers)
    ki = iter(keys)
    params["embedding"] = jax.random.normal(next(ki), (vocab_size, embed_dim),
                                            jnp.float32)
    for layer in range(num_layers):
        in_dim = embed_dim if layer == 0 else hidden_dim
        params[f"w_ih_l{layer}"] = jax.random.uniform(
            next(ki), (4 * hidden_dim, in_dim), jnp.float32, -k, k)
        params[f"w_hh_l{layer}"] = jax.random.uniform(
            next(ki), (4 * hidden_dim, hidden_dim), jnp.float32, -k, k)
        params[f"b_ih_l{layer}"] = jax.random.uniform(
            next(ki), (4 * hidden_dim,), jnp.float32, -k, k)
        params[f"b_hh_l{layer}"] = jax.random.uniform(
            next(ki), (4 * hidden_dim,), jnp.float32, -k, k)
    params["fc1_w"] = jax.random.uniform(next(ki), (hidden_dim, hidden_dim),
                                         jnp.float32, -k, k)
    params["fc1_b"] = jax.random.uniform(next(ki), (hidden_dim,),
                                         jnp.float32, -k, k)
    kc = 1.0 / math.sqrt(hidden_dim)
    params["fc2_w"] = jax.random.uniform(next(ki), (num_classes, hidden_dim),
                                         jnp.float32, -kc, kc)
    params["fc2_b"] = jax.random.uniform(next(ki), (num_classes,),
                                         jnp.float32, -kc, kc)
    return params


if __name__ == "__main__":
    # config: rnn_type='LSTM', dropout_prob=0.0
    VOCAB, EMBED, HIDDEN, LAYERS, CLASSES = 50, 16, 32, 2, 5
    BATCH, SEQ = 2, 8

    key = jax.random.PRNGKey(0)
    pkey, ikey = jax.random.split(key)
    params = init_params(pkey, VOCAB, EMBED, HIDDEN, LAYERS, CLASSES)
    prepped = prepare_params(params, LAYERS, EMBED, HIDDEN, CLASSES)

    inputs = jax.random.randint(ikey, (BATCH, SEQ), 0, VOCAB, jnp.int32)
    # init_hidden(batch_size): zeros (num_layers, B, H); LSTM -> (h0, c0)
    h0 = jnp.zeros((LAYERS, BATCH, HIDDEN), jnp.float32)
    hidden = (h0, h0)

    logits = text_rnn_forward(prepped, inputs, hidden)
    jax.block_until_ready(logits)
    assert logits.shape == (BATCH, CLASSES)
    print("KERNEL_OK")
</pallas_src>

<mosaic_0001>
module attributes {stable_mosaic.version = 11 : i64} {
  func.func @_text_rnn_kernel(%arg0: memref<64x128xbf16, #tpu.memory_space<vmem>>, %arg1: memref<2x128x512xbf16, #tpu.memory_space<vmem>>, %arg2: memref<2x128x512xbf16, #tpu.memory_space<vmem>>, %arg3: memref<2x1x512xf32, #tpu.memory_space<vmem>>, %arg4: memref<2x8x128xf32, #tpu.memory_space<vmem>>, %arg5: memref<2x8x128xf32, #tpu.memory_space<vmem>>, %arg6: memref<128x128xbf16, #tpu.memory_space<vmem>>, %arg7: memref<1x128xf32, #tpu.memory_space<vmem>>, %arg8: memref<128x128xbf16, #tpu.memory_space<vmem>>, %arg9: memref<1x128xf32, #tpu.memory_space<vmem>>, %arg10: memref<8x128xf32, #tpu.memory_space<vmem>>, %arg11: memref<64x128xf32, #tpu.memory_space<vmem>>, %arg12: memref<64x512xf32, #tpu.memory_space<vmem>>, %arg13: memref<8x128xf32, #tpu.memory_space<vmem>>, %arg14: memref<8x128xf32, #tpu.memory_space<vmem>>) attributes {dimension_semantics = [], scalar_prefetch = 0 : i64, scratch_operands = 4 : i64, tpu.core_type = #tpu.core_type<tc>} {
    %c0 = arith.constant 0 : index
    %c0_0 = arith.constant 0 : index
    %0 = vector.load %arg0[%c0, %c0_0] : memref<64x128xbf16, #tpu.memory_space<vmem>>, vector<64x128xbf16>
    %c0_1 = arith.constant 0 : index
    %c0_2 = arith.constant 0 : index
    %c0_3 = arith.constant 0 : index
    %1 = vector.load %arg1[%c0_1, %c0_2, %c0_3] : memref<2x128x512xbf16, #tpu.memory_space<vmem>>, vector<1x128x512xbf16>
    %2 = vector.shape_cast %1 : vector<1x128x512xbf16> to vector<128x512xbf16>
    %cst = arith.constant dense<0.000000e+00> : vector<64x512xf32>
    %3 = tpu.matmul %0, %2, %cst {dimension_numbers = #tpu.dot_dimension_numbers<[1], [0], [0], [1], [0, 0, 1, 1], [], []>} : vector<64x128xbf16>, vector<128x512xbf16>, vector<64x512xf32> -> vector<64x512xf32>
    %c0_4 = arith.constant 0 : index
    %c0_5 = arith.constant 0 : index
    %c0_6 = arith.constant 0 : index
    %4 = vector.load %arg3[%c0_4, %c0_5, %c0_6] : memref<2x1x512xf32, #tpu.memory_space<vmem>>, vector<1x1x512xf32>
    %5 = vector.shape_cast %4 : vector<1x1x512xf32> to vector<1x512xf32>
    %6 = vector.broadcast %5 : vector<1x512xf32> to vector<64x512xf32>
    %7 = arith.addf %3, %6 : vector<64x512xf32>
    %c0_7 = arith.constant 0 : index
    %c0_8 = arith.constant 0 : index
    %8 = vector.load %arg12[%c0_7, %c0_8] : memref<64x512xf32, #tpu.memory_space<vmem>>, vector<64x512xf32>
    tpu.vector_store %arg12[%c0_7, %c0_8], %7 {strides = array<i32>} : memref<64x512xf32, #tpu.memory_space<vmem>>, vector<64x512xf32>,
    %c0_9 = arith.constant 0 : index
    %c0_10 = arith.constant 0 : index
    %c0_11 = arith.constant 0 : index
    %9 = vector.load %arg2[%c0_9, %c0_10, %c0_11] : memref<2x128x512xbf16, #tpu.memory_space<vmem>>, vector<1x128x512xbf16>
    %10 = vector.shape_cast %9 : vector<1x128x512xbf16> to vector<128x512xbf16>
    %c0_12 = arith.constant 0 : index
    %c0_13 = arith.constant 0 : index
    %c0_14 = arith.constant 0 : index
    %11 = vector.load %arg4[%c0_12, %c0_13, %c0_14] : memref<2x8x128xf32, #tpu.memory_space<vmem>>, vector<1x8x128xf32>
    %12 = vector.shape_cast %11 : vector<1x8x128xf32> to vector<8x128xf32>
    %c0_15 = arith.constant 0 : index
    %c0_16 = arith.constant 0 : index
    %13 = vector.load %arg13[%c0_15, %c0_16] : memref<8x128xf32, #tpu.memory_space<vmem>>, vector<8x128xf32>
    tpu.vector_store %arg13[%c0_15, %c0_16], %12 {strides = array<i32>} : memref<8x128xf32, #tpu.memory_space<vmem>>, vector<8x128xf32>,
    %c0_17 = arith.constant 0 : index
    %c0_18 = arith.constant 0 : index
    %c0_19 = arith.constant 0 : index
    %14 = vector.load %arg5[%c0_17, %c0_18, %c0_19] : memref<2x8x128xf32, #tpu.memory_space<vmem>>, vector<1x8x128xf32>
    %15 = vector.shape_cast %14 : vector<1x8x128xf32> to vector<8x128xf32>
    %c0_20 = arith.constant 0 : index
    %c0_21 = arith.constant 0 : index
    %16 = vector.load %arg14[%c0_20, %c0_21] : memref<8x128xf32, #tpu.memory_space<vmem>>, vector<8x128xf32>
    tpu.vector_store %arg14[%c0_20, %c0_21], %15 {strides = array<i32>} : memref<8x128xf32, #tpu.memory_space<vmem>>, vector<8x128xf32>,
    %c0_i32 = arith.constant 0 : i32
    %c8_i32 = arith.constant 8 : i32
    %17 = arith.muli %c0_i32, %c8_i32 : i32
    %18 = tpu.assume_multiple %17, 8 : i32
    %c0_22 = arith.constant 0 : index
    %c0_23 = arith.constant 0 : index
    %19 = vector.load %arg13[%c0_22, %c0_23] : memref<8x128xf32, #tpu.memory_space<vmem>>, vector<8x128xf32>
    %20 = arith.truncf %19 : vector<8x128xf32> to vector<8x128xbf16>
    %cst_24 = arith.constant dense<0.000000e+00> : vector<8x512xf32>
    %21 = tpu.matmul %20, %10, %cst_24 {dimension_numbers = #tpu.dot_dimension_numbers<[1], [0], [0], [1], [0, 0, 1, 1], [], []>} : vector<8x128xbf16>, vector<128x512xbf16>, vector<8x512xf32> -> vector<8x512xf32>
    %22 = arith.index_cast %18 : i32 to index
    %c0_25 = arith.constant 0 : index
    %23 = vector.load %arg12[%22, %c0_25] : memref<64x512xf32, #tpu.memory_space<vmem>>, vector<8x512xf32>
    %24 = arith.addf %21, %23 : vector<8x512xf32>
    %25 = vector.extract_strided_slice %24 {offsets = [0, 0], sizes = [8, 128], strides = [1, 1]} : vector<8x512xf32> to vector<8x128xf32>
    %26 = arith.negf %25 : vector<8x128xf32>
    %27 = math.exp %26 : vector<8x128xf32>
    %cst_26 = arith.constant 1.000000e+00 : f32
    %28 = vector.broadcast %cst_26 : f32 to vector<8x128xf32>
    %29 = arith.addf %28, %27 : vector<8x128xf32>
    %30 = arith.divf %28, %29 : vector<8x128xf32>
    %31 = vector.extract_strided_slice %24 {offsets = [0, 128], sizes = [8, 128], strides = [1, 1]} : vector<8x512xf32> to vector<8x128xf32>
    %32 = arith.negf %31 : vector<8x128xf32>
    %33 = math.exp %32 : vector<8x128xf32>
    %cst_27 = arith.constant 1.000000e+00 : f32
    %34 = vector.broadcast %cst_27 : f32 to vector<8x128xf32>
    %35 = arith.addf %34, %33 : vector<8x128xf32>
    %36 = arith.divf %34, %35 : vector<8x128xf32>
    %37 = vector.extract_strided_slice %24 {offsets = [0, 256], sizes = [8, 128], strides = [1, 1]} : vector<8x512xf32> to vector<8x128xf32>
    %38 = math.tanh %37 : vector<8x128xf32>
    %39 = vector.extract_strided_slice %24 {offsets = [0, 384], sizes = [8, 128], strides = [1, 1]} : vector<8x512xf32> to vector<8x128xf32>
    %40 = arith.negf %39 : vector<8x128xf32>
    %41 = math.exp %40 : vector<8x128xf32>
    %cst_28 = arith.constant 1.000000e+00 : f32
    %42 = vector.broadcast %cst_28 : f32 to vector<8x128xf32>
    %43 = arith.addf %42, %41 : vector<8x128xf32>
    %44 = arith.divf %42, %43 : vector<8x128xf32>
    %c0_29 = arith.constant 0 : index
    %c0_30 = arith.constant 0 : index
    %45 = vector.load %arg14[%c0_29, %c0_30] : memref<8x128xf32, #tpu.memory_space<vmem>>, vector<8x128xf32>
    %46 = arith.mulf %36, %45 : vector<8x128xf32>
    %47 = arith.mulf %30, %38 : vector<8x128xf32>
    %48 = arith.addf %46, %47 : vector<8x128xf32>
    %49 = math.tanh %48 : vector<8x128xf32>
    %50 = arith.mulf %44, %49 : vector<8x128xf32>
    %c0_31 = arith.constant 0 : index
    %c0_32 = arith.constant 0 : index
    %51 = vector.load %arg14[%c0_31, %c0_32] : memref<8x128xf32, #tpu.memory_space<vmem>>, vector<8x128xf32>
    tpu.vector_store %arg14[%c0_31, %c0_32], %48 {strides = array<i32>} : memref<8x128xf32, #tpu.memory_space<vmem>>, vector<8x128xf32>,
    %c0_33 = arith.constant 0 : index
    %c0_34 = arith.constant 0 : index
    %52 = vector.load %arg13[%c0_33, %c0_34] : memref<8x128xf32, #tpu.memory_space<vmem>>, vector<8x128xf32>
    tpu.vector_store %arg13[%c0_33, %c0_34], %50 {strides = array<i32>} : memref<8x128xf32, #tpu.memory_space<vmem>>, vector<8x128xf32>,
    %53 = arith.index_cast %18 : i32 to index
    %c0_35 = arith.constant 0 : index
    %54 = vector.load %arg11[%53, %c0_35] : memref<64x128xf32, #tpu.memory_space<vmem>>, vector<8x128xf32>
    tpu.vector_store %arg11[%53, %c0_35], %50 {strides = array<i32>} : memref<64x128xf32, #tpu.memory_space<vmem>>, vector<8x128xf32>,
    %c1_i32 = arith.constant 1 : i32
    %c8_i32_36 = arith.constant 8 : i32
    %55 = arith.muli %c1_i32, %c8_i32_36 : i32
    %56 = tpu.assume_multiple %55, 8 : i32
    %c0_37 = arith.constant 0 : index
    %c0_38 = arith.constant 0 : index
    %57 = vector.load %arg13[%c0_37, %c0_38] : memref<8x128xf32, #tpu.memory_space<vmem>>, vector<8x128xf32>
    %58 = arith.truncf %57 : vector<8x128xf32> to vector<8x128xbf16>
    %cst_39 = arith.constant dense<0.000000e+00> : vector<8x512xf32>
    %59 = tpu.matmul %58, %10, %cst_39 {dimension_numbers = #tpu.dot_dimension_numbers<[1], [0], [0], [1], [0, 0, 1, 1], [], []>} : vector<8x128xbf16>, vector<128x512xbf16>, vector<8x512xf32> -> vector<8x512xf32>
    %60 = arith.index_cast %56 : i32 to index
    %c0_40 = arith.constant 0 : index
    %61 = vector.load %arg12[%60, %c0_40] : memref<64x512xf32, #tpu.memory_space<vmem>>, vector<8x512xf32>
    %62 = arith.addf %59, %61 : vector<8x512xf32>
    %63 = vector.extract_strided_slice %62 {offsets = [0, 0], sizes = [8, 128], strides = [1, 1]} : vector<8x512xf32> to vector<8x128xf32>
    %64 = arith.negf %63 : vector<8x128xf32>
    %65 = math.exp %64 : vector<8x128xf32>
    %cst_41 = arith.constant 1.000000e+00 : f32
    %66 = vector.broadcast %cst_41 : f32 to vector<8x128xf32>
    %67 = arith.addf %66, %65 : vector<8x128xf32>
    %68 = arith.divf %66, %67 : vector<8x128xf32>
    %69 = vector.extract_strided_slice %62 {offsets = [0, 128], sizes = [8, 128], strides = [1, 1]} : vector<8x512xf32> to vector<8x128xf32>
    %70 = arith.negf %69 : vector<8x128xf32>
    %71 = math.exp %70 : vector<8x128xf32>
    %cst_42 = arith.constant 1.000000e+00 : f32
    %72 = vector.broadcast %cst_42 : f32 to vector<8x128xf32>
    %73 = arith.addf %72, %71 : vector<8x128xf32>
    %74 = arith.divf %72, %73 : vector<8x128xf32>
    %75 = vector.extract_strided_slice %62 {offsets = [0, 256], sizes = [8, 128], strides = [1, 1]} : vector<8x512xf32> to vector<8x128xf32>
    %76 = math.tanh %75 : vector<8x128xf32>
    %77 = vector.extract_strided_slice %62 {offsets = [0, 384], sizes = [8, 128], strides = [1, 1]} : vector<8x512xf32> to vector<8x128xf32>
    %78 = arith.negf %77 : vector<8x128xf32>
    %79 = math.exp %78 : vector<8x128xf32>
    %cst_43 = arith.constant 1.000000e+00 : f32
    %80 = vector.broadcast %cst_43 : f32 to vector<8x128xf32>
    %81 = arith.addf %80, %79 : vector<8x128xf32>
    %82 = arith.divf %80, %81 : vector<8x128xf32>
    %c0_44 = arith.constant 0 : index
    %c0_45 = arith.constant 0 : index
    %83 = vector.load %arg14[%c0_44, %c0_45] : memref<8x128xf32, #tpu.memory_space<vmem>>, vector<8x128xf32>
    %84 = arith.mulf %74, %83 : vector<8x128xf32>
    %85 = arith.mulf %68, %76 : vector<8x128xf32>
    %86 = arith.addf %84, %85 : vector<8x128xf32>
    %87 = math.tanh %86 : vector<8x128xf32>
    %88 = arith.mulf %82, %87 : vector<8x128xf32>
    %c0_46 = arith.constant 0 : index
    %c0_47 = arith.constant 0 : index
    %89 = vector.load %arg14[%c0_46, %c0_47] : memref<8x128xf32, #tpu.memory_space<vmem>>, vector<8x128xf32>
    tpu.vector_store %arg14[%c0_46, %c0_47], %86 {strides = array<i32>} : memref<8x128xf32, #tpu.memory_space<vmem>>, vector<8x128xf32>,
    %c0_48 = arith.constant 0 : index
    %c0_49 = arith.constant 0 : index
    %90 = vector.load %arg13[%c0_48, %c0_49] : memref<8x128xf32, #tpu.memory_space<vmem>>, vector<8x128xf32>
    tpu.vector_store %arg13[%c0_48, %c0_49], %88 {strides = array<i32>} : memref<8x128xf32, #tpu.memory_space<vmem>>, vector<8x128xf32>,
    %91 = arith.index_cast %56 : i32 to index
    %c0_50 = arith.constant 0 : index
    %92 = vector.load %arg11[%91, %c0_50] : memref<64x128xf32, #tpu.memory_space<vmem>>, vector<8x128xf32>
    tpu.vector_store %arg11[%91, %c0_50], %88 {strides = array<i32>} : memref<64x128xf32, #tpu.memory_space<vmem>>, vector<8x128xf32>,
    %c2_i32 = arith.constant 2 : i32
    %c8_i32_51 = arith.constant 8 : i32
    %93 = arith.muli %c2_i32, %c8_i32_51 : i32
    %94 = tpu.assume_multiple %93, 8 : i32
    %c0_52 = arith.constant 0 : index
    %c0_53 = arith.constant 0 : index
    %95 = vector.load %arg13[%c0_52, %c0_53] : memref<8x128xf32, #tpu.memory_space<vmem>>, vector<8x128xf32>
    %96 = arith.truncf %95 : vector<8x128xf32> to vector<8x128xbf16>
    %cst_54 = arith.constant dense<0.000000e+00> : vector<8x512xf32>
    %97 = tpu.matmul %96, %10, %cst_54 {dimension_numbers = #tpu.dot_dimension_numbers<[1], [0], [0], [1], [0, 0, 1, 1], [], []>} : vector<8x128xbf16>, vector<128x512xbf16>, vector<8x512xf32> -> vector<8x512xf32>
    %98 = arith.index_cast %94 : i32 to index
    %c0_55 = arith.constant 0 : index
    %99 = vector.load %arg12[%98, %c0_55] : memref<64x512xf32, #tpu.memory_space<vmem>>, vector<8x512xf32>
    %100 = arith.addf %97, %99 : vector<8x512xf32>
    %101 = vector.extract_strided_slice %100 {offsets = [0, 0], sizes = [8, 128], strides = [1, 1]} : vector<8x512xf32> to vector<8x128xf32>
    %102 = arith.negf %101 : vector<8x128xf32>
    %103 = math.exp %102 : vector<8x128xf32>
    %cst_56 = arith.constant 1.000000e+00 : f32
    %104 = vector.broadcast %cst_56 : f32 to vector<8x128xf32>
    %105 = arith.addf %104, %103 : vector<8x128xf32>
    %106 = arith.divf %104, %105 : vector<8x128xf32>
    %107 = vector.extract_strided_slice %100 {offsets = [0, 128], sizes = [8, 128], strides = [1, 1]} : vector<8x512xf32> to vector<8x128xf32>
    %108 = arith.negf %107 : vector<8x128xf32>
    %109 = math.exp %108 : vector<8x128xf32>
    %cst_57 = arith.constant 1.000000e+00 : f32
    %110 = vector.broadcast %cst_57 : f32 to vector<8x128xf32>
    %111 = arith.addf %110, %109 : vector<8x128xf32>
    %112 = arith.divf %110, %111 : vector<8x128xf32>
    %113 = vector.extract_strided_slice %100 {offsets = [0, 256], sizes = [8, 128], strides = [1, 1]} : vector<8x512xf32> to vector<8x128xf32>
    %114 = math.tanh %113 : vector<8x128xf32>
    %115 = vector.extract_strided_slice %100 {offsets = [0, 384], sizes = [8, 128], strides = [1, 1]} : vector<8x512xf32> to vector<8x128xf32>
    %116 = arith.negf %115 : vector<8x128xf32>
    %117 = math.exp %116 : vector<8x128xf32>
    %cst_58 = arith.constant 1.000000e+00 : f32
    %118 = vector.broadcast %cst_58 : f32 to vector<8x128xf32>
    %119 = arith.addf %118, %117 : vector<8x128xf32>
    %120 = arith.divf %118, %119 : vector<8x128xf32>
    %c0_59 = arith.constant 0 : index
    %c0_60 = arith.constant 0 : index
    %121 = vector.load %arg14[%c0_59, %c0_60] : memref<8x128xf32, #tpu.memory_space<vmem>>, vector<8x128xf32>
    %122 = arith.mulf %112, %121 : vector<8x128xf32>
    %123 = arith.mulf %106, %114 : vector<8x128xf32>
    %124 = arith.addf %122, %123 : vector<8x128xf32>
    %125 = math.tanh %124 : vector<8x128xf32>
    %126 = arith.mulf %120, %125 : vector<8x128xf32>
    %c0_61 = arith.constant 0 : index
    %c0_62 = arith.constant 0 : index
    %127 = vector.load %arg14[%c0_61, %c0_62] : memref<8x128xf32, #tpu.memory_space<vmem>>, vector<8x128xf32>
    tpu.vector_store %arg14[%c0_61, %c0_62], %124 {strides = array<i32>} : memref<8x128xf32, #tpu.memory_space<vmem>>, vector<8x128xf32>,
    %c0_63 = arith.constant 0 : index
    %c0_64 = arith.constant 0 : index
    %128 = vector.load %arg13[%c0_63, %c0_64] : memref<8x128xf32, #tpu.memory_space<vmem>>, vector<8x128xf32>
    tpu.vector_store %arg13[%c0_63, %c0_64], %126 {strides = array<i32>} : memref<8x128xf32, #tpu.memory_space<vmem>>, vector<8x128xf32>,
    %129 = arith.index_cast %94 : i32 to index
    %c0_65 = arith.constant 0 : index
    %130 = vector.load %arg11[%129, %c0_65] : memref<64x128xf32, #tpu.memory_space<vmem>>, vector<8x128xf32>
    tpu.vector_store %arg11[%129, %c0_65], %126 {strides = array<i32>} : memref<64x128xf32, #tpu.memory_space<vmem>>, vector<8x128xf32>,
    %c3_i32 = arith.constant 3 : i32
    %c8_i32_66 = arith.constant 8 : i32
    %131 = arith.muli %c3_i32, %c8_i32_66 : i32
    %132 = tpu.assume_multiple %131, 8 : i32
    %c0_67 = arith.constant 0 : index
    %c0_68 = arith.constant 0 : index
    %133 = vector.load %arg13[%c0_67, %c0_68] : memref<8x128xf32, #tpu.memory_space<vmem>>, vector<8x128xf32>
    %134 = arith.truncf %133 : vector<8x128xf32> to vector<8x128xbf16>
    %cst_69 = arith.constant dense<0.000000e+00> : vector<8x512xf32>
    %135 = tpu.matmul %134, %10, %cst_69 {dimension_numbers = #tpu.dot_dimension_numbers<[1], [0], [0], [1], [0, 0, 1, 1], [], []>} : vector<8x128xbf16>, vector<128x512xbf16>, vector<8x512xf32> -> vector<8x512xf32>
    %136 = arith.index_cast %132 : i32 to index
    %c0_70 = arith.constant 0 : index
    %137 = vector.load %arg12[%136, %c0_70] : memref<64x512xf32, #tpu.memory_space<vmem>>, vector<8x512xf32>
    %138 = arith.addf %135, %137 : vector<8x512xf32>
    %139 = vector.extract_strided_slice %138 {offsets = [0, 0], sizes = [8, 128], strides = [1, 1]} : vector<8x512xf32> to vector<8x128xf32>
    %140 = arith.negf %139 : vector<8x128xf32>
    %141 = math.exp %140 : vector<8x128xf32>
    %cst_71 = arith.constant 1.000000e+00 : f32
    %142 = vector.broadcast %cst_71 : f32 to vector<8x128xf32>
    %143 = arith.addf %142, %141 : vector<8x128xf32>
    %144 = arith.divf %142, %143 : vector<8x128xf32>
    %145 = vector.extract_strided_slice %138 {offsets = [0, 128], sizes = [8, 128], strides = [1, 1]} : vector<8x512xf32> to vector<8x128xf32>
    %146 = arith.negf %145 : vector<8x128xf32>
    %147 = math.exp %146 : vector<8x128xf32>
    %cst_72 = arith.constant 1.000000e+00 : f32
    %148 = vector.broadcast %cst_72 : f32 to vector<8x128xf32>
    %149 = arith.addf %148, %147 : vector<8x128xf32>
    %150 = arith.divf %148, %149 : vector<8x128xf32>
    %151 = vector.extract_strided_slice %138 {offsets = [0, 256], sizes = [8, 128], strides = [1, 1]} : vector<8x512xf32> to vector<8x128xf32>
    %152 = math.tanh %151 : vector<8x128xf32>
    %153 = vector.extract_strided_slice %138 {offsets = [0, 384], sizes = [8, 128], strides = [1, 1]} : vector<8x512xf32> to vector<8x128xf32>
    %154 = arith.negf %153 : vector<8x128xf32>
    %155 = math.exp %154 : vector<8x128xf32>
    %cst_73 = arith.constant 1.000000e+00 : f32
    %156 = vector.broadcast %cst_73 : f32 to vector<8x128xf32>
    %157 = arith.addf %156, %155 : vector<8x128xf32>
    %158 = arith.divf %156, %157 : vector<8x128xf32>
    %c0_74 = arith.constant 0 : index
    %c0_75 = arith.constant 0 : index
    %159 = vector.load %arg14[%c0_74, %c0_75] : memref<8x128xf32, #tpu.memory_space<vmem>>, vector<8x128xf32>
    %160 = arith.mulf %150, %159 : vector<8x128xf32>
    %161 = arith.mulf %144, %152 : vector<8x128xf32>
    %162 = arith.addf %160, %161 : vector<8x128xf32>
    %163 = math.tanh %162 : vector<8x128xf32>
    %164 = arith.mulf %158, %163 : vector<8x128xf32>
    %c0_76 = arith.constant 0 : index
    %c0_77 = arith.constant 0 : index
    %165 = vector.load %arg14[%c0_76, %c0_77] : memref<8x128xf32, #tpu.memory_space<vmem>>, vector<8x128xf32>
    tpu.vector_store %arg14[%c0_76, %c0_77], %162 {strides = array<i32>} : memref<8x128xf32, #tpu.memory_space<vmem>>, vector<8x128xf32>,
    %c0_78 = arith.constant 0 : index
    %c0_79 = arith.constant 0 : index
    %166 = vector.load %arg13[%c0_78, %c0_79] : memref<8x128xf32, #tpu.memory_space<vmem>>, vector<8x128xf32>
    tpu.vector_store %arg13[%c0_78, %c0_79], %164 {strides = array<i32>} : memref<8x128xf32, #tpu.memory_space<vmem>>, vector<8x128xf32>,
    %167 = arith.index_cast %132 : i32 to index
    %c0_80 = arith.constant 0 : index
    %168 = vector.load %arg11[%167, %c0_80] : memref<64x128xf32, #tpu.memory_space<vmem>>, vector<8x128xf32>
    tpu.vector_store %arg11[%167, %c0_80], %164 {strides = array<i32>} : memref<64x128xf32, #tpu.memory_space<vmem>>, vector<8x128xf32>,
    %c4_i32 = arith.constant 4 : i32
    %c8_i32_81 = arith.constant 8 : i32
    %169 = arith.muli %c4_i32, %c8_i32_81 : i32
    %170 = tpu.assume_multiple %169, 8 : i32
    %c0_82 = arith.constant 0 : index
    %c0_83 = arith.constant 0 : index
    %171 = vector.load %arg13[%c0_82, %c0_83] : memref<8x128xf32, #tpu.memory_space<vmem>>, vector<8x128xf32>
    %172 = arith.truncf %171 : vector<8x128xf32> to vector<8x128xbf16>
    %cst_84 = arith.constant dense<0.000000e+00> : vector<8x512xf32>
    %173 = tpu.matmul %172, %10, %cst_84 {dimension_numbers = #tpu.dot_dimension_numbers<[1], [0], [0], [1], [0, 0, 1, 1], [], []>} : vector<8x128xbf16>, vector<128x512xbf16>, vector<8x512xf32> -> vector<8x512xf32>
    %174 = arith.index_cast %170 : i32 to index
    %c0_85 = arith.constant 0 : index
    %175 = vector.load %arg12[%174, %c0_85] : memref<64x512xf32, #tpu.memory_space<vmem>>, vector<8x512xf32>
    %176 = arith.addf %173, %175 : vector<8x512xf32>
    %177 = vector.extract_strided_slice %176 {offsets = [0, 0], sizes = [8, 128], strides = [1, 1]} : vector<8x512xf32> to vector<8x128xf32>
    %178 = arith.negf %177 : vector<8x128xf32>
    %179 = math.exp %178 : vector<8x128xf32>
    %cst_86 = arith.constant 1.000000e+00 : f32
    %180 = vector.broadcast %cst_86 : f32 to vector<8x128xf32>
    %181 = arith.addf %180, %179 : vector<8x128xf32>
    %182 = arith.divf %180, %181 : vector<8x128xf32>
    %183 = vector.extract_strided_slice %176 {offsets = [0, 128], sizes = [8, 128], strides = [1, 1]} : vector<8x512xf32> to vector<8x128xf32>
    %184 = arith.negf %183 : vector<8x128xf32>
    %185 = math.exp %184 : vector<8x128xf32>
    %cst_87 = arith.constant 1.000000e+00 : f32
    %186 = vector.broadcast %cst_87 : f32 to vector<8x128xf32>
    %187 = arith.addf %186, %185 : vector<8x128xf32>
    %188 = arith.divf %186, %187 : vector<8x128xf32>
    %189 = vector.extract_strided_slice %176 {offsets = [0, 256], sizes = [8, 128], strides = [1, 1]} : vector<8x512xf32> to vector<8x128xf32>
    %190 = math.tanh %189 : vector<8x128xf32>
    %191 = vector.extract_strided_slice %176 {offsets = [0, 384], sizes = [8, 128], strides = [1, 1]} : vector<8x512xf32> to vector<8x128xf32>
    %192 = arith.negf %191 : vector<8x128xf32>
    %193 = math.exp %192 : vector<8x128xf32>
    %cst_88 = arith.constant 1.000000e+00 : f32
    %194 = vector.broadcast %cst_88 : f32 to vector<8x128xf32>
    %195 = arith.addf %194, %193 : vector<8x128xf32>
    %196 = arith.divf %194, %195 : vector<8x128xf32>
    %c0_89 = arith.constant 0 : index
    %c0_90 = arith.constant 0 : index
    %197 = vector.load %arg14[%c0_89, %c0_90] : memref<8x128xf32, #tpu.memory_space<vmem>>, vector<8x128xf32>
    %198 = arith.mulf %188, %197 : vector<8x128xf32>
    %199 = arith.mulf %182, %190 : vector<8x128xf32>
    %200 = arith.addf %198, %199 : vector<8x128xf32>
    %201 = math.tanh %200 : vector<8x128xf32>
    %202 = arith.mulf %196, %201 : vector<8x128xf32>
    %c0_91 = arith.constant 0 : index
    %c0_92 = arith.constant 0 : index
    %203 = vector.load %arg14[%c0_91, %c0_92] : memref<8x128xf32, #tpu.memory_space<vmem>>, vector<8x128xf32>
    tpu.vector_store %arg14[%c0_91, %c0_92], %200 {strides = array<i32>} : memref<8x128xf32, #tpu.memory_space<vmem>>, vector<8x128xf32>,
    %c0_93 = arith.constant 0 : index
    %c0_94 = arith.constant 0 : index
    %204 = vector.load %arg13[%c0_93, %c0_94] : memref<8x128xf32, #tpu.memory_space<vmem>>, vector<8x128xf32>
    tpu.vector_store %arg13[%c0_93, %c0_94], %202 {strides = array<i32>} : memref<8x128xf32, #tpu.memory_space<vmem>>, vector<8x128xf32>,
    %205 = arith.index_cast %170 : i32 to index
    %c0_95 = arith.constant 0 : index
    %206 = vector.load %arg11[%205, %c0_95] : memref<64x128xf32, #tpu.memory_space<vmem>>, vector<8x128xf32>
    tpu.vector_store %arg11[%205, %c0_95], %202 {strides = array<i32>} : memref<64x128xf32, #tpu.memory_space<vmem>>, vector<8x128xf32>,
    %c5_i32 = arith.constant 5 : i32
    %c8_i32_96 = arith.constant 8 : i32
    %207 = arith.muli %c5_i32, %c8_i32_96 : i32
    %208 = tpu.assume_multiple %207, 8 : i32
    %c0_97 = arith.constant 0 : index
    %c0_98 = arith.constant 0 : index
    %209 = vector.load %arg13[%c0_97, %c0_98] : memref<8x128xf32, #tpu.memory_space<vmem>>, vector<8x128xf32>
    %210 = arith.truncf %209 : vector<8x128xf32> to vector<8x128xbf16>
    %cst_99 = arith.constant dense<0.000000e+00> : vector<8x512xf32>
    %211 = tpu.matmul %210, %10, %cst_99 {dimension_numbers = #tpu.dot_dimension_numbers<[1], [0], [0], [1], [0, 0, 1, 1], [], []>} : vector<8x128xbf16>, vector<128x512xbf16>, vector<8x512xf32> -> vector<8x512xf32>
    %212 = arith.index_cast %208 : i32 to index
    %c0_100 = arith.constant 0 : index
    %213 = vector.load %arg12[%212, %c0_100] : memref<64x512xf32, #tpu.memory_space<vmem>>, vector<8x512xf32>
    %214 = arith.addf %211, %213 : vector<8x512xf32>
    %215 = vector.extract_strided_slice %214 {offsets = [0, 0], sizes = [8, 128], strides = [1, 1]} : vector<8x512xf32> to vector<8x128xf32>
    %216 = arith.negf %215 : vector<8x128xf32>
    %217 = math.exp %216 : vector<8x128xf32>
    %cst_101 = arith.constant 1.000000e+00 : f32
    %218 = vector.broadcast %cst_101 : f32 to vector<8x128xf32>
    %219 = arith.addf %218, %217 : vector<8x128xf32>
    %220 = arith.divf %218, %219 : vector<8x128xf32>
    %221 = vector.extract_strided_slice %214 {offsets = [0, 128], sizes = [8, 128], strides = [1, 1]} : vector<8x512xf32> to vector<8x128xf32>
    %222 = arith.negf %221 : vector<8x128xf32>
    %223 = math.exp %222 : vector<8x128xf32>
    %cst_102 = arith.constant 1.000000e+00 : f32
    %224 = vector.broadcast %cst_102 : f32 to vector<8x128xf32>
    %225 = arith.addf %224, %223 : vector<8x128xf32>
    %226 = arith.divf %224, %225 : vector<8x128xf32>
    %227 = vector.extract_strided_slice %214 {offsets = [0, 256], sizes = [8, 128], strides = [1, 1]} : vector<8x512xf32> to vector<8x128xf32>
    %228 = math.tanh %227 : vector<8x128xf32>
    %229 = vector.extract_strided_slice %214 {offsets = [0, 384], sizes = [8, 128], strides = [1, 1]} : vector<8x512xf32> to vector<8x128xf32>
    %230 = arith.negf %229 : vector<8x128xf32>
    %231 = math.exp %230 : vector<8x128xf32>
    %cst_103 = arith.constant 1.000000e+00 : f32
    %232 = vector.broadcast %cst_103 : f32 to vector<8x128xf32>
    %233 = arith.addf %232, %231 : vector<8x128xf32>
    %234 = arith.divf %232, %233 : vector<8x128xf32>
    %c0_104 = arith.constant 0 : index
    %c0_105 = arith.constant 0 : index
    %235 = vector.load %arg14[%c0_104, %c0_105] : memref<8x128xf32, #tpu.memory_space<vmem>>, vector<8x128xf32>
    %236 = arith.mulf %226, %235 : vector<8x128xf32>
    %237 = arith.mulf %220, %228 : vector<8x128xf32>
    %238 = arith.addf %236, %237 : vector<8x128xf32>
    %239 = math.tanh %238 : vector<8x128xf32>
    %240 = arith.mulf %234, %239 : vector<8x128xf32>
    %c0_106 = arith.constant 0 : index
    %c0_107 = arith.constant 0 : index
    %241 = vector.load %arg14[%c0_106, %c0_107] : memref<8x128xf32, #tpu.memory_space<vmem>>, vector<8x128xf32>
    tpu.vector_store %arg14[%c0_106, %c0_107], %238 {strides = array<i32>} : memref<8x128xf32, #tpu.memory_space<vmem>>, vector<8x128xf32>,
    %c0_108 = arith.constant 0 : index
    %c0_109 = arith.constant 0 : index
    %242 = vector.load %arg13[%c0_108, %c0_109] : memref<8x128xf32, #tpu.memory_space<vmem>>, vector<8x128xf32>
    tpu.vector_store %arg13[%c0_108, %c0_109], %240 {strides = array<i32>} : memref<8x128xf32, #tpu.memory_space<vmem>>, vector<8x128xf32>,
    %243 = arith.index_cast %208 : i32 to index
    %c0_110 = arith.constant 0 : index
    %244 = vector.load %arg11[%243, %c0_110] : memref<64x128xf32, #tpu.memory_space<vmem>>, vector<8x128xf32>
    tpu.vector_store %arg11[%243, %c0_110], %240 {strides = array<i32>} : memref<64x128xf32, #tpu.memory_space<vmem>>, vector<8x128xf32>,
    %c6_i32 = arith.constant 6 : i32
    %c8_i32_111 = arith.constant 8 : i32
    %245 = arith.muli %c6_i32, %c8_i32_111 : i32
    %246 = tpu.assume_multiple %245, 8 : i32
    %c0_112 = arith.constant 0 : index
    %c0_113 = arith.constant 0 : index
    %247 = vector.load %arg13[%c0_112, %c0_113] : memref<8x128xf32, #tpu.memory_space<vmem>>, vector<8x128xf32>
    %248 = arith.truncf %247 : vector<8x128xf32> to vector<8x128xbf16>
    %cst_114 = arith.constant dense<0.000000e+00> : vector<8x512xf32>
    %249 = tpu.matmul %248, %10, %cst_114 {dimension_numbers = #tpu.dot_dimension_numbers<[1], [0], [0], [1], [0, 0, 1, 1], [], []>} : vector<8x128xbf16>, vector<128x512xbf16>, vector<8x512xf32> -> vector<8x512xf32>
    %250 = arith.index_cast %246 : i32 to index
    %c0_115 = arith.constant 0 : index
    %251 = vector.load %arg12[%250, %c0_115] : memref<64x512xf32, #tpu.memory_space<vmem>>, vector<8x512xf32>
    %252 = arith.addf %249, %251 : vector<8x512xf32>
    %253 = vector.extract_strided_slice %252 {offsets = [0, 0], sizes = [8, 128], strides = [1, 1]} : vector<8x512xf32> to vector<8x128xf32>
    %254 = arith.negf %253 : vector<8x128xf32>
    %255 = math.exp %254 : vector<8x128xf32>
    %cst_116 = arith.constant 1.000000e+00 : f32
    %256 = vector.broadcast %cst_116 : f32 to vector<8x128xf32>
    %257 = arith.addf %256, %255 : vector<8x128xf32>
    %258 = arith.divf %256, %257 : vector<8x128xf32>
    %259 = vector.extract_strided_slice %252 {offsets = [0, 128], sizes = [8, 128], strides = [1, 1]} : vector<8x512xf32> to vector<8x128xf32>
    %260 = arith.negf %259 : vector<8x128xf32>
    %261 = math.exp %260 : vector<8x128xf32>
    %cst_117 = arith.constant 1.000000e+00 : f32
    %262 = vector.broadcast %cst_117 : f32 to vector<8x128xf32>
    %263 = arith.addf %262, %261 : vector<8x128xf32>
    %264 = arith.divf %262, %263 : vector<8x128xf32>
    %265 = vector.extract_strided_slice %252 {offsets = [0, 256], sizes = [8, 128], strides = [1, 1]} : vector<8x512xf32> to vector<8x128xf32>
    %266 = math.tanh %265 : vector<8x128xf32>
    %267 = vector.extract_strided_slice %252 {offsets = [0, 384], sizes = [8, 128], strides = [1, 1]} : vector<8x512xf32> to vector<8x128xf32>
    %268 = arith.negf %267 : vector<8x128xf32>
    %269 = math.exp %268 : vector<8x128xf32>
    %cst_118 = arith.constant 1.000000e+00 : f32
    %270 = vector.broadcast %cst_118 : f32 to vector<8x128xf32>
    %271 = arith.addf %270, %269 : vector<8x128xf32>
    %272 = arith.divf %270, %271 : vector<8x128xf32>
    %c0_119 = arith.constant 0 : index
    %c0_120 = arith.constant 0 : index
    %273 = vector.load %arg14[%c0_119, %c0_120] : memref<8x128xf32, #tpu.memory_space<vmem>>, vector<8x128xf32>
    %274 = arith.mulf %264, %273 : vector<8x128xf32>
    %275 = arith.mulf %258, %266 : vector<8x128xf32>
    %276 = arith.addf %274, %275 : vector<8x128xf32>
    %277 = math.tanh %276 : vector<8x128xf32>
    %278 = arith.mulf %272, %277 : vector<8x128xf32>
    %c0_121 = arith.constant 0 : index
    %c0_122 = arith.constant 0 : index
    %279 = vector.load %arg14[%c0_121, %c0_122] : memref<8x128xf32, #tpu.memory_space<vmem>>, vector<8x128xf32>
    tpu.vector_store %arg14[%c0_121, %c0_122], %276 {strides = array<i32>} : memref<8x128xf32, #tpu.memory_space<vmem>>, vector<8x128xf32>,
    %c0_123 = arith.constant 0 : index
    %c0_124 = arith.constant 0 : index
    %280 = vector.load %arg13[%c0_123, %c0_124] : memref<8x128xf32, #tpu.memory_space<vmem>>, vector<8x128xf32>
    tpu.vector_store %arg13[%c0_123, %c0_124], %278 {strides = array<i32>} : memref<8x128xf32, #tpu.memory_space<vmem>>, vector<8x128xf32>,
    %281 = arith.index_cast %246 : i32 to index
    %c0_125 = arith.constant 0 : index
    %282 = vector.load %arg11[%281, %c0_125] : memref<64x128xf32, #tpu.memory_space<vmem>>, vector<8x128xf32>
    tpu.vector_store %arg11[%281, %c0_125], %278 {strides = array<i32>} : memref<64x128xf32, #tpu.memory_space<vmem>>, vector<8x128xf32>,
    %c7_i32 = arith.constant 7 : i32
    %c8_i32_126 = arith.constant 8 : i32
    %283 = arith.muli %c7_i32, %c8_i32_126 : i32
    %284 = tpu.assume_multiple %283, 8 : i32
    %c0_127 = arith.constant 0 : index
    %c0_128 = arith.constant 0 : index
    %285 = vector.load %arg13[%c0_127, %c0_128] : memref<8x128xf32, #tpu.memory_space<vmem>>, vector<8x128xf32>
    %286 = arith.truncf %285 : vector<8x128xf32> to vector<8x128xbf16>
    %cst_129 = arith.constant dense<0.000000e+00> : vector<8x512xf32>
    %287 = tpu.matmul %286, %10, %cst_129 {dimension_numbers = #tpu.dot_dimension_numbers<[1], [0], [0], [1], [0, 0, 1, 1], [], []>} : vector<8x128xbf16>, vector<128x512xbf16>, vector<8x512xf32> -> vector<8x512xf32>
    %288 = arith.index_cast %284 : i32 to index
    %c0_130 = arith.constant 0 : index
    %289 = vector.load %arg12[%288, %c0_130] : memref<64x512xf32, #tpu.memory_space<vmem>>, vector<8x512xf32>
    %290 = arith.addf %287, %289 : vector<8x512xf32>
    %291 = vector.extract_strided_slice %290 {offsets = [0, 0], sizes = [8, 128], strides = [1, 1]} : vector<8x512xf32> to vector<8x128xf32>
    %292 = arith.negf %291 : vector<8x128xf32>
    %293 = math.exp %292 : vector<8x128xf32>
    %cst_131 = arith.constant 1.000000e+00 : f32
    %294 = vector.broadcast %cst_131 : f32 to vector<8x128xf32>
    %295 = arith.addf %294, %293 : vector<8x128xf32>
    %296 = arith.divf %294, %295 : vector<8x128xf32>
    %297 = vector.extract_strided_slice %290 {offsets = [0, 128], sizes = [8, 128], strides = [1, 1]} : vector<8x512xf32> to vector<8x128xf32>
    %298 = arith.negf %297 : vector<8x128xf32>
    %299 = math.exp %298 : vector<8x128xf32>
    %cst_132 = arith.constant 1.000000e+00 : f32
    %300 = vector.broadcast %cst_132 : f32 to vector<8x128xf32>
    %301 = arith.addf %300, %299 : vector<8x128xf32>
    %302 = arith.divf %300, %301 : vector<8x128xf32>
    %303 = vector.extract_strided_slice %290 {offsets = [0, 256], sizes = [8, 128], strides = [1, 1]} : vector<8x512xf32> to vector<8x128xf32>
    %304 = math.tanh %303 : vector<8x128xf32>
    %305 = vector.extract_strided_slice %290 {offsets = [0, 384], sizes = [8, 128], strides = [1, 1]} : vector<8x512xf32> to vector<8x128xf32>
    %306 = arith.negf %305 : vector<8x128xf32>
    %307 = math.exp %306 : vector<8x128xf32>
    %cst_133 = arith.constant 1.000000e+00 : f32
    %308 = vector.broadcast %cst_133 : f32 to vector<8x128xf32>
    %309 = arith.addf %308, %307 : vector<8x128xf32>
    %310 = arith.divf %308, %309 : vector<8x128xf32>
    %c0_134 = arith.constant 0 : index
    %c0_135 = arith.constant 0 : index
    %311 = vector.load %arg14[%c0_134, %c0_135] : memref<8x128xf32, #tpu.memory_space<vmem>>, vector<8x128xf32>
    %312 = arith.mulf %302, %311 : vector<8x128xf32>
    %313 = arith.mulf %296, %304 : vector<8x128xf32>
    %314 = arith.addf %312, %313 : vector<8x128xf32>
    %315 = math.tanh %314 : vector<8x128xf32>
    %316 = arith.mulf %310, %315 : vector<8x128xf32>
    %c0_136 = arith.constant 0 : index
    %c0_137 = arith.constant 0 : index
    %317 = vector.load %arg14[%c0_136, %c0_137] : memref<8x128xf32, #tpu.memory_space<vmem>>, vector<8x128xf32>
    tpu.vector_store %arg14[%c0_136, %c0_137], %314 {strides = array<i32>} : memref<8x128xf32, #tpu.memory_space<vmem>>, vector<8x128xf32>,
    %c0_138 = arith.constant 0 : index
    %c0_139 = arith.constant 0 : index
    %318 = vector.load %arg13[%c0_138, %c0_139] : memref<8x128xf32, #tpu.memory_space<vmem>>, vector<8x128xf32>
    tpu.vector_store %arg13[%c0_138, %c0_139], %316 {strides = array<i32>} : memref<8x128xf32, #tpu.memory_space<vmem>>, vector<8x128xf32>,
    %319 = arith.index_cast %284 : i32 to index
    %c0_140 = arith.constant 0 : index
    %320 = vector.load %arg11[%319, %c0_140] : memref<64x128xf32, #tpu.memory_space<vmem>>, vector<8x128xf32>
    tpu.vector_store %arg11[%319, %c0_140], %316 {strides = array<i32>} : memref<64x128xf32, #tpu.memory_space<vmem>>, vector<8x128xf32>,
    %c8_i32_141 = arith.constant 8 : i32
    %c0_142 = arith.constant 0 : index
    %c0_143 = arith.constant 0 : index
    %321 = vector.load %arg11[%c0_142, %c0_143] : memref<64x128xf32, #tpu.memory_space<vmem>>, vector<64x128xf32>
    %322 = arith.truncf %321 : vector<64x128xf32> to vector<64x128xbf16>
    %c1 = arith.constant 1 : index
    %c0_144 = arith.constant 0 : index
    %c0_145 = arith.constant 0 : index
    %323 = vector.load %arg1[%c1, %c0_144, %c0_145] : memref<2x128x512xbf16, #tpu.memory_space<vmem>>, vector<1x128x512xbf16>
    %324 = vector.shape_cast %323 : vector<1x128x512xbf16> to vector<128x512xbf16>
    %cst_146 = arith.constant dense<0.000000e+00> : vector<64x512xf32>
    %325 = tpu.matmul %322, %324, %cst_146 {dimension_numbers = #tpu.dot_dimension_numbers<[1], [0], [0], [1], [0, 0, 1, 1], [], []>} : vector<64x128xbf16>, vector<128x512xbf16>, vector<64x512xf32> -> vector<64x512xf32>
    %c1_147 = arith.constant 1 : index
    %c0_148 = arith.constant 0 : index
    %c0_149 = arith.constant 0 : index
    %326 = vector.load %arg3[%c1_147, %c0_148, %c0_149] : memref<2x1x512xf32, #tpu.memory_space<vmem>>, vector<1x1x512xf32>
    %327 = vector.shape_cast %326 : vector<1x1x512xf32> to vector<1x512xf32>
    %328 = vector.broadcast %327 : vector<1x512xf32> to vector<64x512xf32>
    %329 = arith.addf %325, %328 : vector<64x512xf32>
    %c0_150 = arith.constant 0 : index
    %c0_151 = arith.constant 0 : index
    %330 = vector.load %arg12[%c0_150, %c0_151] : memref<64x512xf32, #tpu.memory_space<vmem>>, vector<64x512xf32>
    tpu.vector_store %arg12[%c0_150, %c0_151], %329 {strides = array<i32>} : memref<64x512xf32, #tpu.memory_space<vmem>>, vector<64x512xf32>,
    %c1_152 = arith.constant 1 : index
    %c0_153 = arith.constant 0 : index
    %c0_154 = arith.constant 0 : index
    %331 = vector.load %arg2[%c1_152, %c0_153, %c0_154] : memref<2x128x512xbf16, #tpu.memory_space<vmem>>, vector<1x128x512xbf16>
    %332 = vector.shape_cast %331 : vector<1x128x512xbf16> to vector<128x512xbf16>
    %c1_155 = arith.constant 1 : index
    %c0_156 = arith.constant 0 : index
    %c0_157 = arith.constant 0 : index
    %333 = vector.load %arg4[%c1_155, %c0_156, %c0_157] : memref<2x8x128xf32, #tpu.memory_space<vmem>>, vector<1x8x128xf32>
    %334 = vector.shape_cast %333 : vector<1x8x128xf32> to vector<8x128xf32>
    %c0_158 = arith.constant 0 : index
    %c0_159 = arith.constant 0 : index
    %335 = vector.load %arg13[%c0_158, %c0_159] : memref<8x128xf32, #tpu.memory_space<vmem>>, vector<8x128xf32>
    tpu.vector_store %arg13[%c0_158, %c0_159], %334 {strides = array<i32>} : memref<8x128xf32, #tpu.memory_space<vmem>>, vector<8x128xf32>,
    %c1_160 = arith.constant 1 : index
    %c0_161 = arith.constant 0 : index
    %c0_162 = arith.constant 0 : index
    %336 = vector.load %arg5[%c1_160, %c0_161, %c0_162] : memref<2x8x128xf32, #tpu.memory_space<vmem>>, vector<1x8x128xf32>
    %337 = vector.shape_cast %336 : vector<1x8x128xf32> to vector<8x128xf32>
    %c0_163 = arith.constant 0 : index
    %c0_164 = arith.constant 0 : index
    %338 = vector.load %arg14[%c0_163, %c0_164] : memref<8x128xf32, #tpu.memory_space<vmem>>, vector<8x128xf32>
    tpu.vector_store %arg14[%c0_163, %c0_164], %337 {strides = array<i32>} : memref<8x128xf32, #tpu.memory_space<vmem>>, vector<8x128xf32>,
    %c0_i32_165 = arith.constant 0 : i32
    %c8_i32_166 = arith.constant 8 : i32
    %339 = arith.muli %c0_i32_165, %c8_i32_166 : i32
    %340 = tpu.assume_multiple %339, 8 : i32
    %c0_167 = arith.constant 0 : index
    %c0_168 = arith.constant 0 : index
    %341 = vector.load %arg13[%c0_167, %c0_168] : memref<8x128xf32, #tpu.memory_space<vmem>>, vector<8x128xf32>
    %342 = arith.truncf %341 : vector<8x128xf32> to vector<8x128xbf16>
    %cst_169 = arith.constant dense<0.000000e+00> : vector<8x512xf32>
    %343 = tpu.matmul %342, %332, %cst_169 {dimension_numbers = #tpu.dot_dimension_numbers<[1], [0], [0], [1], [0, 0, 1, 1], [], []>} : vector<8x128xbf16>, vector<128x512xbf16>, vector<8x512xf32> -> vector<8x512xf32>
    %344 = arith.index_cast %340 : i32 to index
    %c0_170 = arith.constant 0 : index
    %345 = vector.load %arg12[%344, %c0_170] : memref<64x512xf32, #tpu.memory_space<vmem>>, vector<8x512xf32>
    %346 = arith.addf %343, %345 : vector<8x512xf32>
    %347 = vector.extract_strided_slice %346 {offsets = [0, 0], sizes = [8, 128], strides = [1, 1]} : vector<8x512xf32> to vector<8x128xf32>
    %348 = arith.negf %347 : vector<8x128xf32>
    %349 = math.exp %348 : vector<8x128xf32>
    %cst_171 = arith.constant 1.000000e+00 : f32
    %350 = vector.broadcast %cst_171 : f32 to vector<8x128xf32>
    %351 = arith.addf %350, %349 : vector<8x128xf32>
    %352 = arith.divf %350, %351 : vector<8x128xf32>
    %353 = vector.extract_strided_slice %346 {offsets = [0, 128], sizes = [8, 128], strides = [1, 1]} : vector<8x512xf32> to vector<8x128xf32>
    %354 = arith.negf %353 : vector<8x128xf32>
    %355 = math.exp %354 : vector<8x128xf32>
    %cst_172 = arith.constant 1.000000e+00 : f32
    %356 = vector.broadcast %cst_172 : f32 to vector<8x128xf32>
    %357 = arith.addf %356, %355 : vector<8x128xf32>
    %358 = arith.divf %356, %357 : vector<8x128xf32>
    %359 = vector.extract_strided_slice %346 {offsets = [0, 256], sizes = [8, 128], strides = [1, 1]} : vector<8x512xf32> to vector<8x128xf32>
    %360 = math.tanh %359 : vector<8x128xf32>
    %361 = vector.extract_strided_slice %346 {offsets = [0, 384], sizes = [8, 128], strides = [1, 1]} : vector<8x512xf32> to vector<8x128xf32>
    %362 = arith.negf %361 : vector<8x128xf32>
    %363 = math.exp %362 : vector<8x128xf32>
    %cst_173 = arith.constant 1.000000e+00 : f32
    %364 = vector.broadcast %cst_173 : f32 to vector<8x128xf32>
    %365 = arith.addf %364, %363 : vector<8x128xf32>
    %366 = arith.divf %364, %365 : vector<8x128xf32>
    %c0_174 = arith.constant 0 : index
    %c0_175 = arith.constant 0 : index
    %367 = vector.load %arg14[%c0_174, %c0_175] : memref<8x128xf32, #tpu.memory_space<vmem>>, vector<8x128xf32>
    %368 = arith.mulf %358, %367 : vector<8x128xf32>
    %369 = arith.mulf %352, %360 : vector<8x128xf32>
    %370 = arith.addf %368, %369 : vector<8x128xf32>
    %371 = math.tanh %370 : vector<8x128xf32>
    %372 = arith.mulf %366, %371 : vector<8x128xf32>
    %c0_176 = arith.constant 0 : index
    %c0_177 = arith.constant 0 : index
    %373 = vector.load %arg14[%c0_176, %c0_177] : memref<8x128xf32, #tpu.memory_space<vmem>>, vector<8x128xf32>
    tpu.vector_store %arg14[%c0_176, %c0_177], %370 {strides = array<i32>} : memref<8x128xf32, #tpu.memory_space<vmem>>, vector<8x128xf32>,
    %c0_178 = arith.constant 0 : index
    %c0_179 = arith.constant 0 : index
    %374 = vector.load %arg13[%c0_178, %c0_179] : memref<8x128xf32, #tpu.memory_space<vmem>>, vector<8x128xf32>
    tpu.vector_store %arg13[%c0_178, %c0_179], %372 {strides = array<i32>} : memref<8x128xf32, #tpu.memory_space<vmem>>, vector<8x128xf32>,
    %c1_i32_180 = arith.constant 1 : i32
    %c8_i32_181 = arith.constant 8 : i32
    %375 = arith.muli %c1_i32_180, %c8_i32_181 : i32
    %376 = tpu.assume_multiple %375, 8 : i32
    %c0_182 = arith.constant 0 : index
    %c0_183 = arith.constant 0 : index
    %377 = vector.load %arg13[%c0_182, %c0_183] : memref<8x128xf32, #tpu.memory_space<vmem>>, vector<8x128xf32>
    %378 = arith.truncf %377 : vector<8x128xf32> to vector<8x128xbf16>
    %cst_184 = arith.constant dense<0.000000e+00> : vector<8x512xf32>
    %379 = tpu.matmul %378, %332, %cst_184 {dimension_numbers = #tpu.dot_dimension_numbers<[1], [0], [0], [1], [0, 0, 1, 1], [], []>} : vector<8x128xbf16>, vector<128x512xbf16>, vector<8x512xf32> -> vector<8x512xf32>
    %380 = arith.index_cast %376 : i32 to index
    %c0_185 = arith.constant 0 : index
    %381 = vector.load %arg12[%380, %c0_185] : memref<64x512xf32, #tpu.memory_space<vmem>>, vector<8x512xf32>
    %382 = arith.addf %379, %381 : vector<8x512xf32>
    %383 = vector.extract_strided_slice %382 {offsets = [0, 0], sizes = [8, 128], strides = [1, 1]} : vector<8x512xf32> to vector<8x128xf32>
    %384 = arith.negf %383 : vector<8x128xf32>
    %385 = math.exp %384 : vector<8x128xf32>
    %cst_186 = arith.constant 1.000000e+00 : f32
    %386 = vector.broadcast %cst_186 : f32 to vector<8x128xf32>
    %387 = arith.addf %386, %385 : vector<8x128xf32>
    %388 = arith.divf %386, %387 : vector<8x128xf32>
    %389 = vector.extract_strided_slice %382 {offsets = [0, 128], sizes = [8, 128], strides = [1, 1]} : vector<8x512xf32> to vector<8x128xf32>
    %390 = arith.negf %389 : vector<8x128xf32>
    %391 = math.exp %390 : vector<8x128xf32>
    %cst_187 = arith.constant 1.000000e+00 : f32
    %392 = vector.broadcast %cst_187 : f32 to vector<8x128xf32>
    %393 = arith.addf %392, %391 : vector<8x128xf32>
    %394 = arith.divf %392, %393 : vector<8x128xf32>
    %395 = vector.extract_strided_slice %382 {offsets = [0, 256], sizes = [8, 128], strides = [1, 1]} : vector<8x512xf32> to vector<8x128xf32>
    %396 = math.tanh %395 : vector<8x128xf32>
    %397 = vector.extract_strided_slice %382 {offsets = [0, 384], sizes = [8, 128], strides = [1, 1]} : vector<8x512xf32> to vector<8x128xf32>
    %398 = arith.negf %397 : vector<8x128xf32>
    %399 = math.exp %398 : vector<8x128xf32>
    %cst_188 = arith.constant 1.000000e+00 : f32
    %400 = vector.broadcast %cst_188 : f32 to vector<8x128xf32>
    %401 = arith.addf %400, %399 : vector<8x128xf32>
    %402 = arith.divf %400, %401 : vector<8x128xf32>
    %c0_189 = arith.constant 0 : index
    %c0_190 = arith.constant 0 : index
    %403 = vector.load %arg14[%c0_189, %c0_190] : memref<8x128xf32, #tpu.memory_space<vmem>>, vector<8x128xf32>
    %404 = arith.mulf %394, %403 : vector<8x128xf32>
    %405 = arith.mulf %388, %396 : vector<8x128xf32>
    %406 = arith.addf %404, %405 : vector<8x128xf32>
    %407 = math.tanh %406 : vector<8x128xf32>
    %408 = arith.mulf %402, %407 : vector<8x128xf32>
    %c0_191 = arith.constant 0 : index
    %c0_192 = arith.constant 0 : index
    %409 = vector.load %arg14[%c0_191, %c0_192] : memref<8x128xf32, #tpu.memory_space<vmem>>, vector<8x128xf32>
    tpu.vector_store %arg14[%c0_191, %c0_192], %406 {strides = array<i32>} : memref<8x128xf32, #tpu.memory_space<vmem>>, vector<8x128xf32>,
    %c0_193 = arith.constant 0 : index
    %c0_194 = arith.constant 0 : index
    %410 = vector.load %arg13[%c0_193, %c0_194] : memref<8x128xf32, #tpu.memory_space<vmem>>, vector<8x128xf32>
    tpu.vector_store %arg13[%c0_193, %c0_194], %408 {strides = array<i32>} : memref<8x128xf32, #tpu.memory_space<vmem>>, vector<8x128xf32>,
    %c2_i32_195 = arith.constant 2 : i32
    %c8_i32_196 = arith.constant 8 : i32
    %411 = arith.muli %c2_i32_195, %c8_i32_196 : i32
    %412 = tpu.assume_multiple %411, 8 : i32
    %c0_197 = arith.constant 0 : index
    %c0_198 = arith.constant 0 : index
    %413 = vector.load %arg13[%c0_197, %c0_198] : memref<8x128xf32, #tpu.memory_space<vmem>>, vector<8x128xf32>
    %414 = arith.truncf %413 : vector<8x128xf32> to vector<8x128xbf16>
    %cst_199 = arith.constant dense<0.000000e+00> : vector<8x512xf32>
    %415 = tpu.matmul %414, %332, %cst_199 {dimension_numbers = #tpu.dot_dimension_numbers<[1], [0], [0], [1], [0, 0, 1, 1], [], []>} : vector<8x128xbf16>, vector<128x512xbf16>, vector<8x512xf32> -> vector<8x512xf32>
    %416 = arith.index_cast %412 : i32 to index
    %c0_200 = arith.constant 0 : index
    %417 = vector.load %arg12[%416, %c0_200] : memref<64x512xf32, #tpu.memory_space<vmem>>, vector<8x512xf32>
    %418 = arith.addf %415, %417 : vector<8x512xf32>
    %419 = vector.extract_strided_slice %418 {offsets = [0, 0], sizes = [8, 128], strides = [1, 1]} : vector<8x512xf32> to vector<8x128xf32>
    %420 = arith.negf %419 : vector<8x128xf32>
    %421 = math.exp %420 : vector<8x128xf32>
    %cst_201 = arith.constant 1.000000e+00 : f32
    %422 = vector.broadcast %cst_201 : f32 to vector<8x128xf32>
    %423 = arith.addf %422, %421 : vector<8x128xf32>
    %424 = arith.divf %422, %423 : vector<8x128xf32>
    %425 = vector.extract_strided_slice %418 {offsets = [0, 128], sizes = [8, 128], strides = [1, 1]} : vector<8x512xf32> to vector<8x128xf32>
    %426 = arith.negf %425 : vector<8x128xf32>
    %427 = math.exp %426 : vector<8x128xf32>
    %cst_202 = arith.constant 1.000000e+00 : f32
    %428 = vector.broadcast %cst_202 : f32 to vector<8x128xf32>
    %429 = arith.addf %428, %427 : vector<8x128xf32>
    %430 = arith.divf %428, %429 : vector<8x128xf32>
    %431 = vector.extract_strided_slice %418 {offsets = [0, 256], sizes = [8, 128], strides = [1, 1]} : vector<8x512xf32> to vector<8x128xf32>
    %432 = math.tanh %431 : vector<8x128xf32>
    %433 = vector.extract_strided_slice %418 {offsets = [0, 384], sizes = [8, 128], strides = [1, 1]} : vector<8x512xf32> to vector<8x128xf32>
    %434 = arith.negf %433 : vector<8x128xf32>
    %435 = math.exp %434 : vector<8x128xf32>
    %cst_203 = arith.constant 1.000000e+00 : f32
    %436 = vector.broadcast %cst_203 : f32 to vector<8x128xf32>
    %437 = arith.addf %436, %435 : vector<8x128xf32>
    %438 = arith.divf %436, %437 : vector<8x128xf32>
    %c0_204 = arith.constant 0 : index
    %c0_205 = arith.constant 0 : index
    %439 = vector.load %arg14[%c0_204, %c0_205] : memref<8x128xf32, #tpu.memory_space<vmem>>, vector<8x128xf32>
    %440 = arith.mulf %430, %439 : vector<8x128xf32>
    %441 = arith.mulf %424, %432 : vector<8x128xf32>
    %442 = arith.addf %440, %441 : vector<8x128xf32>
    %443 = math.tanh %442 : vector<8x128xf32>
    %444 = arith.mulf %438, %443 : vector<8x128xf32>
    %c0_206 = arith.constant 0 : index
    %c0_207 = arith.constant 0 : index
    %445 = vector.load %arg14[%c0_206, %c0_207] : memref<8x128xf32, #tpu.memory_space<vmem>>, vector<8x128xf32>
    tpu.vector_store %arg14[%c0_206, %c0_207], %442 {strides = array<i32>} : memref<8x128xf32, #tpu.memory_space<vmem>>, vector<8x128xf32>,
    %c0_208 = arith.constant 0 : index
    %c0_209 = arith.constant 0 : index
    %446 = vector.load %arg13[%c0_208, %c0_209] : memref<8x128xf32, #tpu.memory_space<vmem>>, vector<8x128xf32>
    tpu.vector_store %arg13[%c0_208, %c0_209], %444 {strides = array<i32>} : memref<8x128xf32, #tpu.memory_space<vmem>>, vector<8x128xf32>,
    %c3_i32_210 = arith.constant 3 : i32
    %c8_i32_211 = arith.constant 8 : i32
    %447 = arith.muli %c3_i32_210, %c8_i32_211 : i32
    %448 = tpu.assume_multiple %447, 8 : i32
    %c0_212 = arith.constant 0 : index
    %c0_213 = arith.constant 0 : index
    %449 = vector.load %arg13[%c0_212, %c0_213] : memref<8x128xf32, #tpu.memory_space<vmem>>, vector<8x128xf32>
    %450 = arith.truncf %449 : vector<8x128xf32> to vector<8x128xbf16>
    %cst_214 = arith.constant dense<0.000000e+00> : vector<8x512xf32>
    %451 = tpu.matmul %450, %332, %cst_214 {dimension_numbers = #tpu.dot_dimension_numbers<[1], [0], [0], [1], [0, 0, 1, 1], [], []>} : vector<8x128xbf16>, vector<128x512xbf16>, vector<8x512xf32> -> vector<8x512xf32>
    %452 = arith.index_cast %448 : i32 to index
    %c0_215 = arith.constant 0 : index
    %453 = vector.load %arg12[%452, %c0_215] : memref<64x512xf32, #tpu.memory_space<vmem>>, vector<8x512xf32>
    %454 = arith.addf %451, %453 : vector<8x512xf32>
    %455 = vector.extract_strided_slice %454 {offsets = [0, 0], sizes = [8, 128], strides = [1, 1]} : vector<8x512xf32> to vector<8x128xf32>
    %456 = arith.negf %455 : vector<8x128xf32>
    %457 = math.exp %456 : vector<8x128xf32>
    %cst_216 = arith.constant 1.000000e+00 : f32
    %458 = vector.broadcast %cst_216 : f32 to vector<8x128xf32>
    %459 = arith.addf %458, %457 : vector<8x128xf32>
    %460 = arith.divf %458, %459 : vector<8x128xf32>
    %461 = vector.extract_strided_slice %454 {offsets = [0, 128], sizes = [8, 128], strides = [1, 1]} : vector<8x512xf32> to vector<8x128xf32>
    %462 = arith.negf %461 : vector<8x128xf32>
    %463 = math.exp %462 : vector<8x128xf32>
    %cst_217 = arith.constant 1.000000e+00 : f32
    %464 = vector.broadcast %cst_217 : f32 to vector<8x128xf32>
    %465 = arith.addf %464, %463 : vector<8x128xf32>
    %466 = arith.divf %464, %465 : vector<8x128xf32>
    %467 = vector.extract_strided_slice %454 {offsets = [0, 256], sizes = [8, 128], strides = [1, 1]} : vector<8x512xf32> to vector<8x128xf32>
    %468 = math.tanh %467 : vector<8x128xf32>
    %469 = vector.extract_strided_slice %454 {offsets = [0, 384], sizes = [8, 128], strides = [1, 1]} : vector<8x512xf32> to vector<8x128xf32>
    %470 = arith.negf %469 : vector<8x128xf32>
    %471 = math.exp %470 : vector<8x128xf32>
    %cst_218 = arith.constant 1.000000e+00 : f32
    %472 = vector.broadcast %cst_218 : f32 to vector<8x128xf32>
    %473 = arith.addf %472, %471 : vector<8x128xf32>
    %474 = arith.divf %472, %473 : vector<8x128xf32>
    %c0_219 = arith.constant 0 : index
    %c0_220 = arith.constant 0 : index
    %475 = vector.load %arg14[%c0_219, %c0_220] : memref<8x128xf32, #tpu.memory_space<vmem>>, vector<8x128xf32>
    %476 = arith.mulf %466, %475 : vector<8x128xf32>
    %477 = arith.mulf %460, %468 : vector<8x128xf32>
    %478 = arith.addf %476, %477 : vector<8x128xf32>
    %479 = math.tanh %478 : vector<8x128xf32>
    %480 = arith.mulf %474, %479 : vector<8x128xf32>
    %c0_221 = arith.constant 0 : index
    %c0_222 = arith.constant 0 : index
    %481 = vector.load %arg14[%c0_221, %c0_222] : memref<8x128xf32, #tpu.memory_space<vmem>>, vector<8x128xf32>
    tpu.vector_store %arg14[%c0_221, %c0_222], %478 {strides = array<i32>} : memref<8x128xf32, #tpu.memory_space<vmem>>, vector<8x128xf32>,
    %c0_223 = arith.constant 0 : index
    %c0_224 = arith.constant 0 : index
    %482 = vector.load %arg13[%c0_223, %c0_224] : memref<8x128xf32, #tpu.memory_space<vmem>>, vector<8x128xf32>
    tpu.vector_store %arg13[%c0_223, %c0_224], %480 {strides = array<i32>} : memref<8x128xf32, #tpu.memory_space<vmem>>, vector<8x128xf32>,
    %c4_i32_225 = arith.constant 4 : i32
    %c8_i32_226 = arith.constant 8 : i32
    %483 = arith.muli %c4_i32_225, %c8_i32_226 : i32
    %484 = tpu.assume_multiple %483, 8 : i32
    %c0_227 = arith.constant 0 : index
    %c0_228 = arith.constant 0 : index
    %485 = vector.load %arg13[%c0_227, %c0_228] : memref<8x128xf32, #tpu.memory_space<vmem>>, vector<8x128xf32>
    %486 = arith.truncf %485 : vector<8x128xf32> to vector<8x128xbf16>
    %cst_229 = arith.constant dense<0.000000e+00> : vector<8x512xf32>
    %487 = tpu.matmul %486, %332, %cst_229 {dimension_numbers = #tpu.dot_dimension_numbers<[1], [0], [0], [1], [0, 0, 1, 1], [], []>} : vector<8x128xbf16>, vector<128x512xbf16>, vector<8x512xf32> -> vector<8x512xf32>
    %488 = arith.index_cast %484 : i32 to index
    %c0_230 = arith.constant 0 : index
    %489 = vector.load %arg12[%488, %c0_230] : memref<64x512xf32, #tpu.memory_space<vmem>>, vector<8x512xf32>
    %490 = arith.addf %487, %489 : vector<8x512xf32>
    %491 = vector.extract_strided_slice %490 {offsets = [0, 0], sizes = [8, 128], strides = [1, 1]} : vector<8x512xf32> to vector<8x128xf32>
    %492 = arith.negf %491 : vector<8x128xf32>
    %493 = math.exp %492 : vector<8x128xf32>
    %cst_231 = arith.constant 1.000000e+00 : f32
    %494 = vector.broadcast %cst_231 : f32 to vector<8x128xf32>
    %495 = arith.addf %494, %493 : vector<8x128xf32>
    %496 = arith.divf %494, %495 : vector<8x128xf32>
    %497 = vector.extract_strided_slice %490 {offsets = [0, 128], sizes = [8, 128], strides = [1, 1]} : vector<8x512xf32> to vector<8x128xf32>
    %498 = arith.negf %497 : vector<8x128xf32>
    %499 = math.exp %498 : vector<8x128xf32>
    %cst_232 = arith.constant 1.000000e+00 : f32
    %500 = vector.broadcast %cst_232 : f32 to vector<8x128xf32>
    %501 = arith.addf %500, %499 : vector<8x128xf32>
    %502 = arith.divf %500, %501 : vector<8x128xf32>
    %503 = vector.extract_strided_slice %490 {offsets = [0, 256], sizes = [8, 128], strides = [1, 1]} : vector<8x512xf32> to vector<8x128xf32>
    %504 = math.tanh %503 : vector<8x128xf32>
    %505 = vector.extract_strided_slice %490 {offsets = [0, 384], sizes = [8, 128], strides = [1, 1]} : vector<8x512xf32> to vector<8x128xf32>
    %506 = arith.negf %505 : vector<8x128xf32>
    %507 = math.exp %506 : vector<8x128xf32>
    %cst_233 = arith.constant 1.000000e+00 : f32
    %508 = vector.broadcast %cst_233 : f32 to vector<8x128xf32>
    %509 = arith.addf %508, %507 : vector<8x128xf32>
    %510 = arith.divf %508, %509 : vector<8x128xf32>
    %c0_234 = arith.constant 0 : index
    %c0_235 = arith.constant 0 : index
    %511 = vector.load %arg14[%c0_234, %c0_235] : memref<8x128xf32, #tpu.memory_space<vmem>>, vector<8x128xf32>
    %512 = arith.mulf %502, %511 : vector<8x128xf32>
    %513 = arith.mulf %496, %504 : vector<8x128xf32>
    %514 = arith.addf %512, %513 : vector<8x128xf32>
    %515 = math.tanh %514 : vector<8x128xf32>
    %516 = arith.mulf %510, %515 : vector<8x128xf32>
    %c0_236 = arith.constant 0 : index
    %c0_237 = arith.constant 0 : index
    %517 = vector.load %arg14[%c0_236, %c0_237] : memref<8x128xf32, #tpu.memory_space<vmem>>, vector<8x128xf32>
    tpu.vector_store %arg14[%c0_236, %c0_237], %514 {strides = array<i32>} : memref<8x128xf32, #tpu.memory_space<vmem>>, vector<8x128xf32>,
    %c0_238 = arith.constant 0 : index
    %c0_239 = arith.constant 0 : index
    %518 = vector.load %arg13[%c0_238, %c0_239] : memref<8x128xf32, #tpu.memory_space<vmem>>, vector<8x128xf32>
    tpu.vector_store %arg13[%c0_238, %c0_239], %516 {strides = array<i32>} : memref<8x128xf32, #tpu.memory_space<vmem>>, vector<8x128xf32>,
    %c5_i32_240 = arith.constant 5 : i32
    %c8_i32_241 = arith.constant 8 : i32
    %519 = arith.muli %c5_i32_240, %c8_i32_241 : i32
    %520 = tpu.assume_multiple %519, 8 : i32
    %c0_242 = arith.constant 0 : index
    %c0_243 = arith.constant 0 : index
    %521 = vector.load %arg13[%c0_242, %c0_243] : memref<8x128xf32, #tpu.memory_space<vmem>>, vector<8x128xf32>
    %522 = arith.truncf %521 : vector<8x128xf32> to vector<8x128xbf16>
    %cst_244 = arith.constant dense<0.000000e+00> : vector<8x512xf32>
    %523 = tpu.matmul %522, %332, %cst_244 {dimension_numbers = #tpu.dot_dimension_numbers<[1], [0], [0], [1], [0, 0, 1, 1], [], []>} : vector<8x128xbf16>, vector<128x512xbf16>, vector<8x512xf32> -> vector<8x512xf32>
    %524 = arith.index_cast %520 : i32 to index
    %c0_245 = arith.constant 0 : index
    %525 = vector.load %arg12[%524, %c0_245] : memref<64x512xf32, #tpu.memory_space<vmem>>, vector<8x512xf32>
    %526 = arith.addf %523, %525 : vector<8x512xf32>
    %527 = vector.extract_strided_slice %526 {offsets = [0, 0], sizes = [8, 128], strides = [1, 1]} : vector<8x512xf32> to vector<8x128xf32>
    %528 = arith.negf %527 : vector<8x128xf32>
    %529 = math.exp %528 : vector<8x128xf32>
    %cst_246 = arith.constant 1.000000e+00 : f32
    %530 = vector.broadcast %cst_246 : f32 to vector<8x128xf32>
    %531 = arith.addf %530, %529 : vector<8x128xf32>
    %532 = arith.divf %530, %531 : vector<8x128xf32>
    %533 = vector.extract_strided_slice %526 {offsets = [0, 128], sizes = [8, 128], strides = [1, 1]} : vector<8x512xf32> to vector<8x128xf32>
    %534 = arith.negf %533 : vector<8x128xf32>
    %535 = math.exp %534 : vector<8x128xf32>
    %cst_247 = arith.constant 1.000000e+00 : f32
    %536 = vector.broadcast %cst_247 : f32 to vector<8x128xf32>
    %537 = arith.addf %536, %535 : vector<8x128xf32>
    %538 = arith.divf %536, %537 : vector<8x128xf32>
    %539 = vector.extract_strided_slice %526 {offsets = [0, 256], sizes = [8, 128], strides = [1, 1]} : vector<8x512xf32> to vector<8x128xf32>
    %540 = math.tanh %539 : vector<8x128xf32>
    %541 = vector.extract_strided_slice %526 {offsets = [0, 384], sizes = [8, 128], strides = [1, 1]} : vector<8x512xf32> to vector<8x128xf32>
    %542 = arith.negf %541 : vector<8x128xf32>
    %543 = math.exp %542 : vector<8x128xf32>
    %cst_248 = arith.constant 1.000000e+00 : f32
    %544 = vector.broadcast %cst_248 : f32 to vector<8x128xf32>
    %545 = arith.addf %544, %543 : vector<8x128xf32>
    %546 = arith.divf %544, %545 : vector<8x128xf32>
    %c0_249 = arith.constant 0 : index
    %c0_250 = arith.constant 0 : index
    %547 = vector.load %arg14[%c0_249, %c0_250] : memref<8x128xf32, #tpu.memory_space<vmem>>, vector<8x128xf32>
    %548 = arith.mulf %538, %547 : vector<8x128xf32>
    %549 = arith.mulf %532, %540 : vector<8x128xf32>
    %550 = arith.addf %548, %549 : vector<8x128xf32>
    %551 = math.tanh %550 : vector<8x128xf32>
    %552 = arith.mulf %546, %551 : vector<8x128xf32>
    %c0_251 = arith.constant 0 : index
    %c0_252 = arith.constant 0 : index
    %553 = vector.load %arg14[%c0_251, %c0_252] : memref<8x128xf32, #tpu.memory_space<vmem>>, vector<8x128xf32>
    tpu.vector_store %arg14[%c0_251, %c0_252], %550 {strides = array<i32>} : memref<8x128xf32, #tpu.memory_space<vmem>>, vector<8x128xf32>,
    %c0_253 = arith.constant 0 : index
    %c0_254 = arith.constant 0 : index
    %554 = vector.load %arg13[%c0_253, %c0_254] : memref<8x128xf32, #tpu.memory_space<vmem>>, vector<8x128xf32>
    tpu.vector_store %arg13[%c0_253, %c0_254], %552 {strides = array<i32>} : memref<8x128xf32, #tpu.memory_space<vmem>>, vector<8x128xf32>,
    %c6_i32_255 = arith.constant 6 : i32
    %c8_i32_256 = arith.constant 8 : i32
    %555 = arith.muli %c6_i32_255, %c8_i32_256 : i32
    %556 = tpu.assume_multiple %555, 8 : i32
    %c0_257 = arith.constant 0 : index
    %c0_258 = arith.constant 0 : index
    %557 = vector.load %arg13[%c0_257, %c0_258] : memref<8x128xf32, #tpu.memory_space<vmem>>, vector<8x128xf32>
    %558 = arith.truncf %557 : vector<8x128xf32> to vector<8x128xbf16>
    %cst_259 = arith.constant dense<0.000000e+00> : vector<8x512xf32>
    %559 = tpu.matmul %558, %332, %cst_259 {dimension_numbers = #tpu.dot_dimension_numbers<[1], [0], [0], [1], [0, 0, 1, 1], [], []>} : vector<8x128xbf16>, vector<128x512xbf16>, vector<8x512xf32> -> vector<8x512xf32>
    %560 = arith.index_cast %556 : i32 to index
    %c0_260 = arith.constant 0 : index
    %561 = vector.load %arg12[%560, %c0_260] : memref<64x512xf32, #tpu.memory_space<vmem>>, vector<8x512xf32>
    %562 = arith.addf %559, %561 : vector<8x512xf32>
    %563 = vector.extract_strided_slice %562 {offsets = [0, 0], sizes = [8, 128], strides = [1, 1]} : vector<8x512xf32> to vector<8x128xf32>
    %564 = arith.negf %563 : vector<8x128xf32>
    %565 = math.exp %564 : vector<8x128xf32>
    %cst_261 = arith.constant 1.000000e+00 : f32
    %566 = vector.broadcast %cst_261 : f32 to vector<8x128xf32>
    %567 = arith.addf %566, %565 : vector<8x128xf32>
    %568 = arith.divf %566, %567 : vector<8x128xf32>
    %569 = vector.extract_strided_slice %562 {offsets = [0, 128], sizes = [8, 128], strides = [1, 1]} : vector<8x512xf32> to vector<8x128xf32>
    %570 = arith.negf %569 : vector<8x128xf32>
    %571 = math.exp %570 : vector<8x128xf32>
    %cst_262 = arith.constant 1.000000e+00 : f32
    %572 = vector.broadcast %cst_262 : f32 to vector<8x128xf32>
    %573 = arith.addf %572, %571 : vector<8x128xf32>
    %574 = arith.divf %572, %573 : vector<8x128xf32>
    %575 = vector.extract_strided_slice %562 {offsets = [0, 256], sizes = [8, 128], strides = [1, 1]} : vector<8x512xf32> to vector<8x128xf32>
    %576 = math.tanh %575 : vector<8x128xf32>
    %577 = vector.extract_strided_slice %562 {offsets = [0, 384], sizes = [8, 128], strides = [1, 1]} : vector<8x512xf32> to vector<8x128xf32>
    %578 = arith.negf %577 : vector<8x128xf32>
    %579 = math.exp %578 : vector<8x128xf32>
    %cst_263 = arith.constant 1.000000e+00 : f32
    %580 = vector.broadcast %cst_263 : f32 to vector<8x128xf32>
    %581 = arith.addf %580, %579 : vector<8x128xf32>
    %582 = arith.divf %580, %581 : vector<8x128xf32>
    %c0_264 = arith.constant 0 : index
    %c0_265 = arith.constant 0 : index
    %583 = vector.load %arg14[%c0_264, %c0_265] : memref<8x128xf32, #tpu.memory_space<vmem>>, vector<8x128xf32>
    %584 = arith.mulf %574, %583 : vector<8x128xf32>
    %585 = arith.mulf %568, %576 : vector<8x128xf32>
    %586 = arith.addf %584, %585 : vector<8x128xf32>
    %587 = math.tanh %586 : vector<8x128xf32>
    %588 = arith.mulf %582, %587 : vector<8x128xf32>
    %c0_266 = arith.constant 0 : index
    %c0_267 = arith.constant 0 : index
    %589 = vector.load %arg14[%c0_266, %c0_267] : memref<8x128xf32, #tpu.memory_space<vmem>>, vector<8x128xf32>
    tpu.vector_store %arg14[%c0_266, %c0_267], %586 {strides = array<i32>} : memref<8x128xf32, #tpu.memory_space<vmem>>, vector<8x128xf32>,
    %c0_268 = arith.constant 0 : index
    %c0_269 = arith.constant 0 : index
    %590 = vector.load %arg13[%c0_268, %c0_269] : memref<8x128xf32, #tpu.memory_space<vmem>>, vector<8x128xf32>
    tpu.vector_store %arg13[%c0_268, %c0_269], %588 {strides = array<i32>} : memref<8x128xf32, #tpu.memory_space<vmem>>, vector<8x128xf32>,
    %c7_i32_270 = arith.constant 7 : i32
    %c8_i32_271 = arith.constant 8 : i32
    %591 = arith.muli %c7_i32_270, %c8_i32_271 : i32
    %592 = tpu.assume_multiple %591, 8 : i32
    %c0_272 = arith.constant 0 : index
    %c0_273 = arith.constant 0 : index
    %593 = vector.load %arg13[%c0_272, %c0_273] : memref<8x128xf32, #tpu.memory_space<vmem>>, vector<8x128xf32>
    %594 = arith.truncf %593 : vector<8x128xf32> to vector<8x128xbf16>
    %cst_274 = arith.constant dense<0.000000e+00> : vector<8x512xf32>
    %595 = tpu.matmul %594, %332, %cst_274 {dimension_numbers = #tpu.dot_dimension_numbers<[1], [0], [0], [1], [0, 0, 1, 1], [], []>} : vector<8x128xbf16>, vector<128x512xbf16>, vector<8x512xf32> -> vector<8x512xf32>
    %596 = arith.index_cast %592 : i32 to index
    %c0_275 = arith.constant 0 : index
    %597 = vector.load %arg12[%596, %c0_275] : memref<64x512xf32, #tpu.memory_space<vmem>>, vector<8x512xf32>
    %598 = arith.addf %595, %597 : vector<8x512xf32>
    %599 = vector.extract_strided_slice %598 {offsets = [0, 0], sizes = [8, 128], strides = [1, 1]} : vector<8x512xf32> to vector<8x128xf32>
    %600 = arith.negf %599 : vector<8x128xf32>
    %601 = math.exp %600 : vector<8x128xf32>
    %cst_276 = arith.constant 1.000000e+00 : f32
    %602 = vector.broadcast %cst_276 : f32 to vector<8x128xf32>
    %603 = arith.addf %602, %601 : vector<8x128xf32>
    %604 = arith.divf %602, %603 : vector<8x128xf32>
    %605 = vector.extract_strided_slice %598 {offsets = [0, 128], sizes = [8, 128], strides = [1, 1]} : vector<8x512xf32> to vector<8x128xf32>
    %606 = arith.negf %605 : vector<8x128xf32>
    %607 = math.exp %606 : vector<8x128xf32>
    %cst_277 = arith.constant 1.000000e+00 : f32
    %608 = vector.broadcast %cst_277 : f32 to vector<8x128xf32>
    %609 = arith.addf %608, %607 : vector<8x128xf32>
    %610 = arith.divf %608, %609 : vector<8x128xf32>
    %611 = vector.extract_strided_slice %598 {offsets = [0, 256], sizes = [8, 128], strides = [1, 1]} : vector<8x512xf32> to vector<8x128xf32>
    %612 = math.tanh %611 : vector<8x128xf32>
    %613 = vector.extract_strided_slice %598 {offsets = [0, 384], sizes = [8, 128], strides = [1, 1]} : vector<8x512xf32> to vector<8x128xf32>
    %614 = arith.negf %613 : vector<8x128xf32>
    %615 = math.exp %614 : vector<8x128xf32>
    %cst_278 = arith.constant 1.000000e+00 : f32
    %616 = vector.broadcast %cst_278 : f32 to vector<8x128xf32>
    %617 = arith.addf %616, %615 : vector<8x128xf32>
    %618 = arith.divf %616, %617 : vector<8x128xf32>
    %c0_279 = arith.constant 0 : index
    %c0_280 = arith.constant 0 : index
    %619 = vector.load %arg14[%c0_279, %c0_280] : memref<8x128xf32, #tpu.memory_space<vmem>>, vector<8x128xf32>
    %620 = arith.mulf %610, %619 : vector<8x128xf32>
    %621 = arith.mulf %604, %612 : vector<8x128xf32>
    %622 = arith.addf %620, %621 : vector<8x128xf32>
    %623 = math.tanh %622 : vector<8x128xf32>
    %624 = arith.mulf %618, %623 : vector<8x128xf32>
    %c0_281 = arith.constant 0 : index
    %c0_282 = arith.constant 0 : index
    %625 = vector.load %arg14[%c0_281, %c0_282] : memref<8x128xf32, #tpu.memory_space<vmem>>, vector<8x128xf32>
    tpu.vector_store %arg14[%c0_281, %c0_282], %622 {strides = array<i32>} : memref<8x128xf32, #tpu.memory_space<vmem>>, vector<8x128xf32>,
    %c0_283 = arith.constant 0 : index
    %c0_284 = arith.constant 0 : index
    %626 = vector.load %arg13[%c0_283, %c0_284] : memref<8x128xf32, #tpu.memory_space<vmem>>, vector<8x128xf32>
    tpu.vector_store %arg13[%c0_283, %c0_284], %624 {strides = array<i32>} : memref<8x128xf32, #tpu.memory_space<vmem>>, vector<8x128xf32>,
    %c8_i32_285 = arith.constant 8 : i32
    %c0_286 = arith.constant 0 : index
    %c0_287 = arith.constant 0 : index
    %627 = vector.load %arg13[%c0_286, %c0_287] : memref<8x128xf32, #tpu.memory_space<vmem>>, vector<8x128xf32>
    %628 = arith.truncf %627 : vector<8x128xf32> to vector<8x128xbf16>
    %c0_288 = arith.constant 0 : index
    %c0_289 = arith.constant 0 : index
    %629 = vector.load %arg6[%c0_288, %c0_289] : memref<128x128xbf16, #tpu.memory_space<vmem>>, vector<128x128xbf16>
    %cst_290 = arith.constant dense<0.000000e+00> : vector<8x128xf32>
    %630 = tpu.matmul %628, %629, %cst_290 {dimension_numbers = #tpu.dot_dimension_numbers<[1], [0], [0], [1], [0, 0, 1, 1], [], []>} : vector<8x128xbf16>, vector<128x128xbf16>, vector<8x128xf32> -> vector<8x128xf32>
    %c0_291 = arith.constant 0 : index
    %c0_292 = arith.constant 0 : index
    %631 = vector.load %arg7[%c0_291, %c0_292] : memref<1x128xf32, #tpu.memory_space<vmem>>, vector<1x128xf32>
    %632 = vector.broadcast %631 : vector<1x128xf32> to vector<8x128xf32>
    %633 = arith.addf %630, %632 : vector<8x128xf32>
    %cst_293 = arith.constant 0.000000e+00 : f32
    %634 = vector.broadcast %cst_293 : f32 to vector<8x128xf32>
    %635 = arith.maximumf %633, %634 : vector<8x128xf32>
    %636 = arith.truncf %635 : vector<8x128xf32> to vector<8x128xbf16>
    %c0_294 = arith.constant 0 : index
    %c0_295 = arith.constant 0 : index
    %637 = vector.load %arg8[%c0_294, %c0_295] : memref<128x128xbf16, #tpu.memory_space<vmem>>, vector<128x128xbf16>
    %cst_296 = arith.constant dense<0.000000e+00> : vector<8x128xf32>
    %638 = tpu.matmul %636, %637, %cst_296 {dimension_numbers = #tpu.dot_dimension_numbers<[1], [0], [0], [1], [0, 0, 1, 1], [], []>} : vector<8x128xbf16>, vector<128x128xbf16>, vector<8x128xf32> -> vector<8x128xf32>
    %c0_297 = arith.constant 0 : index
    %c0_298 = arith.constant 0 : index
    %639 = vector.load %arg9[%c0_297, %c0_298] : memref<1x128xf32, #tpu.memory_space<vmem>>, vector<1x128xf32>
    %640 = vector.broadcast %639 : vector<1x128xf32> to vector<8x128xf32>
    %641 = arith.addf %638, %640 : vector<8x128xf32>
    %c0_299 = arith.constant 0 : index
    %c0_300 = arith.constant 0 : index
    %642 = vector.load %arg10[%c0_299, %c0_300] : memref<8x128xf32, #tpu.memory_space<vmem>>, vector<8x128xf32>
    tpu.vector_store %arg10[%c0_299, %c0_300], %641 {strides = array<i32>} : memref<8x128xf32, #tpu.memory_space<vmem>>, vector<8x128xf32>,
    return
  }
}

</mosaic_0001>

<llo_original>
// kernel: tpu_custom_call.1
$region0: #{tpu_custom_call.1}
  #allocation0 [shape = 'u32[]', space=smem, size = 0x4, offset = 0x4, fixed_abs, tag = 'smem constant byte address 0x4 - core index']
  #allocation1 [shape = 'u32[144,128]{1,0:T(1,128)}', space=vmem, size = 0x12000, scoped, tag = 'internal scratch']
  #allocation2 [shape = 'f32[64,128]{1,0:T(8,128)}', space=vmem, size = 0x8000, scoped, tag = 'scratch operand']
  #allocation3 [shape = 'f32[64,512]{1,0:T(8,128)}', space=vmem, size = 0x20000, scoped, tag = 'scratch operand']
  #allocation4 [shape = 'f32[8,128]{1,0:T(8,128)}', space=vmem, size = 0x1000, scoped, tag = 'scratch operand']
  #allocation5 [shape = 'f32[8,128]{1,0:T(8,128)}', space=vmem, size = 0x1000, scoped, tag = 'scratch operand']
  %s0 = inlined_call_operand.hbm [shape: bf16[64,128], index: 0, kind: input, shape index: {}]
  %s1 = inlined_call_operand.hbm [shape: bf16[2,128,512], index: 1, kind: input, shape index: {}]
  %s2 = inlined_call_operand.hbm [shape: bf16[2,128,512], index: 2, kind: input, shape index: {}]
  %s3 = inlined_call_operand.hbm [shape: f32[2,1,512], index: 3, kind: input, shape index: {}]
  %s4 = inlined_call_operand.hbm [shape: f32[2,8,128], index: 4, kind: input, shape index: {}]
  %s5 = inlined_call_operand.vmem [shape: f32[2,8,128], index: 5, kind: input, shape index: {}]
  %s6 = inlined_call_operand.hbm [shape: bf16[128,128], index: 6, kind: input, shape index: {}]
  %s7 = inlined_call_operand.vmem [shape: f32[1,128], index: 7, kind: input, shape index: {}]
  %s8 = inlined_call_operand.hbm [shape: bf16[128,128], index: 8, kind: input, shape index: {}]
  %s9 = inlined_call_operand.vmem [shape: f32[1,128], index: 9, kind: input, shape index: {}]
  %s10 = inlined_call_operand.hbm [shape: f32[8,128], index: 10, kind: output, shape index: {}]
  %s11 = sld [smem:[#allocation0]]
  $region78: #{tpu_custom_call.1} parent=0
    _
  %s13 = ssub.s32 1, %s11
  %s14 = scalar_select 0, %s13, %s11
  $region1: #{tpu_custom_call.1} parent=0
    #allocation6 [shape = 'u8[16384]{0}', space=vmem, size = 0x4000, scoped, tag = 'input window, operand 0, single buffered']
    #allocation7 [shape = 's32[1]{0}', space=sflag, size = 0x4, scoped, tag = 'scoped memory for tpu_custom_call.1']
    #allocation8 [shape = 's32[1]{0}', space=sflag, size = 0x4, scoped, tag = 'scoped memory for tpu_custom_call.1']
    #allocation9 [shape = 'u8[262144]{0}', space=vmem, size = 0x40000, scoped, tag = 'input window, operand 1, single buffered']
    #allocation10 [shape = 's32[1]{0}', space=sflag, size = 0x4, scoped, tag = 'scoped memory for tpu_custom_call.1']
    #allocation11 [shape = 'u8[262144]{0}', space=vmem, size = 0x40000, scoped, tag = 'input window, operand 2, single buffered']
    #allocation12 [shape = 'u8[4096]{0}', space=vmem, size = 0x1000, scoped, tag = 'input window, operand 3, single buffered']
    #allocation13 [shape = 's32[1]{0}', space=sflag, size = 0x4, scoped, tag = 'scoped memory for tpu_custom_call.1']
    #allocation14 [shape = 'u8[8192]{0}', space=vmem, size = 0x2000, scoped, tag = 'input window, operand 4, single buffered']
    #allocation15 [shape = 'u8[32768]{0}', space=vmem, size = 0x8000, scoped, tag = 'input window, operand 6, single buffered']
    #allocation16 [shape = 's32[1]{0}', space=sflag, size = 0x4, scoped, tag = 'scoped memory for tpu_custom_call.1']
    #allocation17 [shape = 'u8[32768]{0}', space=vmem, size = 0x8000, scoped, tag = 'input window, operand 8, single buffered']
    #allocation18 [shape = 'u8[4096]{0}', space=vmem, size = 0x1000, scoped, tag = 'output window, operand 0, single buffered']
    %15 = vsyncpa [#allocation7], 0
    %16 = vsyncpa [#allocation10], 0
    %17 = vsyncpa [#allocation13], 0
    %18 = vsyncpa [#allocation16], 0
    %19 = vsyncpa [#allocation8], 0
    // Predicated region
    $region2: #{tpu_custom_call.1} parent=1 // pred_check
      _
    $region3: #{tpu_custom_call.1} parent=1 // pred_check_branch
      %21 = sbr.rel (0) target = $region5
    $region4: #{tpu_custom_call.1} parent=1 // pred_region
      %s23 = ssub.s32 512, 512
      %24 = vsyncadd [#allocation7], %s23
      %s25 = sshll.u32 [#allocation6], 4
      %s26 = int_to_ptr.vmem [resolvable:$true] %s25
      %31 = dma.hbm_to_vmem [thread:$0]  %s0, 512, %s26, [#allocation7], 64, 64, 4
    $region5: #{tpu_custom_call.1} parent=1 // pred_fallthru
      _
    // Predicated region
    $region6: #{tpu_custom_call.1} parent=1 // pred_check
      _
    $region7: #{tpu_custom_call.1} parent=1 // pred_check_branch
      %33 = sbr.rel (0) target = $region9
    $region8: #{tpu_custom_call.1} parent=1 // pred_region
      %s35 = ssub.s32 8192, 8192
      %36 = vsyncadd [#allocation10], %s35
      %s37 = sshll.u32 [#allocation9], 4
      %s38 = int_to_ptr.vmem [resolvable:$true] %s37
      %43 = dma.hbm_to_vmem [thread:$0]  %s1, 8192, %s38, [#allocation10], 256, 256, 16
    $region9: #{tpu_custom_call.1} parent=1 // pred_fallthru
      _
    // Predicated region
    $region10: #{tpu_custom_call.1} parent=1 // pred_check
      _
    $region11: #{tpu_custom_call.1} parent=1 // pred_check_branch
      %45 = sbr.rel (0) target = $region13
    $region12: #{tpu_custom_call.1} parent=1 // pred_region
      %s47 = ssub.s32 8192, 8192
      %48 = vsyncadd [#allocation10], %s47
      %s49 = sshll.u32 [#allocation11], 4
      %s50 = int_to_ptr.vmem [resolvable:$true] %s49
      %55 = dma.hbm_to_vmem [thread:$0]  %s2, 8192, %s50, [#allocation10], 256, 256, 16
    $region13: #{tpu_custom_call.1} parent=1 // pred_fallthru
      _
    // Predicated region
    $region14: #{tpu_custom_call.1} parent=1 // pred_check
      _
    $region15: #{tpu_custom_call.1} parent=1 // pred_check_branch
      %57 = sbr.rel (0) target = $region17
    $region16: #{tpu_custom_call.1} parent=1 // pred_region
      %s59 = ssub.s32 128, 128
      %60 = vsyncadd [#allocation13], %s59
      %s61 = sshll.u32 [#allocation12], 4
      %s62 = int_to_ptr.vmem [resolvable:$true] %s61
      %67 = dma.hbm_to_vmem [thread:$0]  %s3, 128, %s62, [#allocation13], 64, 64, 4
    $region17: #{tpu_custom_call.1} parent=1 // pred_fallthru
      _
    // Predicated region
    $region18: #{tpu_custom_call.1} parent=1 // pred_check
      _
    $region19: #{tpu_custom_call.1} parent=1 // pred_check_branch
      %69 = sbr.rel (0) target = $region21
    $region20: #{tpu_custom_call.1} parent=1 // pred_region
      %s71 = ssub.s32 256, 256
      %72 = vsyncadd [#allocation13], %s71
      %s73 = sshll.u32 [#allocation14], 4
      %s74 = int_to_ptr.vmem [resolvable:$true] %s73
      %79 = dma.hbm_to_vmem [thread:$0]  %s4, 256, %s74, [#allocation13], 128, 128, 8
    $region21: #{tpu_custom_call.1} parent=1 // pred_fallthru
      _
    // Predicated region
    $region22: #{tpu_custom_call.1} parent=1 // pred_check
      _
    $region23: #{tpu_custom_call.1} parent=1 // pred_check_branch
      %81 = sbr.rel (0) target = $region25
    $region24: #{tpu_custom_call.1} parent=1 // pred_region
      _
    $region25: #{tpu_custom_call.1} parent=1 // pred_fallthru
      _
    // Predicated region
    $region26: #{tpu_custom_call.1} parent=1 // pred_check
      _
    $region27: #{tpu_custom_call.1} parent=1 // pred_check_branch
      %83 = sbr.rel (0) target = $region29
    $region28: #{tpu_custom_call.1} parent=1 // pred_region
      %s85 = ssub.s32 1024, 1024
      %86 = vsyncadd [#allocation16], %s85
      %s87 = sshll.u32 [#allocation15], 4
      %s88 = int_to_ptr.vmem [resolvable:$true] %s87
      %93 = dma.hbm_to_vmem [thread:$0]  %s6, 1024, %s88, [#allocation16], 64, 64, 4
    $region29: #{tpu_custom_call.1} parent=1 // pred_fallthru
      _
    // Predicated region
    $region30: #{tpu_custom_call.1} parent=1 // pred_check
      _
    $region31: #{tpu_custom_call.1} parent=1 // pred_check_branch
      %95 = sbr.rel (0) target = $region33
    $region32: #{tpu_custom_call.1} parent=1 // pred_region
      _
    $region33: #{tpu_custom_call.1} parent=1 // pred_fallthru
      _
    // Predicated region
    $region34: #{tpu_custom_call.1} parent=1 // pred_check
      _
    $region35: #{tpu_custom_call.1} parent=1 // pred_check_branch
      %97 = sbr.rel (0) target = $region37
    $region36: #{tpu_custom_call.1} parent=1 // pred_region
      %s99 = ssub.s32 1024, 1024
      %100 = vsyncadd [#allocation16], %s99
      %s101 = sshll.u32 [#allocation17], 4
      %s102 = int_to_ptr.vmem [resolvable:$true] %s101
      %107 = dma.hbm_to_vmem [thread:$0]  %s8, 1024, %s102, [#allocation16], 64, 64, 4
    $region37: #{tpu_custom_call.1} parent=1 // pred_fallthru
      _
    // Predicated region
    $region38: #{tpu_custom_call.1} parent=1 // pred_check
      _
    $region39: #{tpu_custom_call.1} parent=1 // pred_check_branch
      %109 = sbr.rel (0) target = $region41
    $region40: #{tpu_custom_call.1} parent=1 // pred_region
      _
    $region41: #{tpu_custom_call.1} parent=1 // pred_fallthru
      _
    // Predicated region
    $region42: #{tpu_custom_call.1} parent=1 // pred_check
      _
    $region43: #{tpu_custom_call.1} parent=1 // pred_check_branch
      %111 = sbr.rel (0) target = $region45
    $region44: #{tpu_custom_call.1} parent=1 // pred_region
      %112 = dma.done [#allocation7], 512
    $region45: #{tpu_custom_call.1} parent=1 // pred_fallthru
      _
    // Predicated region
    $region46: #{tpu_custom_call.1} parent=1 // pred_check
      _
    $region47: #{tpu_custom_call.1} parent=1 // pred_check_branch
      %114 = sbr.rel (0) target = $region49
    $region48: #{tpu_custom_call.1} parent=1 // pred_region
      %115 = dma.done [#allocation10], 8192
    $region49: #{tpu_custom_call.1} parent=1 // pred_fallthru
      _
    // Predicated region
    $region50: #{tpu_custom_call.1} parent=1 // pred_check
      _
    $region51: #{tpu_custom_call.1} parent=1 // pred_check_branch
      %117 = sbr.rel (0) target = $region53
    $region52: #{tpu_custom_call.1} parent=1 // pred_region
      %118 = dma.done [#allocation10], 8192
    $region53: #{tpu_custom_call.1} parent=1 // pred_fallthru
      _
    // Predicated region
    $region54: #{tpu_custom_call.1} parent=1 // pred_check
      _
    $region55: #{tpu_custom_call.1} parent=1 // pred_check_branch
      %120 = sbr.rel (0) target = $region57
    $region56: #{tpu_custom_call.1} parent=1 // pred_region
      %121 = dma.done [#allocation13], 128
    $region57: #{tpu_custom_call.1} parent=1 // pred_fallthru
      _
    // Predicated region
    $region58: #{tpu_custom_call.1} parent=1 // pred_check
      _
    $region59: #{tpu_custom_call.1} parent=1 // pred_check_branch
      %123 = sbr.rel (0) target = $region61
    $region60: #{tpu_custom_call.1} parent=1 // pred_region
      %124 = dma.done [#allocation13], 256
    $region61: #{tpu_custom_call.1} parent=1 // pred_fallthru
      _
    // Predicated region
    $region62: #{tpu_custom_call.1} parent=1 // pred_check
      _
    $region63: #{tpu_custom_call.1} parent=1 // pred_check_branch
      %126 = sbr.rel (0) target = $region65
    $region64: #{tpu_custom_call.1} parent=1 // pred_region
      %127 = dma.done [#allocation16], 1024
    $region65: #{tpu_custom_call.1} parent=1 // pred_fallthru
      _
    // Predicated region
    $region66: #{tpu_custom_call.1} parent=1 // pred_check
      _
    $region67: #{tpu_custom_call.1} parent=1 // pred_check_branch
      %129 = sbr.rel (0) target = $region69
    $region68: #{tpu_custom_call.1} parent=1 // pred_region
      %130 = dma.done [#allocation16], 1024
    $region69: #{tpu_custom_call.1} parent=1 // pred_fallthru
      _
    %v132 = vld [vmem:[#allocation6] sm:$0xf]
    %v133 = vld [vmem:[#allocation6 + $0x4] sm:$0xf]
    %v134 = vld [vmem:[#allocation6 + $0x8] sm:$0xf]
    %v135 = vld [vmem:[#allocation6 + $0xc] sm:$0xf]
    %v136 = vld [vmem:[#allocation6 + $0x10] sm:$0xf]
    %v137 = vld [vmem:[#allocation6 + $0x14] sm:$0xf]
    %v138 = vld [vmem:[#allocation6 + $0x18] sm:$0xf]
    %v139 = vld [vmem:[#allocation6 + $0x1c] sm:$0xf]
    %v140 = vld [vmem:[#allocation9] sm:$0xff]
    %v141 = vld [vmem:[#allocation9 + $0x8] sm:$0xff]
    %v142 = vld [vmem:[#allocation9 + $0x10] sm:$0xff]
    %v143 = vld [vmem:[#allocation9 + $0x18] sm:$0xff]
    %v144 = vld [vmem:[#allocation9 + $0x20] sm:$0xff]
    %v145 = vld [vmem:[#allocation9 + $0x28] sm:$0xff]
    %v146 = vld [vmem:[#allocation9 + $0x30] sm:$0xff]
    %v147 = vld [vmem:[#allocation9 + $0x38] sm:$0xff]
    %v148 = vld [vmem:[#allocation9 + $0x40] sm:$0xff]
    %v149 = vld [vmem:[#allocation9 + $0x48] sm:$0xff]
    %v150 = vld [vmem:[#allocation9 + $0x50] sm:$0xff]
    %v151 = vld [vmem:[#allocation9 + $0x58] sm:$0xff]
    %v152 = vld [vmem:[#allocation9 + $0x60] sm:$0xff]
    %v153 = vld [vmem:[#allocation9 + $0x68] sm:$0xff]
    %v154 = vld [vmem:[#allocation9 + $0x70] sm:$0xff]
    %v155 = vld [vmem:[#allocation9 + $0x78] sm:$0xff]
    %v156 = vld [vmem:[#allocation9 + $0x80] sm:$0xff]
    %v157 = vld [vmem:[#allocation9 + $0x88] sm:$0xff]
    %v158 = vld [vmem:[#allocation9 + $0x90] sm:$0xff]
    %v159 = vld [vmem:[#allocation9 + $0x98] sm:$0xff]
    %v160 = vld [vmem:[#allocation9 + $0xa0] sm:$0xff]
    %v161 = vld [vmem:[#allocation9 + $0xa8] sm:$0xff]
    %v162 = vld [vmem:[#allocation9 + $0xb0] sm:$0xff]
    %v163 = vld [vmem:[#allocation9 + $0xb8] sm:$0xff]
    %v164 = vld [vmem:[#allocation9 + $0xc0] sm:$0xff]
    %v165 = vld [vmem:[#allocation9 + $0xc8] sm:$0xff]
    %v166 = vld [vmem:[#allocation9 + $0xd0] sm:$0xff]
    %v167 = vld [vmem:[#allocation9 + $0xd8] sm:$0xff]
    %v168 = vld [vmem:[#allocation9 + $0xe0] sm:$0xff]
    %v169 = vld [vmem:[#allocation9 + $0xe8] sm:$0xff]
    %v170 = vld [vmem:[#allocation9 + $0xf0] sm:$0xff]
    %v171 = vld [vmem:[#allocation9 + $0xf8] sm:$0xff]
    %v172 = vld [vmem:[#allocation12] sm:$0xf]
    %v174 = vlaneseq
    %v175 = vshrl.u32 %v174, 7
    %v176 = vsub.s32 0, %v175
    %v177 = vrot.slane %v172, %v176
    %v178 = vlaneseq
    %v179 = vshrl.u32 %v178, 7
    %v180 = vsub.s32 1, %v179
    %v181 = vrot.slane %v172, %v180
    %v182 = vlaneseq
    %v183 = vshrl.u32 %v182, 7
    %v184 = vsub.s32 2, %v183
    %v185 = vrot.slane %v172, %v184
    %v186 = vlaneseq
    %v187 = vshrl.u32 %v186, 7
    %v188 = vsub.s32 3, %v187
    %v189 = vrot.slane %v172, %v188
    %v202 = vunpack.c.l.b16 %v132
    %v203 = vunpack.c.l.b16 %v133
    %v204 = vunpack.c.l.b16 %v134
    %v205 = vunpack.c.l.b16 %v135
    %v206 = vunpack.c.l.b16 %v136
    %v207 = vunpack.c.l.b16 %v137
    %v208 = vunpack.c.l.b16 %v138
    %v209 = vunpack.c.l.b16 %v139
    %v210 = vpack.c.b16 %v203, %v202
    %v211 = vpack.c.b16 %v205, %v204
    %v212 = vpack.c.b16 %v207, %v206
    %v213 = vpack.c.b16 %v209, %v208
    %v250 = vunpack.c.l.b16 %v140
    %v251 = vunpack.c.h.b16 %v140
    %v252 = vunpack.c.l.b16 %v141
    %v253 = vunpack.c.h.b16 %v141
    %v254 = vunpack.c.l.b16 %v142
    %v255 = vunpack.c.h.b16 %v142
    %v256 = vunpack.c.l.b16 %v143
    %v257 = vunpack.c.h.b16 %v143
    %v258 = vunpack.c.l.b16 %v144
    %v259 = vunpack.c.h.b16 %v144
    %v260 = vunpack.c.l.b16 %v145
    %v261 = vunpack.c.h.b16 %v145
    %v262 = vunpack.c.l.b16 %v146
    %v263 = vunpack.c.h.b16 %v146
    %v264 = vunpack.c.l.b16 %v147
    %v265 = vunpack.c.h.b16 %v147
    %v266 = vunpack.c.l.b16 %v148
    %v267 = vunpack.c.h.b16 %v148
    %v268 = vunpack.c.l.b16 %v149
    %v269 = vunpack.c.h.b16 %v149
    %v270 = vunpack.c.l.b16 %v150
    %v271 = vunpack.c.h.b16 %v150
    %v272 = vunpack.c.l.b16 %v151
    %v273 = vunpack.c.h.b16 %v151
    %v274 = vunpack.c.l.b16 %v152
    %v275 = vunpack.c.h.b16 %v152
    %v276 = vunpack.c.l.b16 %v153
    %v277 = vunpack.c.h.b16 %v153
    %v278 = vunpack.c.l.b16 %v154
    %v279 = vunpack.c.h.b16 %v154
    %v280 = vunpack.c.l.b16 %v155
    %v281 = vunpack.c.h.b16 %v155
    %v282 = vunpack.c.l.b16 %v156
    %v283 = vunpack.c.h.b16 %v156
    %v284 = vunpack.c.l.b16 %v157
    %v285 = vunpack.c.h.b16 %v157
    %v286 = vunpack.c.l.b16 %v158
    %v287 = vunpack.c.h.b16 %v158
    %v288 = vunpack.c.l.b16 %v159
    %v289 = vunpack.c.h.b16 %v159
    %v290 = vunpack.c.l.b16 %v160
    %v291 = vunpack.c.h.b16 %v160
    %v292 = vunpack.c.l.b16 %v161
    %v293 = vunpack.c.h.b16 %v161
    %v294 = vunpack.c.l.b16 %v162
    %v295 = vunpack.c.h.b16 %v162
    %v296 = vunpack.c.l.b16 %v163
    %v297 = vunpack.c.h.b16 %v163
    %v298 = vunpack.c.l.b16 %v164
    %v299 = vunpack.c.h.b16 %v164
    %v300 = vunpack.c.l.b16 %v165
    %v301 = vunpack.c.h.b16 %v165
    %v302 = vunpack.c.l.b16 %v166
    %v303 = vunpack.c.h.b16 %v166
    %v304 = vunpack.c.l.b16 %v167
    %v305 = vunpack.c.h.b16 %v167
    %v306 = vunpack.c.l.b16 %v168
    %v307 = vunpack.c.h.b16 %v168
    %v308 = vunpack.c.l.b16 %v169
    %v309 = vunpack.c.h.b16 %v169
    %v310 = vunpack.c.l.b16 %v170
    %v311 = vunpack.c.h.b16 %v170
    %v312 = vunpack.c.l.b16 %v171
    %v313 = vunpack.c.h.b16 %v171
    %v314 = vpack.c.b16 %v254, %v250
    %v315 = vpack.c.b16 %v255, %v251
    %v316 = vpack.c.b16 %v256, %v252
    %v317 = vpack.c.b16 %v257, %v253
    %v318 = vpack.c.b16 %v262, %v258
    %v319 = vpack.c.b16 %v263, %v259
    %v320 = vpack.c.b16 %v264, %v260
    %v321 = vpack.c.b16 %v265, %v261
    %v322 = vpack.c.b16 %v270, %v266
    %v323 = vpack.c.b16 %v271, %v267
    %v324 = vpack.c.b16 %v272, %v268
    %v325 = vpack.c.b16 %v273, %v269
    %v326 = vpack.c.b16 %v278, %v274
    %v327 = vpack.c.b16 %v279, %v275
    %v328 = vpack.c.b16 %v280, %v276
    %v329 = vpack.c.b16 %v281, %v277
    %v330 = vpack.c.b16 %v286, %v282
    %v331 = vpack.c.b16 %v287, %v283
    %v332 = vpack.c.b16 %v288, %v284
    %v333 = vpack.c.b16 %v289, %v285
    %v334 = vpack.c.b16 %v294, %v290
    %v335 = vpack.c.b16 %v295, %v291
    %v336 = vpack.c.b16 %v296, %v292
    %v337 = vpack.c.b16 %v297, %v293
    %v338 = vpack.c.b16 %v302, %v298
    %v339 = vpack.c.b16 %v303, %v299
    %v340 = vpack.c.b16 %v304, %v300
    %v341 = vpack.c.b16 %v305, %v301
    %v342 = vpack.c.b16 %v310, %v306
    %v343 = vpack.c.b16 %v311, %v307
    %v344 = vpack.c.b16 %v312, %v308
    %v345 = vpack.c.b16 %v313, %v309
    %378 = vmatprep.subr.bf16.mxu0 %v315
    %379 = vmatpush1.bf16.msra.mxu0 %v314
    %380 = vmatprep.subr.bf16.mxu0 %v319
    %381 = vmatpush1.bf16.msra.mxu0 %v318
    %382 = vmatprep.subr.bf16.mxu0 %v323
    %383 = vmatpush1.bf16.msra.mxu0 %v322
    %384 = vmatprep.subr.bf16.mxu0 %v327
    %385 = vmatpush1.bf16.msra.mxu0 %v326
    %386 = vmatprep.subr.bf16.mxu0 %v331
    %387 = vmatpush1.bf16.msra.mxu0 %v330
    %388 = vmatprep.subr.bf16.mxu0 %v335
    %389 = vmatpush1.bf16.msra.mxu0 %v334
    %390 = vmatprep.subr.bf16.mxu0 %v339
    %391 = vmatpush1.bf16.msra.mxu0 %v338
    %392 = vmatprep.subr.bf16.mxu0 %v343
    %393 = vmatpush1.bf16.msra.mxu0 %v342
    %394 = vmatprep.subr.bf16.mxu0 0
    %395 = vmatpush1.bf16.msra.mxu0 0
    %396 = vmatprep.subr.bf16.mxu0 0
    %397 = vmatpush1.bf16.msra.mxu0 0
    %398 = vmatprep.subr.bf16.mxu0 0
    %399 = vmatpush1.bf16.msra.mxu0 0
    %400 = vmatprep.subr.bf16.mxu0 0
    %401 = vmatpush1.bf16.msra.mxu0 0
    %402 = vmatprep.subr.bf16.mxu0 0
    %403 = vmatpush1.bf16.msra.mxu0 0
    %404 = vmatprep.subr.bf16.mxu0 0
    %405 = vmatpush1.bf16.msra.mxu0 0
    %406 = vmatprep.subr.bf16.mxu0 0
    %407 = vmatpush1.bf16.msra.mxu0 0
    %408 = vmatprep.subr.bf16.mxu0 0
    %409 = vmatpush1.bf16.msra.mxu0 0
    %410 = vmatprep.mubr.bf16.mxu0 0
    %411 = vmatmul.mubr.bf16.gmra.mrb[0].mxu0 %v210
    %v412 = vpop.f32.mrb[0].mxu0
    %v413 = vadd.f32 %v177, %v412
    %v414 = vpop.f32.mrb[0].mxu0
    %v415 = vadd.f32 %v181, %v414
    %v416 = vpop.f32.mrb[0].mxu0
    %v417 = vadd.f32 %v177, %v416
    %v418 = vpop.f32.mrb[0].mxu0
    %v419 = vadd.f32 %v181, %v418
    %420 = vmatprep.mubr.bf16.mxu0 0
    %421 = vmatmul.mubr.bf16.gmra.mrb[0].mxu0 %v211
    %v422 = vpop.f32.mrb[0].mxu0
    %v423 = vadd.f32 %v177, %v422
    %v424 = vpop.f32.mrb[0].mxu0
    %v425 = vadd.f32 %v181, %v424
    %v426 = vpop.f32.mrb[0].mxu0
    %v427 = vadd.f32 %v177, %v426
    %v428 = vpop.f32.mrb[0].mxu0
    %v429 = vadd.f32 %v181, %v428
    %430 = vmatprep.mubr.bf16.mxu0 0
    %431 = vmatmul.mubr.bf16.gmra.mrb[0].mxu0 %v212
    %v432 = vpop.f32.mrb[0].mxu0
    %v433 = vadd.f32 %v177, %v432
    %v434 = vpop.f32.mrb[0].mxu0
    %v435 = vadd.f32 %v181, %v434
    %v436 = vpop.f32.mrb[0].mxu0
    %v437 = vadd.f32 %v177, %v436
    %v438 = vpop.f32.mrb[0].mxu0
    %v439 = vadd.f32 %v181, %v438
    %440 = vmatprep.mubr.bf16.mxu0 0
    %441 = vmatmul.mubr.bf16.gmra.mrb[0].mxu0 %v213
    %v442 = vpop.f32.mrb[0].mxu0
    %v443 = vadd.f32 %v177, %v442
    %v444 = vpop.f32.mrb[0].mxu0
    %v445 = vadd.f32 %v181, %v444
    %v446 = vpop.f32.mrb[0].mxu0
    %v447 = vadd.f32 %v177, %v446
    %v448 = vpop.f32.mrb[0].mxu0
    %v449 = vadd.f32 %v181, %v448
    %450 = vdwg.mxu0
    %451 = vmatprep.subr.bf16.mxu0 %v317
    %452 = vmatpush1.bf16.msra.mxu0 %v316
    %453 = vmatprep.subr.bf16.mxu0 %v321
    %454 = vmatpush1.bf16.msra.mxu0 %v320
    %455 = vmatprep.subr.bf16.mxu0 %v325
    %456 = vmatpush1.bf16.msra.mxu0 %v324
    %457 = vmatprep.subr.bf16.mxu0 %v329
    %458 = vmatpush1.bf16.msra.mxu0 %v328
    %459 = vmatprep.subr.bf16.mxu0 %v333
    %460 = vmatpush1.bf16.msra.mxu0 %v332
    %461 = vmatprep.subr.bf16.mxu0 %v337
    %462 = vmatpush1.bf16.msra.mxu0 %v336
    %463 = vmatprep.subr.bf16.mxu0 %v341
    %464 = vmatpush1.bf16.msra.mxu0 %v340
    %465 = vmatprep.subr.bf16.mxu0 %v345
    %466 = vmatpush1.bf16.msra.mxu0 %v344
    %467 = vmatprep.subr.bf16.mxu0 0
    %468 = vmatpush1.bf16.msra.mxu0 0
    %469 = vmatprep.subr.bf16.mxu0 0
    %470 = vmatpush1.bf16.msra.mxu0 0
    %471 = vmatprep.subr.bf16.mxu0 0
    %472 = vmatpush1.bf16.msra.mxu0 0
    %473 = vmatprep.subr.bf16.mxu0 0
    %474 = vmatpush1.bf16.msra.mxu0 0
    %475 = vmatprep.subr.bf16.mxu0 0
    %476 = vmatpush1.bf16.msra.mxu0 0
    %477 = vmatprep.subr.bf16.mxu0 0
    %478 = vmatpush1.bf16.msra.mxu0 0
    %479 = vmatprep.subr.bf16.mxu0 0
    %480 = vmatpush1.bf16.msra.mxu0 0
    %481 = vmatprep.subr.bf16.mxu0 0
    %482 = vmatpush1.bf16.msra.mxu0 0
    %483 = vmatprep.mubr.bf16.mxu0 0
    %484 = vmatmul.mubr.bf16.gmra.mrb[0].mxu0 %v210
    %v485 = vpop.f32.mrb[0].mxu0
    %v486 = vadd.f32 %v185, %v485
    %v487 = vpop.f32.mrb[0].mxu0
    %v488 = vadd.f32 %v189, %v487
    %v489 = vpop.f32.mrb[0].mxu0
    %v490 = vadd.f32 %v185, %v489
    %v491 = vpop.f32.mrb[0].mxu0
    %v492 = vadd.f32 %v189, %v491
    %493 = vmatprep.mubr.bf16.mxu0 0
    %494 = vmatmul.mubr.bf16.gmra.mrb[0].mxu0 %v211
    %v495 = vpop.f32.mrb[0].mxu0
    %v496 = vadd.f32 %v185, %v495
    %v497 = vpop.f32.mrb[0].mxu0
    %v498 = vadd.f32 %v189, %v497
    %v499 = vpop.f32.mrb[0].mxu0
    %v500 = vadd.f32 %v185, %v499
    %v501 = vpop.f32.mrb[0].mxu0
    %v502 = vadd.f32 %v189, %v501
    %503 = vmatprep.mubr.bf16.mxu0 0
    %504 = vmatmul.mubr.bf16.gmra.mrb[0].mxu0 %v212
    %v505 = vpop.f32.mrb[0].mxu0
    %v506 = vadd.f32 %v185, %v505
    %v507 = vpop.f32.mrb[0].mxu0
    %v508 = vadd.f32 %v189, %v507
    %v509 = vpop.f32.mrb[0].mxu0
    %v510 = vadd.f32 %v185, %v509
    %v511 = vpop.f32.mrb[0].mxu0
    %v512 = vadd.f32 %v189, %v511
    %513 = vmatprep.mubr.bf16.mxu0 0
    %514 = vmatmul.mubr.bf16.gmra.mrb[0].mxu0 %v213
    %v515 = vpop.f32.mrb[0].mxu0
    %v516 = vadd.f32 %v185, %v515
    %v517 = vpop.f32.mrb[0].mxu0
    %v518 = vadd.f32 %v189, %v517
    %v519 = vpop.f32.mrb[0].mxu0
    %v520 = vadd.f32 %v185, %v519
    %v521 = vpop.f32.mrb[0].mxu0
    %v522 = vadd.f32 %v189, %v521
    %523 = vdwg.mxu0
    %524 = vst [vmem:[#allocation3] sm:$0xff] %v413
    %525 = vst [vmem:[#allocation3 + $0x8] sm:$0xff] %v415
    %526 = vst [vmem:[#allocation3 + $0x10] sm:$0xff] %v486
    %527 = vst [vmem:[#allocation3 + $0x18] sm:$0xff] %v488
    %528 = vst [vmem:[#allocation3 + $0x20] sm:$0xff] %v417
    %529 = vst [vmem:[#allocation3 + $0x28] sm:$0xff] %v419
    %530 = vst [vmem:[#allocation3 + $0x30] sm:$0xff] %v490
    %531 = vst [vmem:[#allocation3 + $0x38] sm:$0xff] %v492
    %532 = vst [vmem:[#allocation3 + $0x40] sm:$0xff] %v423
    %533 = vst [vmem:[#allocation3 + $0x48] sm:$0xff] %v425
    %534 = vst [vmem:[#allocation3 + $0x50] sm:$0xff] %v496
    %535 = vst [vmem:[#allocation3 + $0x58] sm:$0xff] %v498
    %536 = vst [vmem:[#allocation3 + $0x60] sm:$0xff] %v427
    %537 = vst [vmem:[#allocation3 + $0x68] sm:$0xff] %v429
    %538 = vst [vmem:[#allocation3 + $0x70] sm:$0xff] %v500
    %539 = vst [vmem:[#allocation3 + $0x78] sm:$0xff] %v502
    %540 = vst [vmem:[#allocation3 + $0x80] sm:$0xff] %v433
    %541 = vst [vmem:[#allocation3 + $0x88] sm:$0xff] %v435
    %542 = vst [vmem:[#allocation3 + $0x90] sm:$0xff] %v506
    %543 = vst [vmem:[#allocation3 + $0x98] sm:$0xff] %v508
    %544 = vst [vmem:[#allocation3 + $0xa0] sm:$0xff] %v437
    %545 = vst [vmem:[#allocation3 + $0xa8] sm:$0xff] %v439
    %546 = vst [vmem:[#allocation3 + $0xb0] sm:$0xff] %v510
    %547 = vst [vmem:[#allocation3 + $0xb8] sm:$0xff] %v512
    %548 = vst [vmem:[#allocation3 + $0xc0] sm:$0xff] %v443
    %549 = vst [vmem:[#allocation3 + $0xc8] sm:$0xff] %v445
    %550 = vst [vmem:[#allocation3 + $0xd0] sm:$0xff] %v516
    %551 = vst [vmem:[#allocation3 + $0xd8] sm:$0xff] %v518
    %552 = vst [vmem:[#allocation3 + $0xe0] sm:$0xff] %v447
    %553 = vst [vmem:[#allocation3 + $0xe8] sm:$0xff] %v449
    %554 = vst [vmem:[#allocation3 + $0xf0] sm:$0xff] %v520
    %555 = vst [vmem:[#allocation3 + $0xf8] sm:$0xff] %v522
    %v556 = vld [vmem:[#allocation11] sm:$0xff]
    %v557 = vld [vmem:[#allocation11 + $0x8] sm:$0xff]
    %v558 = vld [vmem:[#allocation11 + $0x10] sm:$0xff]
    %v559 = vld [vmem:[#allocation11 + $0x18] sm:$0xff]
    %v560 = vld [vmem:[#allocation11 + $0x20] sm:$0xff]
    %v561 = vld [vmem:[#allocation11 + $0x28] sm:$0xff]
    %v562 = vld [vmem:[#allocation11 + $0x30] sm:$0xff]
    %v563 = vld [vmem:[#allocation11 + $0x38] sm:$0xff]
    %v564 = vld [vmem:[#allocation11 + $0x40] sm:$0xff]
    %v565 = vld [vmem:[#allocation11 + $0x48] sm:$0xff]
    %v566 = vld [vmem:[#allocation11 + $0x50] sm:$0xff]
    %v567 = vld [vmem:[#allocation11 + $0x58] sm:$0xff]
    %v568 = vld [vmem:[#allocation11 + $0x60] sm:$0xff]
    %v569 = vld [vmem:[#allocation11 + $0x68] sm:$0xff]
    %v570 = vld [vmem:[#allocation11 + $0x70] sm:$0xff]
    %v571 = vld [vmem:[#allocation11 + $0x78] sm:$0xff]
    %v572 = vld [vmem:[#allocation11 + $0x80] sm:$0xff]
    %v573 = vld [vmem:[#allocation11 + $0x88] sm:$0xff]
    %v574 = vld [vmem:[#allocation11 + $0x90] sm:$0xff]
    %v575 = vld [vmem:[#allocation11 + $0x98] sm:$0xff]
    %v576 = vld [vmem:[#allocation11 + $0xa0] sm:$0xff]
    %v577 = vld [vmem:[#allocation11 + $0xa8] sm:$0xff]
    %v578 = vld [vmem:[#allocation11 + $0xb0] sm:$0xff]
    %v579 = vld [vmem:[#allocation11 + $0xb8] sm:$0xff]
    %v580 = vld [vmem:[#allocation11 + $0xc0] sm:$0xff]
    %v581 = vld [vmem:[#allocation11 + $0xc8] sm:$0xff]
    %v582 = vld [vmem:[#allocation11 + $0xd0] sm:$0xff]
    %v583 = vld [vmem:[#allocation11 + $0xd8] sm:$0xff]
    %v584 = vld [vmem:[#allocation11 + $0xe0] sm:$0xff]
    %v585 = vld [vmem:[#allocation11 + $0xe8] sm:$0xff]
    %v586 = vld [vmem:[#allocation11 + $0xf0] sm:$0xff]
    %v587 = vld [vmem:[#allocation11 + $0xf8] sm:$0xff]
    %v588 = vld [vmem:[#allocation14] sm:$0xff]
    %589 = vst [vmem:[#allocation4] sm:$0xff] %v588
    %v590 = vld [vmem:[%s5] sm:$0xff]
    %591 = vst [vmem:[#allocation5] sm:$0xff] %v590
    %v592 = vld [vmem:[#allocation4] sm:$0xff]
    %v593 = vpack.c.bf16 %v592, %v592
    %s594 = smul.u32 0, 4
    %s595 = smul.addr %s594, 8
    %s596 = scalar_lea.vmem [#allocation3], %s595
    %v597 = vld [vmem:[%s596] sm:$0xff]
    %v598 = vld [vmem:[%s596 + $0x8] sm:$0xff]
    %v599 = vld [vmem:[%s596 + $0x10] sm:$0xff]
    %v600 = vld [vmem:[%s596 + $0x18] sm:$0xff]
    %v633 = vunpack.c.l.b16 %v556
    %v634 = vunpack.c.h.b16 %v556
    %v635 = vunpack.c.l.b16 %v557
    %v636 = vunpack.c.h.b16 %v557
    %v637 = vunpack.c.l.b16 %v558
    %v638 = vunpack.c.h.b16 %v558
    %v639 = vunpack.c.l.b16 %v559
    %v640 = vunpack.c.h.b16 %v559
    %v641 = vunpack.c.l.b16 %v560
    %v642 = vunpack.c.h.b16 %v560
    %v643 = vunpack.c.l.b16 %v561
    %v644 = vunpack.c.h.b16 %v561
    %v645 = vunpack.c.l.b16 %v562
    %v646 = vunpack.c.h.b16 %v562
    %v647 = vunpack.c.l.b16 %v563
    %v648 = vunpack.c.h.b16 %v563
    %v649 = vunpack.c.l.b16 %v564
    %v650 = vunpack.c.h.b16 %v564
    %v651 = vunpack.c.l.b16 %v565
    %v652 = vunpack.c.h.b16 %v565
    %v653 = vunpack.c.l.b16 %v566
    %v654 = vunpack.c.h.b16 %v566
    %v655 = vunpack.c.l.b16 %v567
    %v656 = vunpack.c.h.b16 %v567
    %v657 = vunpack.c.l.b16 %v568
    %v658 = vunpack.c.h.b16 %v568
    %v659 = vunpack.c.l.b16 %v569
    %v660 = vunpack.c.h.b16 %v569
    %v661 = vunpack.c.l.b16 %v570
    %v662 = vunpack.c.h.b16 %v570
    %v663 = vunpack.c.l.b16 %v571
    %v664 = vunpack.c.h.b16 %v571
    %v665 = vunpack.c.l.b16 %v572
    %v666 = vunpack.c.h.b16 %v572
    %v667 = vunpack.c.l.b16 %v573
    %v668 = vunpack.c.h.b16 %v573
    %v669 = vunpack.c.l.b16 %v574
    %v670 = vunpack.c.h.b16 %v574
    %v671 = vunpack.c.l.b16 %v575
    %v672 = vunpack.c.h.b16 %v575
    %v673 = vunpack.c.l.b16 %v576
    %v674 = vunpack.c.h.b16 %v576
    %v675 = vunpack.c.l.b16 %v577
    %v676 = vunpack.c.h.b16 %v577
    %v677 = vunpack.c.l.b16 %v578
    %v678 = vunpack.c.h.b16 %v578
    %v679 = vunpack.c.l.b16 %v579
    %v680 = vunpack.c.h.b16 %v579
    %v681 = vunpack.c.l.b16 %v580
    %v682 = vunpack.c.h.b16 %v580
    %v683 = vunpack.c.l.b16 %v581
    %v684 = vunpack.c.h.b16 %v581
    %v685 = vunpack.c.l.b16 %v582
    %v686 = vunpack.c.h.b16 %v582
    %v687 = vunpack.c.l.b16 %v583
    %v688 = vunpack.c.h.b16 %v583
    %v689 = vunpack.c.l.b16 %v584
    %v690 = vunpack.c.h.b16 %v584
    %v691 = vunpack.c.l.b16 %v585
    %v692 = vunpack.c.h.b16 %v585
    %v693 = vunpack.c.l.b16 %v586
    %v694 = vunpack.c.h.b16 %v586
    %v695 = vunpack.c.l.b16 %v587
    %v696 = vunpack.c.h.b16 %v587
    %v697 = vpack.c.b16 %v637, %v633
    %v698 = vpack.c.b16 %v638, %v634
    %v699 = vpack.c.b16 %v639, %v635
    %v700 = vpack.c.b16 %v640, %v636
    %v701 = vpack.c.b16 %v645, %v641
    %v702 = vpack.c.b16 %v646, %v642
    %v703 = vpack.c.b16 %v647, %v643
    %v704 = vpack.c.b16 %v648, %v644
    %v705 = vpack.c.b16 %v653, %v649
    %v706 = vpack.c.b16 %v654, %v650
    %v707 = vpack.c.b16 %v655, %v651
    %v708 = vpack.c.b16 %v656, %v652
    %v709 = vpack.c.b16 %v661, %v657
    %v710 = vpack.c.b16 %v662, %v658
    %v711 = vpack.c.b16 %v663, %v659
    %v712 = vpack.c.b16 %v664, %v660
    %v713 = vpack.c.b16 %v669, %v665
    %v714 = vpack.c.b16 %v670, %v666
    %v715 = vpack.c.b16 %v671, %v667
    %v716 = vpack.c.b16 %v672, %v668
    %v717 = vpack.c.b16 %v677, %v673
    %v718 = vpack.c.b16 %v678, %v674
    %v719 = vpack.c.b16 %v679, %v675
    %v720 = vpack.c.b16 %v680, %v676
    %v721 = vpack.c.b16 %v685, %v681
    %v722 = vpack.c.b16 %v686, %v682
    %v723 = vpack.c.b16 %v687, %v683
    %v724 = vpack.c.b16 %v688, %v684
    %v725 = vpack.c.b16 %v693, %v689
    %v726 = vpack.c.b16 %v694, %v690
    %v727 = vpack.c.b16 %v695, %v691
    %v728 = vpack.c.b16 %v696, %v692
    %761 = vmatprep.subr.bf16.mxu0 %v698
    %762 = vmatpush1.bf16.msra.mxu0 %v697
    %763 = vmatprep.subr.bf16.mxu0 %v702
    %764 = vmatpush1.bf16.msra.mxu0 %v701
    %765 = vmatprep.subr.bf16.mxu0 %v706
    %766 = vmatpush1.bf16.msra.mxu0 %v705
    %767 = vmatprep.subr.bf16.mxu0 %v710
    %768 = vmatpush1.bf16.msra.mxu0 %v709
    %769 = vmatprep.subr.bf16.mxu0 %v714
    %770 = vmatpush1.bf16.msra.mxu0 %v713
    %771 = vmatprep.subr.bf16.mxu0 %v718
    %772 = vmatpush1.bf16.msra.mxu0 %v717
    %773 = vmatprep.subr.bf16.mxu0 %v722
    %774 = vmatpush1.bf16.msra.mxu0 %v721
    %775 = vmatprep.subr.bf16.mxu0 %v726
    %776 = vmatpush1.bf16.msra.mxu0 %v725
    %777 = vmatprep.subr.bf16.mxu0 0
    %778 = vmatpush1.bf16.msra.mxu0 0
    %779 = vmatprep.subr.bf16.mxu0 0
    %780 = vmatpush1.bf16.msra.mxu0 0
    %781 = vmatprep.subr.bf16.mxu0 0
    %782 = vmatpush1.bf16.msra.mxu0 0
    %783 = vmatprep.subr.bf16.mxu0 0
    %784 = vmatpush1.bf16.msra.mxu0 0
    %785 = vmatprep.subr.bf16.mxu0 0
    %786 = vmatpush1.bf16.msra.mxu0 0
    %787 = vmatprep.subr.bf16.mxu0 0
    %788 = vmatpush1.bf16.msra.mxu0 0
    %789 = vmatprep.subr.bf16.mxu0 0
    %790 = vmatpush1.bf16.msra.mxu0 0
    %791 = vmatprep.subr.bf16.mxu0 0
    %792 = vmatpush1.bf16.msra.mxu0 0
    %793 = vmatprep.mubr.bf16.mxu0 0
    %794 = vmatmul.mubr.bf16.gmra.mrb[0].mxu0 %v593
    %v795 = vpop.f32.mrb[0].mxu0
    %v796 = vadd.f32 %v597, %v795
    %v797 = vpop.f32.mrb[0].mxu0
    %v798 = vadd.f32 %v598, %v797
    %v799 = vpop.f32.mrb[0].mxu0
    %v800 = vpop.f32.mrb[0].mxu0
    %801 = vdwg.mxu0
    %802 = vmatprep.subr.bf16.mxu0 %v700
    %803 = vmatpush1.bf16.msra.mxu0 %v699
    %804 = vmatprep.subr.bf16.mxu0 %v704
    %805 = vmatpush1.bf16.msra.mxu0 %v703
    %806 = vmatprep.subr.bf16.mxu0 %v708
    %807 = vmatpush1.bf16.msra.mxu0 %v707
    %808 = vmatprep.subr.bf16.mxu0 %v712
    %809 = vmatpush1.bf16.msra.mxu0 %v711
    %810 = vmatprep.subr.bf16.mxu0 %v716
    %811 = vmatpush1.bf16.msra.mxu0 %v715
    %812 = vmatprep.subr.bf16.mxu0 %v720
    %813 = vmatpush1.bf16.msra.mxu0 %v719
    %814 = vmatprep.subr.bf16.mxu0 %v724
    %815 = vmatpush1.bf16.msra.mxu0 %v723
    %816 = vmatprep.subr.bf16.mxu0 %v728
    %817 = vmatpush1.bf16.msra.mxu0 %v727
    %818 = vmatprep.subr.bf16.mxu0 0
    %819 = vmatpush1.bf16.msra.mxu0 0
    %820 = vmatprep.subr.bf16.mxu0 0
    %821 = vmatpush1.bf16.msra.mxu0 0
    %822 = vmatprep.subr.bf16.mxu0 0
    %823 = vmatpush1.bf16.msra.mxu0 0
    %824 = vmatprep.subr.bf16.mxu0 0
    %825 = vmatpush1.bf16.msra.mxu0 0
    %826 = vmatprep.subr.bf16.mxu0 0
    %827 = vmatpush1.bf16.msra.mxu0 0
    %828 = vmatprep.subr.bf16.mxu0 0
    %829 = vmatpush1.bf16.msra.mxu0 0
    %830 = vmatprep.subr.bf16.mxu0 0
    %831 = vmatpush1.bf16.msra.mxu0 0
    %832 = vmatprep.subr.bf16.mxu0 0
    %833 = vmatpush1.bf16.msra.mxu0 0
    %834 = vmatprep.mubr.bf16.mxu0 0
    %835 = vmatmul.mubr.bf16.gmra.mrb[0].mxu0 %v593
    %v836 = vpop.f32.mrb[0].mxu0
    %v837 = vadd.f32 %v599, %v836
    %v838 = vpop.f32.mrb[0].mxu0
    %v839 = vadd.f32 %v600, %v838
    %v840 = vpop.f32.mrb[0].mxu0
    %v841 = vpop.f32.mrb[0].mxu0
    %842 = vdwg.mxu0
    %v843 = vxor.u32 %v796, 2147483648
    %v844 = vmul.f32 %v843, 1.442695
    %v845 = vpow.pop %v844
    %v846 = vadd.f32 %v845, 1.0
    %v847 = vrcp.pop %v846
    %v848 = vmul.f32 1.0, %v847
    %v849 = vxor.u32 %v798, 2147483648
    %v850 = vmul.f32 %v849, 1.442695
    %v851 = vpow.pop %v850
    %v852 = vadd.f32 %v851, 1.0
    %v853 = vrcp.pop %v852
    %v854 = vmul.f32 1.0, %v853
    %v855 = vtanh.pop %v837
    %v856 = vxor.u32 %v839, 2147483648
    %v857 = vmul.f32 %v856, 1.442695
    %v858 = vpow.pop %v857
    %v859 = vadd.f32 %v858, 1.0
    %v860 = vrcp.pop %v859
    %v861 = vmul.f32 1.0, %v860
    %v862 = vld [vmem:[#allocation5] sm:$0xff]
    %v863 = vmul.f32 %v854, %v862
    %v864 = vmul.f32 %v848, %v855
    %v865 = vadd.f32 %v863, %v864
    %v866 = vtanh.pop %v865
    %v867 = vmul.f32 %v861, %v866
    %868 = vst [vmem:[#allocation5] sm:$0xff] %v865
    %869 = vst [vmem:[#allocation4] sm:$0xff] %v867
    %870 = vst [vmem:[#allocation2] sm:$0xff] %v867
    %v871 = vld [vmem:[#allocation4] sm:$0xff]
    %v872 = vpack.c.bf16 %v871, %v871
    %s873 = smul.u32 1, 4
    %s874 = smul.addr %s873, 8
    %s875 = scalar_lea.vmem [#allocation3], %s874
    %v876 = vld [vmem:[%s875] sm:$0xff]
    %v877 = vld [vmem:[%s875 + $0x8] sm:$0xff]
    %v878 = vld [vmem:[%s875 + $0x10] sm:$0xff]
    %v879 = vld [vmem:[%s875 + $0x18] sm:$0xff]
    %880 = vmatprep.subr.bf16.mxu0 %v698
    %881 = vmatpush1.bf16.msra.mxu0 %v697
    %882 = vmatprep.subr.bf16.mxu0 %v702
    %883 = vmatpush1.bf16.msra.mxu0 %v701
    %884 = vmatprep.subr.bf16.mxu0 %v706
    %885 = vmatpush1.bf16.msra.mxu0 %v705
    %886 = vmatprep.subr.bf16.mxu0 %v710
    %887 = vmatpush1.bf16.msra.mxu0 %v709
    %888 = vmatprep.subr.bf16.mxu0 %v714
    %889 = vmatpush1.bf16.msra.mxu0 %v713
    %890 = vmatprep.subr.bf16.mxu0 %v718
    %891 = vmatpush1.bf16.msra.mxu0 %v717
    %892 = vmatprep.subr.bf16.mxu0 %v722
    %893 = vmatpush1.bf16.msra.mxu0 %v721
    %894 = vmatprep.subr.bf16.mxu0 %v726
    %895 = vmatpush1.bf16.msra.mxu0 %v725
    %896 = vmatprep.subr.bf16.mxu0 0
    %897 = vmatpush1.bf16.msra.mxu0 0
    %898 = vmatprep.subr.bf16.mxu0 0
    %899 = vmatpush1.bf16.msra.mxu0 0
    %900 = vmatprep.subr.bf16.mxu0 0
    %901 = vmatpush1.bf16.msra.mxu0 0
    %902 = vmatprep.subr.bf16.mxu0 0
    %903 = vmatpush1.bf16.msra.mxu0 0
    %904 = vmatprep.subr.bf16.mxu0 0
    %905 = vmatpush1.bf16.msra.mxu0 0
    %906 = vmatprep.subr.bf16.mxu0 0
    %907 = vmatpush1.bf16.msra.mxu0 0
    %908 = vmatprep.subr.bf16.mxu0 0
    %909 = vmatpush1.bf16.msra.mxu0 0
    %910 = vmatprep.subr.bf16.mxu0 0
    %911 = vmatpush1.bf16.msra.mxu0 0
    %912 = vmatprep.mubr.bf16.mxu0 0
    %913 = vmatmul.mubr.bf16.gmra.mrb[0].mxu0 %v872
    %v914 = vpop.f32.mrb[0].mxu0
    %v915 = vadd.f32 %v876, %v914
    %v916 = vpop.f32.mrb[0].mxu0
    %v917 = vadd.f32 %v877, %v916
    %v918 = vpop.f32.mrb[0].mxu0
    %v919 = vpop.f32.mrb[0].mxu0
    %920 = vdwg.mxu0
    %921 = vmatprep.subr.bf16.mxu0 %v700
    %922 = vmatpush1.bf16.msra.mxu0 %v699
    %923 = vmatprep.subr.bf16.mxu0 %v704
    %924 = vmatpush1.bf16.msra.mxu0 %v703
    %925 = vmatprep.subr.bf16.mxu0 %v708
    %926 = vmatpush1.bf16.msra.mxu0 %v707
    %927 = vmatprep.subr.bf16.mxu0 %v712
    %928 = vmatpush1.bf16.msra.mxu0 %v711
    %929 = vmatprep.subr.bf16.mxu0 %v716
    %930 = vmatpush1.bf16.msra.mxu0 %v715
    %931 = vmatprep.subr.bf16.mxu0 %v720
    %932 = vmatpush1.bf16.msra.mxu0 %v719
    %933 = vmatprep.subr.bf16.mxu0 %v724
    %934 = vmatpush1.bf16.msra.mxu0 %v723
    %935 = vmatprep.subr.bf16.mxu0 %v728
    %936 = vmatpush1.bf16.msra.mxu0 %v727
    %937 = vmatprep.subr.bf16.mxu0 0
    %938 = vmatpush1.bf16.msra.mxu0 0
    %939 = vmatprep.subr.bf16.mxu0 0
    %940 = vmatpush1.bf16.msra.mxu0 0
    %941 = vmatprep.subr.bf16.mxu0 0
    %942 = vmatpush1.bf16.msra.mxu0 0
    %943 = vmatprep.subr.bf16.mxu0 0
    %944 = vmatpush1.bf16.msra.mxu0 0
    %945 = vmatprep.subr.bf16.mxu0 0
    %946 = vmatpush1.bf16.msra.mxu0 0
    %947 = vmatprep.subr.bf16.mxu0 0
    %948 = vmatpush1.bf16.msra.mxu0 0
    %949 = vmatprep.subr.bf16.mxu0 0
    %950 = vmatpush1.bf16.msra.mxu0 0
    %951 = vmatprep.subr.bf16.mxu0 0
    %952 = vmatpush1.bf16.msra.mxu0 0
    %953 = vmatprep.mubr.bf16.mxu0 0
    %954 = vmatmul.mubr.bf16.gmra.mrb[0].mxu0 %v872
    %v955 = vpop.f32.mrb[0].mxu0
    %v956 = vadd.f32 %v878, %v955
    %v957 = vpop.f32.mrb[0].mxu0
    %v958 = vadd.f32 %v879, %v957
    %v959 = vpop.f32.mrb[0].mxu0
    %v960 = vpop.f32.mrb[0].mxu0
    %961 = vdwg.mxu0
    %v962 = vxor.u32 %v915, 2147483648
    %v963 = vmul.f32 %v962, 1.442695
    %v964 = vpow.pop %v963
    %v965 = vadd.f32 %v964, 1.0
    %v966 = vrcp.pop %v965
    %v967 = vmul.f32 1.0, %v966
    %v968 = vxor.u32 %v917, 2147483648
    %v969 = vmul.f32 %v968, 1.442695
    %v970 = vpow.pop %v969
    %v971 = vadd.f32 %v970, 1.0
    %v972 = vrcp.pop %v971
    %v973 = vmul.f32 1.0, %v972
    %v974 = vtanh.pop %v956
    %v975 = vxor.u32 %v958, 2147483648
    %v976 = vmul.f32 %v975, 1.442695
    %v977 = vpow.pop %v976
    %v978 = vadd.f32 %v977, 1.0
    %v979 = vrcp.pop %v978
    %v980 = vmul.f32 1.0, %v979
    %v981 = vld [vmem:[#allocation5] sm:$0xff]
    %v982 = vmul.f32 %v973, %v981
    %v983 = vmul.f32 %v967, %v974
    %v984 = vadd.f32 %v982, %v983
    %v985 = vtanh.pop %v984
    %v986 = vmul.f32 %v980, %v985
    %987 = vst [vmem:[#allocation5] sm:$0xff] %v984
    %988 = vst [vmem:[#allocation4] sm:$0xff] %v986
    %s989 = scalar_lea.vmem [#allocation2], 8
    %990 = vst [vmem:[%s989] sm:$0xff] %v986
    %v991 = vld [vmem:[#allocation4] sm:$0xff]
    %v992 = vpack.c.bf16 %v991, %v991
    %s993 = smul.u32 2, 4
    %s994 = smul.addr %s993, 8
    %s995 = scalar_lea.vmem [#allocation3], %s994
    %v996 = vld [vmem:[%s995] sm:$0xff]
    %v997 = vld [vmem:[%s995 + $0x8] sm:$0xff]
    %v998 = vld [vmem:[%s995 + $0x10] sm:$0xff]
    %v999 = vld [vmem:[%s995 + $0x18] sm:$0xff]
    %1000 = vmatprep.subr.bf16.mxu0 %v698
    %1001 = vmatpush1.bf16.msra.mxu0 %v697
    %1002 = vmatprep.subr.bf16.mxu0 %v702
    %1003 = vmatpush1.bf16.msra.mxu0 %v701
    %1004 = vmatprep.subr.bf16.mxu0 %v706
    %1005 = vmatpush1.bf16.msra.mxu0 %v705
    %1006 = vmatprep.subr.bf16.mxu0 %v710
    %1007 = vmatpush1.bf16.msra.mxu0 %v709
    %1008 = vmatprep.subr.bf16.mxu0 %v714
    %1009 = vmatpush1.bf16.msra.mxu0 %v713
    %1010 = vmatprep.subr.bf16.mxu0 %v718
    %1011 = vmatpush1.bf16.msra.mxu0 %v717
    %1012 = vmatprep.subr.bf16.mxu0 %v722
    %1013 = vmatpush1.bf16.msra.mxu0 %v721
    %1014 = vmatprep.subr.bf16.mxu0 %v726
    %1015 = vmatpush1.bf16.msra.mxu0 %v725
    %1016 = vmatprep.subr.bf16.mxu0 0
    %1017 = vmatpush1.bf16.msra.mxu0 0
    %1018 = vmatprep.subr.bf16.mxu0 0
    %1019 = vmatpush1.bf16.msra.mxu0 0
    %1020 = vmatprep.subr.bf16.mxu0 0
    %1021 = vmatpush1.bf16.msra.mxu0 0
    %1022 = vmatprep.subr.bf16.mxu0 0
    %1023 = vmatpush1.bf16.msra.mxu0 0
    %1024 = vmatprep.subr.bf16.mxu0 0
    %1025 = vmatpush1.bf16.msra.mxu0 0
    %1026 = vmatprep.subr.bf16.mxu0 0
    %1027 = vmatpush1.bf16.msra.mxu0 0
    %1028 = vmatprep.subr.bf16.mxu0 0
    %1029 = vmatpush1.bf16.msra.mxu0 0
    %1030 = vmatprep.subr.bf16.mxu0 0
    %1031 = vmatpush1.bf16.msra.mxu0 0
    %1032 = vmatprep.mubr.bf16.mxu0 0
    %1033 = vmatmul.mubr.bf16.gmra.mrb[0].mxu0 %v992
    %v1034 = vpop.f32.mrb[0].mxu0
    %v1035 = vadd.f32 %v996, %v1034
    %v1036 = vpop.f32.mrb[0].mxu0
    %v1037 = vadd.f32 %v997, %v1036
    %v1038 = vpop.f32.mrb[0].mxu0
    %v1039 = vpop.f32.mrb[0].mxu0
    %1040 = vdwg.mxu0
    %1041 = vmatprep.subr.bf16.mxu0 %v700
    %1042 = vmatpush1.bf16.msra.mxu0 %v699
    %1043 = vmatprep.subr.bf16.mxu0 %v704
    %1044 = vmatpush1.bf16.msra.mxu0 %v703
    %1045 = vmatprep.subr.bf16.mxu0 %v708
    %1046 = vmatpush1.bf16.msra.mxu0 %v707
    %1047 = vmatprep.subr.bf16.mxu0 %v712
    %1048 = vmatpush1.bf16.msra.mxu0 %v711
    %1049 = vmatprep.subr.bf16.mxu0 %v716
    %1050 = vmatpush1.bf16.msra.mxu0 %v715
    %1051 = vmatprep.subr.bf16.mxu0 %v720
    %1052 = vmatpush1.bf16.msra.mxu0 %v719
    %1053 = vmatprep.subr.bf16.mxu0 %v724
    %1054 = vmatpush1.bf16.msra.mxu0 %v723
    %1055 = vmatprep.subr.bf16.mxu0 %v728
    %1056 = vmatpush1.bf16.msra.mxu0 %v727
    %1057 = vmatprep.subr.bf16.mxu0 0
    %1058 = vmatpush1.bf16.msra.mxu0 0
    %1059 = vmatprep.subr.bf16.mxu0 0
    %1060 = vmatpush1.bf16.msra.mxu0 0
    %1061 = vmatprep.subr.bf16.mxu0 0
    %1062 = vmatpush1.bf16.msra.mxu0 0
    %1063 = vmatprep.subr.bf16.mxu0 0
    %1064 = vmatpush1.bf16.msra.mxu0 0
    %1065 = vmatprep.subr.bf16.mxu0 0
    %1066 = vmatpush1.bf16.msra.mxu0 0
    %1067 = vmatprep.subr.bf16.mxu0 0
    %1068 = vmatpush1.bf16.msra.mxu0 0
    %1069 = vmatprep.subr.bf16.mxu0 0
    %1070 = vmatpush1.bf16.msra.mxu0 0
    %1071 = vmatprep.subr.bf16.mxu0 0
    %1072 = vmatpush1.bf16.msra.mxu0 0
    %1073 = vmatprep.mubr.bf16.mxu0 0
    %1074 = vmatmul.mubr.bf16.gmra.mrb[0].mxu0 %v992
    %v1075 = vpop.f32.mrb[0].mxu0
    %v1076 = vadd.f32 %v998, %v1075
    %v1077 = vpop.f32.mrb[0].mxu0
    %v1078 = vadd.f32 %v999, %v1077
    %v1079 = vpop.f32.mrb[0].mxu0
    %v1080 = vpop.f32.mrb[0].mxu0
    %1081 = vdwg.mxu0
    %v1082 = vxor.u32 %v1035, 2147483648
    %v1083 = vmul.f32 %v1082, 1.442695
    %v1084 = vpow.pop %v1083
    %v1085 = vadd.f32 %v1084, 1.0
    %v1086 = vrcp.pop %v1085
    %v1087 = vmul.f32 1.0, %v1086
    %v1088 = vxor.u32 %v1037, 2147483648
    %v1089 = vmul.f32 %v1088, 1.442695
    %v1090 = vpow.pop %v1089
    %v1091 = vadd.f32 %v1090, 1.0
    %v1092 = vrcp.pop %v1091
    %v1093 = vmul.f32 1.0, %v1092
    %v1094 = vtanh.pop %v1076
    %v1095 = vxor.u32 %v1078, 2147483648
    %v1096 = vmul.f32 %v1095, 1.442695
    %v1097 = vpow.pop %v1096
    %v1098 = vadd.f32 %v1097, 1.0
    %v1099 = vrcp.pop %v1098
    %v1100 = vmul.f32 1.0, %v1099
    %v1101 = vld [vmem:[#allocation5] sm:$0xff]
    %v1102 = vmul.f32 %v1093, %v1101
    %v1103 = vmul.f32 %v1087, %v1094
    %v1104 = vadd.f32 %v1102, %v1103
    %v1105 = vtanh.pop %v1104
    %v1106 = vmul.f32 %v1100, %v1105
    %1107 = vst [vmem:[#allocation5] sm:$0xff] %v1104
    %1108 = vst [vmem:[#allocation4] sm:$0xff] %v1106
    %s1109 = scalar_lea.vmem [#allocation2], 16
    %1110 = vst [vmem:[%s1109] sm:$0xff] %v1106
    %v1111 = vld [vmem:[#allocation4] sm:$0xff]
    %v1112 = vpack.c.bf16 %v1111, %v1111
    %s1113 = smul.u32 3, 4
    %s1114 = smul.addr %s1113, 8
    %s1115 = scalar_lea.vmem [#allocation3], %s1114
    %v1116 = vld [vmem:[%s1115] sm:$0xff]
    %v1117 = vld [vmem:[%s1115 + $0x8] sm:$0xff]
    %v1118 = vld [vmem:[%s1115 + $0x10] sm:$0xff]
    %v1119 = vld [vmem:[%s1115 + $0x18] sm:$0xff]
    %1120 = vmatprep.subr.bf16.mxu0 %v698
    %1121 = vmatpush1.bf16.msra.mxu0 %v697
    %1122 = vmatprep.subr.bf16.mxu0 %v702
    %1123 = vmatpush1.bf16.msra.mxu0 %v701
    %1124 = vmatprep.subr.bf16.mxu0 %v706
    %1125 = vmatpush1.bf16.msra.mxu0 %v705
    %1126 = vmatprep.subr.bf16.mxu0 %v710
    %1127 = vmatpush1.bf16.msra.mxu0 %v709
    %1128 = vmatprep.subr.bf16.mxu0 %v714
    %1129 = vmatpush1.bf16.msra.mxu0 %v713
    %1130 = vmatprep.subr.bf16.mxu0 %v718
    %1131 = vmatpush1.bf16.msra.mxu0 %v717
    %1132 = vmatprep.subr.bf16.mxu0 %v722
    %1133 = vmatpush1.bf16.msra.mxu0 %v721
    %1134 = vmatprep.subr.bf16.mxu0 %v726
    %1135 = vmatpush1.bf16.msra.mxu0 %v725
    %1136 = vmatprep.subr.bf16.mxu0 0
    %1137 = vmatpush1.bf16.msra.mxu0 0
    %1138 = vmatprep.subr.bf16.mxu0 0
    %1139 = vmatpush1.bf16.msra.mxu0 0
    %1140 = vmatprep.subr.bf16.mxu0 0
    %1141 = vmatpush1.bf16.msra.mxu0 0
    %1142 = vmatprep.subr.bf16.mxu0 0
    %1143 = vmatpush1.bf16.msra.mxu0 0
    %1144 = vmatprep.subr.bf16.mxu0 0
    %1145 = vmatpush1.bf16.msra.mxu0 0
    %1146 = vmatprep.subr.bf16.mxu0 0
    %1147 = vmatpush1.bf16.msra.mxu0 0
    %1148 = vmatprep.subr.bf16.mxu0 0
    %1149 = vmatpush1.bf16.msra.mxu0 0
    %1150 = vmatprep.subr.bf16.mxu0 0
    %1151 = vmatpush1.bf16.msra.mxu0 0
    %1152 = vmatprep.mubr.bf16.mxu0 0
    %1153 = vmatmul.mubr.bf16.gmra.mrb[0].mxu0 %v1112
    %v1154 = vpop.f32.mrb[0].mxu0
    %v1155 = vadd.f32 %v1116, %v1154
    %v1156 = vpop.f32.mrb[0].mxu0
    %v1157 = vadd.f32 %v1117, %v1156
    %v1158 = vpop.f32.mrb[0].mxu0
    %v1159 = vpop.f32.mrb[0].mxu0
    %1160 = vdwg.mxu0
    %1161 = vmatprep.subr.bf16.mxu0 %v700
    %1162 = vmatpush1.bf16.msra.mxu0 %v699
    %1163 = vmatprep.subr.bf16.mxu0 %v704
    %1164 = vmatpush1.bf16.msra.mxu0 %v703
    %1165 = vmatprep.subr.bf16.mxu0 %v708
    %1166 = vmatpush1.bf16.msra.mxu0 %v707
    %1167 = vmatprep.subr.bf16.mxu0 %v712
    %1168 = vmatpush1.bf16.msra.mxu0 %v711
    %1169 = vmatprep.subr.bf16.mxu0 %v716
    %1170 = vmatpush1.bf16.msra.mxu0 %v715
    %1171 = vmatprep.subr.bf16.mxu0 %v720
    %1172 = vmatpush1.bf16.msra.mxu0 %v719
    %1173 = vmatprep.subr.bf16.mxu0 %v724
    %1174 = vmatpush1.bf16.msra.mxu0 %v723
    %1175 = vmatprep.subr.bf16.mxu0 %v728
    %1176 = vmatpush1.bf16.msra.mxu0 %v727
    %1177 = vmatprep.subr.bf16.mxu0 0
    %1178 = vmatpush1.bf16.msra.mxu0 0
    %1179 = vmatprep.subr.bf16.mxu0 0
    %1180 = vmatpush1.bf16.msra.mxu0 0
    %1181 = vmatprep.subr.bf16.mxu0 0
    %1182 = vmatpush1.bf16.msra.mxu0 0
    %1183 = vmatprep.subr.bf16.mxu0 0
    %1184 = vmatpush1.bf16.msra.mxu0 0
    %1185 = vmatprep.subr.bf16.mxu0 0
    %1186 = vmatpush1.bf16.msra.mxu0 0
    %1187 = vmatprep.subr.bf16.mxu0 0
    %1188 = vmatpush1.bf16.msra.mxu0 0
    %1189 = vmatprep.subr.bf16.mxu0 0
    %1190 = vmatpush1.bf16.msra.mxu0 0
    %1191 = vmatprep.subr.bf16.mxu0 0
    %1192 = vmatpush1.bf16.msra.mxu0 0
    %1193 = vmatprep.mubr.bf16.mxu0 0
    %1194 = vmatmul.mubr.bf16.gmra.mrb[0].mxu0 %v1112
    %v1195 = vpop.f32.mrb[0].mxu0
    %v1196 = vadd.f32 %v1118, %v1195
    %v1197 = vpop.f32.mrb[0].mxu0
    %v1198 = vadd.f32 %v1119, %v1197
    %v1199 = vpop.f32.mrb[0].mxu0
    %v1200 = vpop.f32.mrb[0].mxu0
    %1201 = vdwg.mxu0
    %v1202 = vxor.u32 %v1155, 2147483648
    %v1203 = vmul.f32 %v1202, 1.442695
    %v1204 = vpow.pop %v1203
    %v1205 = vadd.f32 %v1204, 1.0
    %v1206 = vrcp.pop %v1205
    %v1207 = vmul.f32 1.0, %v1206
    %v1208 = vxor.u32 %v1157, 2147483648
    %v1209 = vmul.f32 %v1208, 1.442695
    %v1210 = vpow.pop %v1209
    %v1211 = vadd.f32 %v1210, 1.0
    %v1212 = vrcp.pop %v1211
    %v1213 = vmul.f32 1.0, %v1212
    %v1214 = vtanh.pop %v1196
    %v1215 = vxor.u32 %v1198, 2147483648
    %v1216 = vmul.f32 %v1215, 1.442695
    %v1217 = vpow.pop %v1216
    %v1218 = vadd.f32 %v1217, 1.0
    %v1219 = vrcp.pop %v1218
    %v1220 = vmul.f32 1.0, %v1219
    %v1221 = vld [vmem:[#allocation5] sm:$0xff]
    %v1222 = vmul.f32 %v1213, %v1221
    %v1223 = vmul.f32 %v1207, %v1214
    %v1224 = vadd.f32 %v1222, %v1223
    %v1225 = vtanh.pop %v1224
    %v1226 = vmul.f32 %v1220, %v1225
    %1227 = vst [vmem:[#allocation5] sm:$0xff] %v1224
    %1228 = vst [vmem:[#allocation4] sm:$0xff] %v1226
    %s1229 = scalar_lea.vmem [#allocation2], 24
    %1230 = vst [vmem:[%s1229] sm:$0xff] %v1226
    %v1231 = vld [vmem:[#allocation4] sm:$0xff]
    %v1232 = vpack.c.bf16 %v1231, %v1231
    %s1233 = smul.u32 4, 4
    %s1234 = smul.addr %s1233, 8
    %s1235 = scalar_lea.vmem [#allocation3], %s1234
    %v1236 = vld [vmem:[%s1235] sm:$0xff]
    %v1237 = vld [vmem:[%s1235 + $0x8] sm:$0xff]
    %v1238 = vld [vmem:[%s1235 + $0x10] sm:$0xff]
    %v1239 = vld [vmem:[%s1235 + $0x18] sm:$0xff]
    %1240 = vmatprep.subr.bf16.mxu0 %v698
    %1241 = vmatpush1.bf16.msra.mxu0 %v697
    %1242 = vmatprep.subr.bf16.mxu0 %v702
    %1243 = vmatpush1.bf16.msra.mxu0 %v701
    %1244 = vmatprep.subr.bf16.mxu0 %v706
    %1245 = vmatpush1.bf16.msra.mxu0 %v705
    %1246 = vmatprep.subr.bf16.mxu0 %v710
    %1247 = vmatpush1.bf16.msra.mxu0 %v709
    %1248 = vmatprep.subr.bf16.mxu0 %v714
    %1249 = vmatpush1.bf16.msra.mxu0 %v713
    %1250 = vmatprep.subr.bf16.mxu0 %v718
    %1251 = vmatpush1.bf16.msra.mxu0 %v717
    %1252 = vmatprep.subr.bf16.mxu0 %v722
    %1253 = vmatpush1.bf16.msra.mxu0 %v721
    %1254 = vmatprep.subr.bf16.mxu0 %v726
    %1255 = vmatpush1.bf16.msra.mxu0 %v725
    %1256 = vmatprep.subr.bf16.mxu0 0
    %1257 = vmatpush1.bf16.msra.mxu0 0
    %1258 = vmatprep.subr.bf16.mxu0 0
    %1259 = vmatpush1.bf16.msra.mxu0 0
    %1260 = vmatprep.subr.bf16.mxu0 0
    %1261 = vmatpush1.bf16.msra.mxu0 0
    %1262 = vmatprep.subr.bf16.mxu0 0
    %1263 = vmatpush1.bf16.msra.mxu0 0
    %1264 = vmatprep.subr.bf16.mxu0 0
    %1265 = vmatpush1.bf16.msra.mxu0 0
    %1266 = vmatprep.subr.bf16.mxu0 0
    %1267 = vmatpush1.bf16.msra.mxu0 0
    %1268 = vmatprep.subr.bf16.mxu0 0
    %1269 = vmatpush1.bf16.msra.mxu0 0
    %1270 = vmatprep.subr.bf16.mxu0 0
    %1271 = vmatpush1.bf16.msra.mxu0 0
    %1272 = vmatprep.mubr.bf16.mxu0 0
    %1273 = vmatmul.mubr.bf16.gmra.mrb[0].mxu0 %v1232
    %v1274 = vpop.f32.mrb[0].mxu0
    %v1275 = vadd.f32 %v1236, %v1274
    %v1276 = vpop.f32.mrb[0].mxu0
    %v1277 = vadd.f32 %v1237, %v1276
    %v1278 = vpop.f32.mrb[0].mxu0
    %v1279 = vpop.f32.mrb[0].mxu0
    %1280 = vdwg.mxu0
    %1281 = vmatprep.subr.bf16.mxu0 %v700
    %1282 = vmatpush1.bf16.msra.mxu0 %v699
    %1283 = vmatprep.subr.bf16.mxu0 %v704
    %1284 = vmatpush1.bf16.msra.mxu0 %v703
    %1285 = vmatprep.subr.bf16.mxu0 %v708
    %1286 = vmatpush1.bf16.msra.mxu0 %v707
    %1287 = vmatprep.subr.bf16.mxu0 %v712
    %1288 = vmatpush1.bf16.msra.mxu0 %v711
    %1289 = vmatprep.subr.bf16.mxu0 %v716
    %1290 = vmatpush1.bf16.msra.mxu0 %v715
    %1291 = vmatprep.subr.bf16.mxu0 %v720
    %1292 = vmatpush1.bf16.msra.mxu0 %v719
    %1293 = vmatprep.subr.bf16.mxu0 %v724
    %1294 = vmatpush1.bf16.msra.mxu0 %v723
    %1295 = vmatprep.subr.bf16.mxu0 %v728
    %1296 = vmatpush1.bf16.msra.mxu0 %v727
    %1297 = vmatprep.subr.bf16.mxu0 0
    %1298 = vmatpush1.bf16.msra.mxu0 0
    %1299 = vmatprep.subr.bf16.mxu0 0
    %1300 = vmatpush1.bf16.msra.mxu0 0
    %1301 = vmatprep.subr.bf16.mxu0 0
    %1302 = vmatpush1.bf16.msra.mxu0 0
    %1303 = vmatprep.subr.bf16.mxu0 0
    %1304 = vmatpush1.bf16.msra.mxu0 0
    %1305 = vmatprep.subr.bf16.mxu0 0
    %1306 = vmatpush1.bf16.msra.mxu0 0
    %1307 = vmatprep.subr.bf16.mxu0 0
    %1308 = vmatpush1.bf16.msra.mxu0 0
    %1309 = vmatprep.subr.bf16.mxu0 0
    %1310 = vmatpush1.bf16.msra.mxu0 0
    %1311 = vmatprep.subr.bf16.mxu0 0
    %1312 = vmatpush1.bf16.msra.mxu0 0
    %1313 = vmatprep.mubr.bf16.mxu0 0
    %1314 = vmatmul.mubr.bf16.gmra.mrb[0].mxu0 %v1232
    %v1315 = vpop.f32.mrb[0].mxu0
    %v1316 = vadd.f32 %v1238, %v1315
    %v1317 = vpop.f32.mrb[0].mxu0
    %v1318 = vadd.f32 %v1239, %v1317
    %v1319 = vpop.f32.mrb[0].mxu0
    %v1320 = vpop.f32.mrb[0].mxu0
    %1321 = vdwg.mxu0
    %v1322 = vxor.u32 %v1275, 2147483648
    %v1323 = vmul.f32 %v1322, 1.442695
    %v1324 = vpow.pop %v1323
    %v1325 = vadd.f32 %v1324, 1.0
    %v1326 = vrcp.pop %v1325
    %v1327 = vmul.f32 1.0, %v1326
    %v1328 = vxor.u32 %v1277, 2147483648
    %v1329 = vmul.f32 %v1328, 1.442695
    %v1330 = vpow.pop %v1329
    %v1331 = vadd.f32 %v1330, 1.0
    %v1332 = vrcp.pop %v1331
    %v1333 = vmul.f32 1.0, %v1332
    %v1334 = vtanh.pop %v1316
    %v1335 = vxor.u32 %v1318, 2147483648
    %v1336 = vmul.f32 %v1335, 1.442695
    %v1337 = vpow.pop %v1336
    %v1338 = vadd.f32 %v1337, 1.0
    %v1339 = vrcp.pop %v1338
    %v1340 = vmul.f32 1.0, %v1339
    %v1341 = vld [vmem:[#allocation5] sm:$0xff]
    %v1342 = vmul.f32 %v1333, %v1341
    %v1343 = vmul.f32 %v1327, %v1334
    %v1344 = vadd.f32 %v1342, %v1343
    %v1345 = vtanh.pop %v1344
    %v1346 = vmul.f32 %v1340, %v1345
    %1347 = vst [vmem:[#allocation5] sm:$0xff] %v1344
    %1348 = vst [vmem:[#allocation4] sm:$0xff] %v1346
    %s1349 = scalar_lea.vmem [#allocation2], 32
    %1350 = vst [vmem:[%s1349] sm:$0xff] %v1346
    %v1351 = vld [vmem:[#allocation4] sm:$0xff]
    %v1352 = vpack.c.bf16 %v1351, %v1351
    %s1353 = smul.u32 5, 4
    %s1354 = smul.addr %s1353, 8
    %s1355 = scalar_lea.vmem [#allocation3], %s1354
    %v1356 = vld [vmem:[%s1355] sm:$0xff]
    %v1357 = vld [vmem:[%s1355 + $0x8] sm:$0xff]
    %v1358 = vld [vmem:[%s1355 + $0x10] sm:$0xff]
    %v1359 = vld [vmem:[%s1355 + $0x18] sm:$0xff]
    %1360 = vmatprep.subr.bf16.mxu0 %v698
    %1361 = vmatpush1.bf16.msra.mxu0 %v697
    %1362 = vmatprep.subr.bf16.mxu0 %v702
    %1363 = vmatpush1.bf16.msra.mxu0 %v701
    %1364 = vmatprep.subr.bf16.mxu0 %v706
    %1365 = vmatpush1.bf16.msra.mxu0 %v705
    %1366 = vmatprep.subr.bf16.mxu0 %v710
    %1367 = vmatpush1.bf16.msra.mxu0 %v709
    %1368 = vmatprep.subr.bf16.mxu0 %v714
    %1369 = vmatpush1.bf16.msra.mxu0 %v713
    %1370 = vmatprep.subr.bf16.mxu0 %v718
    %1371 = vmatpush1.bf16.msra.mxu0 %v717
    %1372 = vmatprep.subr.bf16.mxu0 %v722
    %1373 = vmatpush1.bf16.msra.mxu0 %v721
    %1374 = vmatprep.subr.bf16.mxu0 %v726
    %1375 = vmatpush1.bf16.msra.mxu0 %v725
    %1376 = vmatprep.subr.bf16.mxu0 0
    %1377 = vmatpush1.bf16.msra.mxu0 0
    %1378 = vmatprep.subr.bf16.mxu0 0
    %1379 = vmatpush1.bf16.msra.mxu0 0
    %1380 = vmatprep.subr.bf16.mxu0 0
    %1381 = vmatpush1.bf16.msra.mxu0 0
    %1382 = vmatprep.subr.bf16.mxu0 0
    %1383 = vmatpush1.bf16.msra.mxu0 0
    %1384 = vmatprep.subr.bf16.mxu0 0
    %1385 = vmatpush1.bf16.msra.mxu0 0
    %1386 = vmatprep.subr.bf16.mxu0 0
    %1387 = vmatpush1.bf16.msra.mxu0 0
    %1388 = vmatprep.subr.bf16.mxu0 0
    %1389 = vmatpush1.bf16.msra.mxu0 0
    %1390 = vmatprep.subr.bf16.mxu0 0
    %1391 = vmatpush1.bf16.msra.mxu0 0
    %1392 = vmatprep.mubr.bf16.mxu0 0
    %1393 = vmatmul.mubr.bf16.gmra.mrb[0].mxu0 %v1352
    %v1394 = vpop.f32.mrb[0].mxu0
    %v1395 = vadd.f32 %v1356, %v1394
    %v1396 = vpop.f32.mrb[0].mxu0
    %v1397 = vadd.f32 %v1357, %v1396
    %v1398 = vpop.f32.mrb[0].mxu0
    %v1399 = vpop.f32.mrb[0].mxu0
    %1400 = vdwg.mxu0
    %1401 = vmatprep.subr.bf16.mxu0 %v700
    %1402 = vmatpush1.bf16.msra.mxu0 %v699
    %1403 = vmatprep.subr.bf16.mxu0 %v704
    %1404 = vmatpush1.bf16.msra.mxu0 %v703
    %1405 = vmatprep.subr.bf16.mxu0 %v708
    %1406 = vmatpush1.bf16.msra.mxu0 %v707
    %1407 = vmatprep.subr.bf16.mxu0 %v712
    %1408 = vmatpush1.bf16.msra.mxu0 %v711
    %1409 = vmatprep.subr.bf16.mxu0 %v716
    %1410 = vmatpush1.bf16.msra.mxu0 %v715
    %1411 = vmatprep.subr.bf16.mxu0 %v720
    %1412 = vmatpush1.bf16.msra.mxu0 %v719
    %1413 = vmatprep.subr.bf16.mxu0 %v724
    %1414 = vmatpush1.bf16.msra.mxu0 %v723
    %1415 = vmatprep.subr.bf16.mxu0 %v728
    %1416 = vmatpush1.bf16.msra.mxu0 %v727
    %1417 = vmatprep.subr.bf16.mxu0 0
    %1418 = vmatpush1.bf16.msra.mxu0 0
    %1419 = vmatprep.subr.bf16.mxu0 0
    %1420 = vmatpush1.bf16.msra.mxu0 0
    %1421 = vmatprep.subr.bf16.mxu0 0
    %1422 = vmatpush1.bf16.msra.mxu0 0
    %1423 = vmatprep.subr.bf16.mxu0 0
    %1424 = vmatpush1.bf16.msra.mxu0 0
    %1425 = vmatprep.subr.bf16.mxu0 0
    %1426 = vmatpush1.bf16.msra.mxu0 0
    %1427 = vmatprep.subr.bf16.mxu0 0
    %1428 = vmatpush1.bf16.msra.mxu0 0
    %1429 = vmatprep.subr.bf16.mxu0 0
    %1430 = vmatpush1.bf16.msra.mxu0 0
    %1431 = vmatprep.subr.bf16.mxu0 0
    %1432 = vmatpush1.bf16.msra.mxu0 0
    %1433 = vmatprep.mubr.bf16.mxu0 0
    %1434 = vmatmul.mubr.bf16.gmra.mrb[0].mxu0 %v1352
    %v1435 = vpop.f32.mrb[0].mxu0
    %v1436 = vadd.f32 %v1358, %v1435
    %v1437 = vpop.f32.mrb[0].mxu0
    %v1438 = vadd.f32 %v1359, %v1437
    %v1439 = vpop.f32.mrb[0].mxu0
    %v1440 = vpop.f32.mrb[0].mxu0
    %1441 = vdwg.mxu0
    %v1442 = vxor.u32 %v1395, 2147483648
    %v1443 = vmul.f32 %v1442, 1.442695
    %v1444 = vpow.pop %v1443
    %v1445 = vadd.f32 %v1444, 1.0
    %v1446 = vrcp.pop %v1445
    %v1447 = vmul.f32 1.0, %v1446
    %v1448 = vxor.u32 %v1397, 2147483648
    %v1449 = vmul.f32 %v1448, 1.442695
    %v1450 = vpow.pop %v1449
    %v1451 = vadd.f32 %v1450, 1.0
    %v1452 = vrcp.pop %v1451
    %v1453 = vmul.f32 1.0, %v1452
    %v1454 = vtanh.pop %v1436
    %v1455 = vxor.u32 %v1438, 2147483648
    %v1456 = vmul.f32 %v1455, 1.442695
    %v1457 = vpow.pop %v1456
    %v1458 = vadd.f32 %v1457, 1.0
    %v1459 = vrcp.pop %v1458
    %v1460 = vmul.f32 1.0, %v1459
    %v1461 = vld [vmem:[#allocation5] sm:$0xff]
    %v1462 = vmul.f32 %v1453, %v1461
    %v1463 = vmul.f32 %v1447, %v1454
    %v1464 = vadd.f32 %v1462, %v1463
    %v1465 = vtanh.pop %v1464
    %v1466 = vmul.f32 %v1460, %v1465
    %1467 = vst [vmem:[#allocation5] sm:$0xff] %v1464
    %1468 = vst [vmem:[#allocation4] sm:$0xff] %v1466
    %s1469 = scalar_lea.vmem [#allocation2], 40
    %1470 = vst [vmem:[%s1469] sm:$0xff] %v1466
    %v1471 = vld [vmem:[#allocation4] sm:$0xff]
    %v1472 = vpack.c.bf16 %v1471, %v1471
    %s1473 = smul.u32 6, 4
    %s1474 = smul.addr %s1473, 8
    %s1475 = scalar_lea.vmem [#allocation3], %s1474
    %v1476 = vld [vmem:[%s1475] sm:$0xff]
    %v1477 = vld [vmem:[%s1475 + $0x8] sm:$0xff]
    %v1478 = vld [vmem:[%s1475 + $0x10] sm:$0xff]
    %v1479 = vld [vmem:[%s1475 + $0x18] sm:$0xff]
    %1480 = vmatprep.subr.bf16.mxu0 %v698
    %1481 = vmatpush1.bf16.msra.mxu0 %v697
    %1482 = vmatprep.subr.bf16.mxu0 %v702
    %1483 = vmatpush1.bf16.msra.mxu0 %v701
    %1484 = vmatprep.subr.bf16.mxu0 %v706
    %1485 = vmatpush1.bf16.msra.mxu0 %v705
    %1486 = vmatprep.subr.bf16.mxu0 %v710
    %1487 = vmatpush1.bf16.msra.mxu0 %v709
    %1488 = vmatprep.subr.bf16.mxu0 %v714
    %1489 = vmatpush1.bf16.msra.mxu0 %v713
    %1490 = vmatprep.subr.bf16.mxu0 %v718
    %1491 = vmatpush1.bf16.msra.mxu0 %v717
    %1492 = vmatprep.subr.bf16.mxu0 %v722
    %1493 = vmatpush1.bf16.msra.mxu0 %v721
    %1494 = vmatprep.subr.bf16.mxu0 %v726
    %1495 = vmatpush1.bf16.msra.mxu0 %v725
    %1496 = vmatprep.subr.bf16.mxu0 0
    %1497 = vmatpush1.bf16.msra.mxu0 0
    %1498 = vmatprep.subr.bf16.mxu0 0
    %1499 = vmatpush1.bf16.msra.mxu0 0
    %1500 = vmatprep.subr.bf16.mxu0 0
    %1501 = vmatpush1.bf16.msra.mxu0 0
    %1502 = vmatprep.subr.bf16.mxu0 0
    %1503 = vmatpush1.bf16.msra.mxu0 0
    %1504 = vmatprep.subr.bf16.mxu0 0
    %1505 = vmatpush1.bf16.msra.mxu0 0
    %1506 = vmatprep.subr.bf16.mxu0 0
    %1507 = vmatpush1.bf16.msra.mxu0 0
    %1508 = vmatprep.subr.bf16.mxu0 0
    %1509 = vmatpush1.bf16.msra.mxu0 0
    %1510 = vmatprep.subr.bf16.mxu0 0
    %1511 = vmatpush1.bf16.msra.mxu0 0
    %1512 = vmatprep.mubr.bf16.mxu0 0
    %1513 = vmatmul.mubr.bf16.gmra.mrb[0].mxu0 %v1472
    %v1514 = vpop.f32.mrb[0].mxu0
    %v1515 = vadd.f32 %v1476, %v1514
    %v1516 = vpop.f32.mrb[0].mxu0
    %v1517 = vadd.f32 %v1477, %v1516
    %v1518 = vpop.f32.mrb[0].mxu0
    %v1519 = vpop.f32.mrb[0].mxu0
    %1520 = vdwg.mxu0
    %1521 = vmatprep.subr.bf16.mxu0 %v700
    %1522 = vmatpush1.bf16.msra.mxu0 %v699
    %1523 = vmatprep.subr.bf16.mxu0 %v704
    %1524 = vmatpush1.bf16.msra.mxu0 %v703
    %1525 = vmatprep.subr.bf16.mxu0 %v708
    %1526 = vmatpush1.bf16.msra.mxu0 %v707
    %1527 = vmatprep.subr.bf16.mxu0 %v712
    %1528 = vmatpush1.bf16.msra.mxu0 %v711
    %1529 = vmatprep.subr.bf16.mxu0 %v716
    %1530 = vmatpush1.bf16.msra.mxu0 %v715
    %1531 = vmatprep.subr.bf16.mxu0 %v720
    %1532 = vmatpush1.bf16.msra.mxu0 %v719
    %1533 = vmatprep.subr.bf16.mxu0 %v724
    %1534 = vmatpush1.bf16.msra.mxu0 %v723
    %1535 = vmatprep.subr.bf16.mxu0 %v728
    %1536 = vmatpush1.bf16.msra.mxu0 %v727
    %1537 = vmatprep.subr.bf16.mxu0 0
    %1538 = vmatpush1.bf16.msra.mxu0 0
    %1539 = vmatprep.subr.bf16.mxu0 0
    %1540 = vmatpush1.bf16.msra.mxu0 0
    %1541 = vmatprep.subr.bf16.mxu0 0
    %1542 = vmatpush1.bf16.msra.mxu0 0
    %1543 = vmatprep.subr.bf16.mxu0 0
    %1544 = vmatpush1.bf16.msra.mxu0 0
    %1545 = vmatprep.subr.bf16.mxu0 0
    %1546 = vmatpush1.bf16.msra.mxu0 0
    %1547 = vmatprep.subr.bf16.mxu0 0
    %1548 = vmatpush1.bf16.msra.mxu0 0
    %1549 = vmatprep.subr.bf16.mxu0 0
    %1550 = vmatpush1.bf16.msra.mxu0 0
    %1551 = vmatprep.subr.bf16.mxu0 0
    %1552 = vmatpush1.bf16.msra.mxu0 0
    %1553 = vmatprep.mubr.bf16.mxu0 0
    %1554 = vmatmul.mubr.bf16.gmra.mrb[0].mxu0 %v1472
    %v1555 = vpop.f32.mrb[0].mxu0
    %v1556 = vadd.f32 %v1478, %v1555
    %v1557 = vpop.f32.mrb[0].mxu0
    %v1558 = vadd.f32 %v1479, %v1557
    %v1559 = vpop.f32.mrb[0].mxu0
    %v1560 = vpop.f32.mrb[0].mxu0
    %1561 = vdwg.mxu0
    %v1562 = vxor.u32 %v1515, 2147483648
    %v1563 = vmul.f32 %v1562, 1.442695
    %v1564 = vpow.pop %v1563
    %v1565 = vadd.f32 %v1564, 1.0
    %v1566 = vrcp.pop %v1565
    %v1567 = vmul.f32 1.0, %v1566
    %v1568 = vxor.u32 %v1517, 2147483648
    %v1569 = vmul.f32 %v1568, 1.442695
    %v1570 = vpow.pop %v1569
    %v1571 = vadd.f32 %v1570, 1.0
    %v1572 = vrcp.pop %v1571
    %v1573 = vmul.f32 1.0, %v1572
    %v1574 = vtanh.pop %v1556
    %v1575 = vxor.u32 %v1558, 2147483648
    %v1576 = vmul.f32 %v1575, 1.442695
    %v1577 = vpow.pop %v1576
    %v1578 = vadd.f32 %v1577, 1.0
    %v1579 = vrcp.pop %v1578
    %v1580 = vmul.f32 1.0, %v1579
    %v1581 = vld [vmem:[#allocation5] sm:$0xff]
    %v1582 = vmul.f32 %v1573, %v1581
    %v1583 = vmul.f32 %v1567, %v1574
    %v1584 = vadd.f32 %v1582, %v1583
    %v1585 = vtanh.pop %v1584
    %v1586 = vmul.f32 %v1580, %v1585
    %1587 = vst [vmem:[#allocation5] sm:$0xff] %v1584
    %1588 = vst [vmem:[#allocation4] sm:$0xff] %v1586
    %s1589 = scalar_lea.vmem [#allocation2], 48
    %1590 = vst [vmem:[%s1589] sm:$0xff] %v1586
    %v1591 = vld [vmem:[#allocation4] sm:$0xff]
    %v1592 = vpack.c.bf16 %v1591, %v1591
    %s1593 = smul.u32 7, 4
    %s1594 = smul.addr %s1593, 8
    %s1595 = scalar_lea.vmem [#allocation3], %s1594
    %v1596 = vld [vmem:[%s1595] sm:$0xff]
    %v1597 = vld [vmem:[%s1595 + $0x8] sm:$0xff]
    %v1598 = vld [vmem:[%s1595 + $0x10] sm:$0xff]
    %v1599 = vld [vmem:[%s1595 + $0x18] sm:$0xff]
    %1600 = vmatprep.subr.bf16.mxu0 %v698
    %1601 = vmatpush1.bf16.msra.mxu0 %v697
    %1602 = vmatprep.subr.bf16.mxu0 %v702
    %1603 = vmatpush1.bf16.msra.mxu0 %v701
    %1604 = vmatprep.subr.bf16.mxu0 %v706
    %1605 = vmatpush1.bf16.msra.mxu0 %v705
    %1606 = vmatprep.subr.bf16.mxu0 %v710
    %1607 = vmatpush1.bf16.msra.mxu0 %v709
    %1608 = vmatprep.subr.bf16.mxu0 %v714
    %1609 = vmatpush1.bf16.msra.mxu0 %v713
    %1610 = vmatprep.subr.bf16.mxu0 %v718
    %1611 = vmatpush1.bf16.msra.mxu0 %v717
    %1612 = vmatprep.subr.bf16.mxu0 %v722
    %1613 = vmatpush1.bf16.msra.mxu0 %v721
    %1614 = vmatprep.subr.bf16.mxu0 %v726
    %1615 = vmatpush1.bf16.msra.mxu0 %v725
    %1616 = vmatprep.subr.bf16.mxu0 0
    %1617 = vmatpush1.bf16.msra.mxu0 0
    %1618 = vmatprep.subr.bf16.mxu0 0
    %1619 = vmatpush1.bf16.msra.mxu0 0
    %1620 = vmatprep.subr.bf16.mxu0 0
    %1621 = vmatpush1.bf16.msra.mxu0 0
    %1622 = vmatprep.subr.bf16.mxu0 0
    %1623 = vmatpush1.bf16.msra.mxu0 0
    %1624 = vmatprep.subr.bf16.mxu0 0
    %1625 = vmatpush1.bf16.msra.mxu0 0
    %1626 = vmatprep.subr.bf16.mxu0 0
    %1627 = vmatpush1.bf16.msra.mxu0 0
    %1628 = vmatprep.subr.bf16.mxu0 0
    %1629 = vmatpush1.bf16.msra.mxu0 0
    %1630 = vmatprep.subr.bf16.mxu0 0
    %1631 = vmatpush1.bf16.msra.mxu0 0
    %1632 = vmatprep.mubr.bf16.mxu0 0
    %1633 = vmatmul.mubr.bf16.gmra.mrb[0].mxu0 %v1592
    %v1634 = vpop.f32.mrb[0].mxu0
    %v1635 = vadd.f32 %v1596, %v1634
    %v1636 = vpop.f32.mrb[0].mxu0
    %v1637 = vadd.f32 %v1597, %v1636
    %v1638 = vpop.f32.mrb[0].mxu0
    %v1639 = vpop.f32.mrb[0].mxu0
    %1640 = vdwg.mxu0
    %1641 = vmatprep.subr.bf16.mxu0 %v700
    %1642 = vmatpush1.bf16.msra.mxu0 %v699
    %1643 = vmatprep.subr.bf16.mxu0 %v704
    %1644 = vmatpush1.bf16.msra.mxu0 %v703
    %1645 = vmatprep.subr.bf16.mxu0 %v708
    %1646 = vmatpush1.bf16.msra.mxu0 %v707
    %1647 = vmatprep.subr.bf16.mxu0 %v712
    %1648 = vmatpush1.bf16.msra.mxu0 %v711
    %1649 = vmatprep.subr.bf16.mxu0 %v716
    %1650 = vmatpush1.bf16.msra.mxu0 %v715
    %1651 = vmatprep.subr.bf16.mxu0 %v720
    %1652 = vmatpush1.bf16.msra.mxu0 %v719
    %1653 = vmatprep.subr.bf16.mxu0 %v724
    %1654 = vmatpush1.bf16.msra.mxu0 %v723
    %1655 = vmatprep.subr.bf16.mxu0 %v728
    %1656 = vmatpush1.bf16.msra.mxu0 %v727
    %1657 = vmatprep.subr.bf16.mxu0 0
    %1658 = vmatpush1.bf16.msra.mxu0 0
    %1659 = vmatprep.subr.bf16.mxu0 0
    %1660 = vmatpush1.bf16.msra.mxu0 0
    %1661 = vmatprep.subr.bf16.mxu0 0
    %1662 = vmatpush1.bf16.msra.mxu0 0
    %1663 = vmatprep.subr.bf16.mxu0 0
    %1664 = vmatpush1.bf16.msra.mxu0 0
    %1665 = vmatprep.subr.bf16.mxu0 0
    %1666 = vmatpush1.bf16.msra.mxu0 0
    %1667 = vmatprep.subr.bf16.mxu0 0
    %1668 = vmatpush1.bf16.msra.mxu0 0
    %1669 = vmatprep.subr.bf16.mxu0 0
    %1670 = vmatpush1.bf16.msra.mxu0 0
    %1671 = vmatprep.subr.bf16.mxu0 0
    %1672 = vmatpush1.bf16.msra.mxu0 0
    %1673 = vmatprep.mubr.bf16.mxu0 0
    %1674 = vmatmul.mubr.bf16.gmra.mrb[0].mxu0 %v1592
    %v1675 = vpop.f32.mrb[0].mxu0
    %v1676 = vadd.f32 %v1598, %v1675
    %v1677 = vpop.f32.mrb[0].mxu0
    %v1678 = vadd.f32 %v1599, %v1677
    %v1679 = vpop.f32.mrb[0].mxu0
    %v1680 = vpop.f32.mrb[0].mxu0
    %1681 = vdwg.mxu0
    %v1682 = vxor.u32 %v1635, 2147483648
    %v1683 = vmul.f32 %v1682, 1.442695
    %v1684 = vpow.pop %v1683
    %v1685 = vadd.f32 %v1684, 1.0
    %v1686 = vrcp.pop %v1685
    %v1687 = vmul.f32 1.0, %v1686
    %v1688 = vxor.u32 %v1637, 2147483648
    %v1689 = vmul.f32 %v1688, 1.442695
    %v1690 = vpow.pop %v1689
    %v1691 = vadd.f32 %v1690, 1.0
    %v1692 = vrcp.pop %v1691
    %v1693 = vmul.f32 1.0, %v1692
    %v1694 = vtanh.pop %v1676
    %v1695 = vxor.u32 %v1678, 2147483648
    %v1696 = vmul.f32 %v1695, 1.442695
    %v1697 = vpow.pop %v1696
    %v1698 = vadd.f32 %v1697, 1.0
    %v1699 = vrcp.pop %v1698
    %v1700 = vmul.f32 1.0, %v1699
    %v1701 = vld [vmem:[#allocation5] sm:$0xff]
    %v1702 = vmul.f32 %v1693, %v1701
    %v1703 = vmul.f32 %v1687, %v1694
    %v1704 = vadd.f32 %v1702, %v1703
    %v1705 = vtanh.pop %v1704
    %v1706 = vmul.f32 %v1700, %v1705
    %1707 = vst [vmem:[#allocation5] sm:$0xff] %v1704
    %1708 = vst [vmem:[#allocation4] sm:$0xff] %v1706
    %s1709 = scalar_lea.vmem [#allocation2], 56
    %1710 = vst [vmem:[%s1709] sm:$0xff] %v1706
    %v1711 = vld [vmem:[#allocation2] sm:$0xff]
    %v1712 = vld [vmem:[#allocation2 + $0x8] sm:$0xff]
    %v1713 = vld [vmem:[#allocation2 + $0x10] sm:$0xff]
    %v1714 = vld [vmem:[#allocation2 + $0x18] sm:$0xff]
    %v1715 = vld [vmem:[#allocation2 + $0x20] sm:$0xff]
    %v1716 = vld [vmem:[#allocation2 + $0x28] sm:$0xff]
    %v1717 = vld [vmem:[#allocation2 + $0x30] sm:$0xff]
    %v1718 = vld [vmem:[#allocation2 + $0x38] sm:$0xff]
    %v1719 = vpack.c.bf16 %v1712, %v1711
    %v1720 = vpack.c.bf16 %v1714, %v1713
    %v1721 = vpack.c.bf16 %v1716, %v1715
    %v1722 = vpack.c.bf16 %v1718, %v1717
    %s1723 = scalar_lea.vmem [#allocation9], 256
    %v1724 = vld [vmem:[%s1723] sm:$0xff]
    %v1725 = vld [vmem:[%s1723 + $0x8] sm:$0xff]
    %v1726 = vld [vmem:[%s1723 + $0x10] sm:$0xff]
    %v1727 = vld [vmem:[%s1723 + $0x18] sm:$0xff]
    %v1728 = vld [vmem:[%s1723 + $0x20] sm:$0xff]
    %v1729 = vld [vmem:[%s1723 + $0x28] sm:$0xff]
    %v1730 = vld [vmem:[%s1723 + $0x30] sm:$0xff]
    %v1731 = vld [vmem:[%s1723 + $0x38] sm:$0xff]
    %v1732 = vld [vmem:[%s1723 + $0x40] sm:$0xff]
    %v1733 = vld [vmem:[%s1723 + $0x48] sm:$0xff]
    %v1734 = vld [vmem:[%s1723 + $0x50] sm:$0xff]
    %v1735 = vld [vmem:[%s1723 + $0x58] sm:$0xff]
    %v1736 = vld [vmem:[%s1723 + $0x60] sm:$0xff]
    %v1737 = vld [vmem:[%s1723 + $0x68] sm:$0xff]
    %v1738 = vld [vmem:[%s1723 + $0x70] sm:$0xff]
    %v1739 = vld [vmem:[%s1723 + $0x78] sm:$0xff]
    %v1740 = vld [vmem:[%s1723 + $0x80] sm:$0xff]
    %v1741 = vld [vmem:[%s1723 + $0x88] sm:$0xff]
    %v1742 = vld [vmem:[%s1723 + $0x90] sm:$0xff]
    %v1743 = vld [vmem:[%s1723 + $0x98] sm:$0xff]
    %v1744 = vld [vmem:[%s1723 + $0xa0] sm:$0xff]
    %v1745 = vld [vmem:[%s1723 + $0xa8] sm:$0xff]
    %v1746 = vld [vmem:[%s1723 + $0xb0] sm:$0xff]
    %v1747 = vld [vmem:[%s1723 + $0xb8] sm:$0xff]
    %v1748 = vld [vmem:[%s1723 + $0xc0] sm:$0xff]
    %v1749 = vld [vmem:[%s1723 + $0xc8] sm:$0xff]
    %v1750 = vld [vmem:[%s1723 + $0xd0] sm:$0xff]
    %v1751 = vld [vmem:[%s1723 + $0xd8] sm:$0xff]
    %v1752 = vld [vmem:[%s1723 + $0xe0] sm:$0xff]
    %v1753 = vld [vmem:[%s1723 + $0xe8] sm:$0xff]
    %v1754 = vld [vmem:[%s1723 + $0xf0] sm:$0xff]
    %v1755 = vld [vmem:[%s1723 + $0xf8] sm:$0xff]
    %s1756 = scalar_lea.vmem [#allocation12], 4
    %v1757 = vld [vmem:[%s1756] sm:$0xf]
    %v1759 = vlaneseq
    %v1760 = vshrl.u32 %v1759, 7
    %v1761 = vsub.s32 0, %v1760
    %v1762 = vrot.slane %v1757, %v1761
    %v1763 = vlaneseq
    %v1764 = vshrl.u32 %v1763, 7
    %v1765 = vsub.s32 1, %v1764
    %v1766 = vrot.slane %v1757, %v1765
    %v1767 = vlaneseq
    %v1768 = vshrl.u32 %v1767, 7
    %v1769 = vsub.s32 2, %v1768
    %v1770 = vrot.slane %v1757, %v1769
    %v1771 = vlaneseq
    %v1772 = vshrl.u32 %v1771, 7
    %v1773 = vsub.s32 3, %v1772
    %v1774 = vrot.slane %v1757, %v1773
    %v1811 = vunpack.c.l.b16 %v1724
    %v1812 = vunpack.c.h.b16 %v1724
    %v1813 = vunpack.c.l.b16 %v1725
    %v1814 = vunpack.c.h.b16 %v1725
    %v1815 = vunpack.c.l.b16 %v1726
    %v1816 = vunpack.c.h.b16 %v1726
    %v1817 = vunpack.c.l.b16 %v1727
    %v1818 = vunpack.c.h.b16 %v1727
    %v1819 = vunpack.c.l.b16 %v1728
    %v1820 = vunpack.c.h.b16 %v1728
    %v1821 = vunpack.c.l.b16 %v1729
    %v1822 = vunpack.c.h.b16 %v1729
    %v1823 = vunpack.c.l.b16 %v1730
    %v1824 = vunpack.c.h.b16 %v1730
    %v1825 = vunpack.c.l.b16 %v1731
    %v1826 = vunpack.c.h.b16 %v1731
    %v1827 = vunpack.c.l.b16 %v1732
    %v1828 = vunpack.c.h.b16 %v1732
    %v1829 = vunpack.c.l.b16 %v1733
    %v1830 = vunpack.c.h.b16 %v1733
    %v1831 = vunpack.c.l.b16 %v1734
    %v1832 = vunpack.c.h.b16 %v1734
    %v1833 = vunpack.c.l.b16 %v1735
    %v1834 = vunpack.c.h.b16 %v1735
    %v1835 = vunpack.c.l.b16 %v1736
    %v1836 = vunpack.c.h.b16 %v1736
    %v1837 = vunpack.c.l.b16 %v1737
    %v1838 = vunpack.c.h.b16 %v1737
    %v1839 = vunpack.c.l.b16 %v1738
    %v1840 = vunpack.c.h.b16 %v1738
    %v1841 = vunpack.c.l.b16 %v1739
    %v1842 = vunpack.c.h.b16 %v1739
    %v1843 = vunpack.c.l.b16 %v1740
    %v1844 = vunpack.c.h.b16 %v1740
    %v1845 = vunpack.c.l.b16 %v1741
    %v1846 = vunpack.c.h.b16 %v1741
    %v1847 = vunpack.c.l.b16 %v1742
    %v1848 = vunpack.c.h.b16 %v1742
    %v1849 = vunpack.c.l.b16 %v1743
    %v1850 = vunpack.c.h.b16 %v1743
    %v1851 = vunpack.c.l.b16 %v1744
    %v1852 = vunpack.c.h.b16 %v1744
    %v1853 = vunpack.c.l.b16 %v1745
    %v1854 = vunpack.c.h.b16 %v1745
    %v1855 = vunpack.c.l.b16 %v1746
    %v1856 = vunpack.c.h.b16 %v1746
    %v1857 = vunpack.c.l.b16 %v1747
    %v1858 = vunpack.c.h.b16 %v1747
    %v1859 = vunpack.c.l.b16 %v1748
    %v1860 = vunpack.c.h.b16 %v1748
    %v1861 = vunpack.c.l.b16 %v1749
    %v1862 = vunpack.c.h.b16 %v1749
    %v1863 = vunpack.c.l.b16 %v1750
    %v1864 = vunpack.c.h.b16 %v1750
    %v1865 = vunpack.c.l.b16 %v1751
    %v1866 = vunpack.c.h.b16 %v1751
    %v1867 = vunpack.c.l.b16 %v1752
    %v1868 = vunpack.c.h.b16 %v1752
    %v1869 = vunpack.c.l.b16 %v1753
    %v1870 = vunpack.c.h.b16 %v1753
    %v1871 = vunpack.c.l.b16 %v1754
    %v1872 = vunpack.c.h.b16 %v1754
    %v1873 = vunpack.c.l.b16 %v1755
    %v1874 = vunpack.c.h.b16 %v1755
    %v1875 = vpack.c.b16 %v1815, %v1811
    %v1876 = vpack.c.b16 %v1816, %v1812
    %v1877 = vpack.c.b16 %v1817, %v1813
    %v1878 = vpack.c.b16 %v1818, %v1814
    %v1879 = vpack.c.b16 %v1823, %v1819
    %v1880 = vpack.c.b16 %v1824, %v1820
    %v1881 = vpack.c.b16 %v1825, %v1821
    %v1882 = vpack.c.b16 %v1826, %v1822
    %v1883 = vpack.c.b16 %v1831, %v1827
    %v1884 = vpack.c.b16 %v1832, %v1828
    %v1885 = vpack.c.b16 %v1833, %v1829
    %v1886 = vpack.c.b16 %v1834, %v1830
    %v1887 = vpack.c.b16 %v1839, %v1835
    %v1888 = vpack.c.b16 %v1840, %v1836
    %v1889 = vpack.c.b16 %v1841, %v1837
    %v1890 = vpack.c.b16 %v1842, %v1838
    %v1891 = vpack.c.b16 %v1847, %v1843
    %v1892 = vpack.c.b16 %v1848, %v1844
    %v1893 = vpack.c.b16 %v1849, %v1845
    %v1894 = vpack.c.b16 %v1850, %v1846
    %v1895 = vpack.c.b16 %v1855, %v1851
    %v1896 = vpack.c.b16 %v1856, %v1852
    %v1897 = vpack.c.b16 %v1857, %v1853
    %v1898 = vpack.c.b16 %v1858, %v1854
    %v1899 = vpack.c.b16 %v1863, %v1859
    %v1900 = vpack.c.b16 %v1864, %v1860
    %v1901 = vpack.c.b16 %v1865, %v1861
    %v1902 = vpack.c.b16 %v1866, %v1862
    %v1903 = vpack.c.b16 %v1871, %v1867
    %v1904 = vpack.c.b16 %v1872, %v1868
    %v1905 = vpack.c.b16 %v1873, %v1869
    %v1906 = vpack.c.b16 %v1874, %v1870
    %1939 = vmatprep.subr.bf16.mxu0 %v1876
    %1940 = vmatpush1.bf16.msra.mxu0 %v1875
    %1941 = vmatprep.subr.bf16.mxu0 %v1880
    %1942 = vmatpush1.bf16.msra.mxu0 %v1879
    %1943 = vmatprep.subr.bf16.mxu0 %v1884
    %1944 = vmatpush1.bf16.msra.mxu0 %v1883
    %1945 = vmatprep.subr.bf16.mxu0 %v1888
    %1946 = vmatpush1.bf16.msra.mxu0 %v1887
    %1947 = vmatprep.subr.bf16.mxu0 %v1892
    %1948 = vmatpush1.bf16.msra.mxu0 %v1891
    %1949 = vmatprep.subr.bf16.mxu0 %v1896
    %1950 = vmatpush1.bf16.msra.mxu0 %v1895
    %1951 = vmatprep.subr.bf16.mxu0 %v1900
    %1952 = vmatpush1.bf16.msra.mxu0 %v1899
    %1953 = vmatprep.subr.bf16.mxu0 %v1904
    %1954 = vmatpush1.bf16.msra.mxu0 %v1903
    %1955 = vmatprep.subr.bf16.mxu0 0
    %1956 = vmatpush1.bf16.msra.mxu0 0
    %1957 = vmatprep.subr.bf16.mxu0 0
    %1958 = vmatpush1.bf16.msra.mxu0 0
    %1959 = vmatprep.subr.bf16.mxu0 0
    %1960 = vmatpush1.bf16.msra.mxu0 0
    %1961 = vmatprep.subr.bf16.mxu0 0
    %1962 = vmatpush1.bf16.msra.mxu0 0
    %1963 = vmatprep.subr.bf16.mxu0 0
    %1964 = vmatpush1.bf16.msra.mxu0 0
    %1965 = vmatprep.subr.bf16.mxu0 0
    %1966 = vmatpush1.bf16.msra.mxu0 0
    %1967 = vmatprep.subr.bf16.mxu0 0
    %1968 = vmatpush1.bf16.msra.mxu0 0
    %1969 = vmatprep.subr.bf16.mxu0 0
    %1970 = vmatpush1.bf16.msra.mxu0 0
    %1971 = vmatprep.mubr.bf16.mxu0 0
    %1972 = vmatmul.mubr.bf16.gmra.mrb[0].mxu0 %v1719
    %v1973 = vpop.f32.mrb[0].mxu0
    %v1974 = vadd.f32 %v1762, %v1973
    %v1975 = vpop.f32.mrb[0].mxu0
    %v1976 = vadd.f32 %v1766, %v1975
    %v1977 = vpop.f32.mrb[0].mxu0
    %v1978 = vadd.f32 %v1762, %v1977
    %v1979 = vpop.f32.mrb[0].mxu0
    %v1980 = vadd.f32 %v1766, %v1979
    %1981 = vmatprep.mubr.bf16.mxu0 0
    %1982 = vmatmul.mubr.bf16.gmra.mrb[0].mxu0 %v1720
    %v1983 = vpop.f32.mrb[0].mxu0
    %v1984 = vadd.f32 %v1762, %v1983
    %v1985 = vpop.f32.mrb[0].mxu0
    %v1986 = vadd.f32 %v1766, %v1985
    %v1987 = vpop.f32.mrb[0].mxu0
    %v1988 = vadd.f32 %v1762, %v1987
    %v1989 = vpop.f32.mrb[0].mxu0
    %v1990 = vadd.f32 %v1766, %v1989
    %1991 = vmatprep.mubr.bf16.mxu0 0
    %1992 = vmatmul.mubr.bf16.gmra.mrb[0].mxu0 %v1721
    %v1993 = vpop.f32.mrb[0].mxu0
    %v1994 = vadd.f32 %v1762, %v1993
    %v1995 = vpop.f32.mrb[0].mxu0
    %v1996 = vadd.f32 %v1766, %v1995
    %v1997 = vpop.f32.mrb[0].mxu0
    %v1998 = vadd.f32 %v1762, %v1997
    %v1999 = vpop.f32.mrb[0].mxu0
    %v2000 = vadd.f32 %v1766, %v1999
    %2001 = vmatprep.mubr.bf16.mxu0 0
    %2002 = vmatmul.mubr.bf16.gmra.mrb[0].mxu0 %v1722
    %v2003 = vpop.f32.mrb[0].mxu0
    %v2004 = vadd.f32 %v1762, %v2003
    %v2005 = vpop.f32.mrb[0].mxu0
    %v2006 = vadd.f32 %v1766, %v2005
    %v2007 = vpop.f32.mrb[0].mxu0
    %v2008 = vadd.f32 %v1762, %v2007
    %v2009 = vpop.f32.mrb[0].mxu0
    %v2010 = vadd.f32 %v1766, %v2009
    %2011 = vdwg.mxu0
    %2012 = vmatprep.subr.bf16.mxu0 %v1878
    %2013 = vmatpush1.bf16.msra.mxu0 %v1877
    %2014 = vmatprep.subr.bf16.mxu0 %v1882
    %2015 = vmatpush1.bf16.msra.mxu0 %v1881
    %2016 = vmatprep.subr.bf16.mxu0 %v1886
    %2017 = vmatpush1.bf16.msra.mxu0 %v1885
    %2018 = vmatprep.subr.bf16.mxu0 %v1890
    %2019 = vmatpush1.bf16.msra.mxu0 %v1889
    %2020 = vmatprep.subr.bf16.mxu0 %v1894
    %2021 = vmatpush1.bf16.msra.mxu0 %v1893
    %2022 = vmatprep.subr.bf16.mxu0 %v1898
    %2023 = vmatpush1.bf16.msra.mxu0 %v1897
    %2024 = vmatprep.subr.bf16.mxu0 %v1902
    %2025 = vmatpush1.bf16.msra.mxu0 %v1901
    %2026 = vmatprep.subr.bf16.mxu0 %v1906
    %2027 = vmatpush1.bf16.msra.mxu0 %v1905
    %2028 = vmatprep.subr.bf16.mxu0 0
    %2029 = vmatpush1.bf16.msra.mxu0 0
    %2030 = vmatprep.subr.bf16.mxu0 0
    %2031 = vmatpush1.bf16.msra.mxu0 0
    %2032 = vmatprep.subr.bf16.mxu0 0
    %2033 = vmatpush1.bf16.msra.mxu0 0
    %2034 = vmatprep.subr.bf16.mxu0 0
    %2035 = vmatpush1.bf16.msra.mxu0 0
    %2036 = vmatprep.subr.bf16.mxu0 0
    %2037 = vmatpush1.bf16.msra.mxu0 0
    %2038 = vmatprep.subr.bf16.mxu0 0
    %2039 = vmatpush1.bf16.msra.mxu0 0
    %2040 = vmatprep.subr.bf16.mxu0 0
    %2041 = vmatpush1.bf16.msra.mxu0 0
    %2042 = vmatprep.subr.bf16.mxu0 0
    %2043 = vmatpush1.bf16.msra.mxu0 0
    %2044 = vmatprep.mubr.bf16.mxu0 0
    %2045 = vmatmul.mubr.bf16.gmra.mrb[0].mxu0 %v1719
    %v2046 = vpop.f32.mrb[0].mxu0
    %v2047 = vadd.f32 %v1770, %v2046
    %v2048 = vpop.f32.mrb[0].mxu0
    %v2049 = vadd.f32 %v1774, %v2048
    %v2050 = vpop.f32.mrb[0].mxu0
    %v2051 = vadd.f32 %v1770, %v2050
    %v2052 = vpop.f32.mrb[0].mxu0
    %v2053 = vadd.f32 %v1774, %v2052
    %2054 = vmatprep.mubr.bf16.mxu0 0
    %2055 = vmatmul.mubr.bf16.gmra.mrb[0].mxu0 %v1720
    %v2056 = vpop.f32.mrb[0].mxu0
    %v2057 = vadd.f32 %v1770, %v2056
    %v2058 = vpop.f32.mrb[0].mxu0
    %v2059 = vadd.f32 %v1774, %v2058
    %v2060 = vpop.f32.mrb[0].mxu0
    %v2061 = vadd.f32 %v1770, %v2060
    %v2062 = vpop.f32.mrb[0].mxu0
    %v2063 = vadd.f32 %v1774, %v2062
    %2064 = vmatprep.mubr.bf16.mxu0 0
    %2065 = vmatmul.mubr.bf16.gmra.mrb[0].mxu0 %v1721
    %v2066 = vpop.f32.mrb[0].mxu0
    %v2067 = vadd.f32 %v1770, %v2066
    %v2068 = vpop.f32.mrb[0].mxu0
    %v2069 = vadd.f32 %v1774, %v2068
    %v2070 = vpop.f32.mrb[0].mxu0
    %v2071 = vadd.f32 %v1770, %v2070
    %v2072 = vpop.f32.mrb[0].mxu0
    %v2073 = vadd.f32 %v1774, %v2072
    %2074 = vmatprep.mubr.bf16.mxu0 0
    %2075 = vmatmul.mubr.bf16.gmra.mrb[0].mxu0 %v1722
    %v2076 = vpop.f32.mrb[0].mxu0
    %v2077 = vadd.f32 %v1770, %v2076
    %v2078 = vpop.f32.mrb[0].mxu0
    %v2079 = vadd.f32 %v1774, %v2078
    %v2080 = vpop.f32.mrb[0].mxu0
    %v2081 = vadd.f32 %v1770, %v2080
    %v2082 = vpop.f32.mrb[0].mxu0
    %v2083 = vadd.f32 %v1774, %v2082
    %2084 = vdwg.mxu0
    %2085 = vst [vmem:[#allocation3] sm:$0xff] %v1974
    %2086 = vst [vmem:[#allocation3 + $0x8] sm:$0xff] %v1976
    %2087 = vst [vmem:[#allocation3 + $0x10] sm:$0xff] %v2047
    %2088 = vst [vmem:[#allocation3 + $0x18] sm:$0xff] %v2049
    %2089 = vst [vmem:[#allocation3 + $0x20] sm:$0xff] %v1978
    %2090 = vst [vmem:[#allocation3 + $0x28] sm:$0xff] %v1980
    %2091 = vst [vmem:[#allocation3 + $0x30] sm:$0xff] %v2051
    %2092 = vst [vmem:[#allocation3 + $0x38] sm:$0xff] %v2053
    %2093 = vst [vmem:[#allocation3 + $0x40] sm:$0xff] %v1984
    %2094 = vst [vmem:[#allocation3 + $0x48] sm:$0xff] %v1986
    %2095 = vst [vmem:[#allocation3 + $0x50] sm:$0xff] %v2057
    %2096 = vst [vmem:[#allocation3 + $0x58] sm:$0xff] %v2059
    %2097 = vst [vmem:[#allocation3 + $0x60] sm:$0xff] %v1988
    %2098 = vst [vmem:[#allocation3 + $0x68] sm:$0xff] %v1990
    %2099 = vst [vmem:[#allocation3 + $0x70] sm:$0xff] %v2061
    %2100 = vst [vmem:[#allocation3 + $0x78] sm:$0xff] %v2063
    %2101 = vst [vmem:[#allocation3 + $0x80] sm:$0xff] %v1994
    %2102 = vst [vmem:[#allocation3 + $0x88] sm:$0xff] %v1996
    %2103 = vst [vmem:[#allocation3 + $0x90] sm:$0xff] %v2067
    %2104 = vst [vmem:[#allocation3 + $0x98] sm:$0xff] %v2069
    %2105 = vst [vmem:[#allocation3 + $0xa0] sm:$0xff] %v1998
    %2106 = vst [vmem:[#allocation3 + $0xa8] sm:$0xff] %v2000
    %2107 = vst [vmem:[#allocation3 + $0xb0] sm:$0xff] %v2071
    %2108 = vst [vmem:[#allocation3 + $0xb8] sm:$0xff] %v2073
    %2109 = vst [vmem:[#allocation3 + $0xc0] sm:$0xff] %v2004
    %2110 = vst [vmem:[#allocation3 + $0xc8] sm:$0xff] %v2006
    %2111 = vst [vmem:[#allocation3 + $0xd0] sm:$0xff] %v2077
    %2112 = vst [vmem:[#allocation3 + $0xd8] sm:$0xff] %v2079
    %2113 = vst [vmem:[#allocation3 + $0xe0] sm:$0xff] %v2008
    %2114 = vst [vmem:[#allocation3 + $0xe8] sm:$0xff] %v2010
    %2115 = vst [vmem:[#allocation3 + $0xf0] sm:$0xff] %v2081
    %2116 = vst [vmem:[#allocation3 + $0xf8] sm:$0xff] %v2083
    %s2117 = scalar_lea.vmem [#allocation11], 256
    %v2118 = vld [vmem:[%s2117] sm:$0xff]
    %v2119 = vld [vmem:[%s2117 + $0x8] sm:$0xff]
    %v2120 = vld [vmem:[%s2117 + $0x10] sm:$0xff]
    %v2121 = vld [vmem:[%s2117 + $0x18] sm:$0xff]
    %v2122 = vld [vmem:[%s2117 + $0x20] sm:$0xff]
    %v2123 = vld [vmem:[%s2117 + $0x28] sm:$0xff]
    %v2124 = vld [vmem:[%s2117 + $0x30] sm:$0xff]
    %v2125 = vld [vmem:[%s2117 + $0x38] sm:$0xff]
    %v2126 = vld [vmem:[%s2117 + $0x40] sm:$0xff]
    %v2127 = vld [vmem:[%s2117 + $0x48] sm:$0xff]
    %v2128 = vld [vmem:[%s2117 + $0x50] sm:$0xff]
    %v2129 = vld [vmem:[%s2117 + $0x58] sm:$0xff]
    %v2130 = vld [vmem:[%s2117 + $0x60] sm:$0xff]
    %v2131 = vld [vmem:[%s2117 + $0x68] sm:$0xff]
    %v2132 = vld [vmem:[%s2117 + $0x70] sm:$0xff]
    %v2133 = vld [vmem:[%s2117 + $0x78] sm:$0xff]
    %v2134 = vld [vmem:[%s2117 + $0x80] sm:$0xff]
    %v2135 = vld [vmem:[%s2117 + $0x88] sm:$0xff]
    %v2136 = vld [vmem:[%s2117 + $0x90] sm:$0xff]
    %v2137 = vld [vmem:[%s2117 + $0x98] sm:$0xff]
    %v2138 = vld [vmem:[%s2117 + $0xa0] sm:$0xff]
    %v2139 = vld [vmem:[%s2117 + $0xa8] sm:$0xff]
    %v2140 = vld [vmem:[%s2117 + $0xb0] sm:$0xff]
    %v2141 = vld [vmem:[%s2117 + $0xb8] sm:$0xff]
    %v2142 = vld [vmem:[%s2117 + $0xc0] sm:$0xff]
    %v2143 = vld [vmem:[%s2117 + $0xc8] sm:$0xff]
    %v2144 = vld [vmem:[%s2117 + $0xd0] sm:$0xff]
    %v2145 = vld [vmem:[%s2117 + $0xd8] sm:$0xff]
    %v2146 = vld [vmem:[%s2117 + $0xe0] sm:$0xff]
    %v2147 = vld [vmem:[%s2117 + $0xe8] sm:$0xff]
    %v2148 = vld [vmem:[%s2117 + $0xf0] sm:$0xff]
    %v2149 = vld [vmem:[%s2117 + $0xf8] sm:$0xff]
    %s2150 = scalar_lea.vmem [#allocation14], 8
    %v2151 = vld [vmem:[%s2150] sm:$0xff]
    %2152 = vst [vmem:[#allocation4] sm:$0xff] %v2151
    %s2153 = scalar_lea.vmem %s5, 8
    %v2154 = vld [vmem:[%s2153] sm:$0xff]
    %2155 = vst [vmem:[#allocation5] sm:$0xff] %v2154
    %v2156 = vld [vmem:[#allocation4] sm:$0xff]
    %v2157 = vpack.c.bf16 %v2156, %v2156
    %v2158 = vld [vmem:[%s596] sm:$0xff]
    %v2159 = vld [vmem:[%s596 + $0x8] sm:$0xff]
    %v2160 = vld [vmem:[%s596 + $0x10] sm:$0xff]
    %v2161 = vld [vmem:[%s596 + $0x18] sm:$0xff]
    %v2194 = vunpack.c.l.b16 %v2118
    %v2195 = vunpack.c.h.b16 %v2118
    %v2196 = vunpack.c.l.b16 %v2119
    %v2197 = vunpack.c.h.b16 %v2119
    %v2198 = vunpack.c.l.b16 %v2120
    %v2199 = vunpack.c.h.b16 %v2120
    %v2200 = vunpack.c.l.b16 %v2121
    %v2201 = vunpack.c.h.b16 %v2121
    %v2202 = vunpack.c.l.b16 %v2122
    %v2203 = vunpack.c.h.b16 %v2122
    %v2204 = vunpack.c.l.b16 %v2123
    %v2205 = vunpack.c.h.b16 %v2123
    %v2206 = vunpack.c.l.b16 %v2124
    %v2207 = vunpack.c.h.b16 %v2124
    %v2208 = vunpack.c.l.b16 %v2125
    %v2209 = vunpack.c.h.b16 %v2125
    %v2210 = vunpack.c.l.b16 %v2126
    %v2211 = vunpack.c.h.b16 %v2126
    %v2212 = vunpack.c.l.b16 %v2127
    %v2213 = vunpack.c.h.b16 %v2127
    %v2214 = vunpack.c.l.b16 %v2128
    %v2215 = vunpack.c.h.b16 %v2128
    %v2216 = vunpack.c.l.b16 %v2129
    %v2217 = vunpack.c.h.b16 %v2129
    %v2218 = vunpack.c.l.b16 %v2130
    %v2219 = vunpack.c.h.b16 %v2130
    %v2220 = vunpack.c.l.b16 %v2131
    %v2221 = vunpack.c.h.b16 %v2131
    %v2222 = vunpack.c.l.b16 %v2132
    %v2223 = vunpack.c.h.b16 %v2132
    %v2224 = vunpack.c.l.b16 %v2133
    %v2225 = vunpack.c.h.b16 %v2133
    %v2226 = vunpack.c.l.b16 %v2134
    %v2227 = vunpack.c.h.b16 %v2134
    %v2228 = vunpack.c.l.b16 %v2135
    %v2229 = vunpack.c.h.b16 %v2135
    %v2230 = vunpack.c.l.b16 %v2136
    %v2231 = vunpack.c.h.b16 %v2136
    %v2232 = vunpack.c.l.b16 %v2137
    %v2233 = vunpack.c.h.b16 %v2137
    %v2234 = vunpack.c.l.b16 %v2138
    %v2235 = vunpack.c.h.b16 %v2138
    %v2236 = vunpack.c.l.b16 %v2139
    %v2237 = vunpack.c.h.b16 %v2139
    %v2238 = vunpack.c.l.b16 %v2140
    %v2239 = vunpack.c.h.b16 %v2140
    %v2240 = vunpack.c.l.b16 %v2141
    %v2241 = vunpack.c.h.b16 %v2141
    %v2242 = vunpack.c.l.b16 %v2142
    %v2243 = vunpack.c.h.b16 %v2142
    %v2244 = vunpack.c.l.b16 %v2143
    %v2245 = vunpack.c.h.b16 %v2143
    %v2246 = vunpack.c.l.b16 %v2144
    %v2247 = vunpack.c.h.b16 %v2144
    %v2248 = vunpack.c.l.b16 %v2145
    %v2249 = vunpack.c.h.b16 %v2145
    %v2250 = vunpack.c.l.b16 %v2146
    %v2251 = vunpack.c.h.b16 %v2146
    %v2252 = vunpack.c.l.b16 %v2147
    %v2253 = vunpack.c.h.b16 %v2147
    %v2254 = vunpack.c.l.b16 %v2148
    %v2255 = vunpack.c.h.b16 %v2148
    %v2256 = vunpack.c.l.b16 %v2149
    %v2257 = vunpack.c.h.b16 %v2149
    %v2258 = vpack.c.b16 %v2198, %v2194
    %v2259 = vpack.c.b16 %v2199, %v2195
    %v2260 = vpack.c.b16 %v2200, %v2196
    %v2261 = vpack.c.b16 %v2201, %v2197
    %v2262 = vpack.c.b16 %v2206, %v2202
    %v2263 = vpack.c.b16 %v2207, %v2203
    %v2264 = vpack.c.b16 %v2208, %v2204
    %v2265 = vpack.c.b16 %v2209, %v2205
    %v2266 = vpack.c.b16 %v2214, %v2210
    %v2267 = vpack.c.b16 %v2215, %v2211
    %v2268 = vpack.c.b16 %v2216, %v2212
    %v2269 = vpack.c.b16 %v2217, %v2213
    %v2270 = vpack.c.b16 %v2222, %v2218
    %v2271 = vpack.c.b16 %v2223, %v2219
    %v2272 = vpack.c.b16 %v2224, %v2220
    %v2273 = vpack.c.b16 %v2225, %v2221
    %v2274 = vpack.c.b16 %v2230, %v2226
    %v2275 = vpack.c.b16 %v2231, %v2227
    %v2276 = vpack.c.b16 %v2232, %v2228
    %v2277 = vpack.c.b16 %v2233, %v2229
    %v2278 = vpack.c.b16 %v2238, %v2234
    %v2279 = vpack.c.b16 %v2239, %v2235
    %v2280 = vpack.c.b16 %v2240, %v2236
    %v2281 = vpack.c.b16 %v2241, %v2237
    %v2282 = vpack.c.b16 %v2246, %v2242
    %v2283 = vpack.c.b16 %v2247, %v2243
    %v2284 = vpack.c.b16 %v2248, %v2244
    %v2285 = vpack.c.b16 %v2249, %v2245
    %v2286 = vpack.c.b16 %v2254, %v2250
    %v2287 = vpack.c.b16 %v2255, %v2251
    %v2288 = vpack.c.b16 %v2256, %v2252
    %v2289 = vpack.c.b16 %v2257, %v2253
    %2322 = vmatprep.subr.bf16.mxu0 %v2259
    %2323 = vmatpush1.bf16.msra.mxu0 %v2258
    %2324 = vmatprep.subr.bf16.mxu0 %v2263
    %2325 = vmatpush1.bf16.msra.mxu0 %v2262
    %2326 = vmatprep.subr.bf16.mxu0 %v2267
    %2327 = vmatpush1.bf16.msra.mxu0 %v2266
    %2328 = vmatprep.subr.bf16.mxu0 %v2271
    %2329 = vmatpush1.bf16.msra.mxu0 %v2270
    %2330 = vmatprep.subr.bf16.mxu0 %v2275
    %2331 = vmatpush1.bf16.msra.mxu0 %v2274
    %2332 = vmatprep.subr.bf16.mxu0 %v2279
    %2333 = vmatpush1.bf16.msra.mxu0 %v2278
    %2334 = vmatprep.subr.bf16.mxu0 %v2283
    %2335 = vmatpush1.bf16.msra.mxu0 %v2282
    %2336 = vmatprep.subr.bf16.mxu0 %v2287
    %2337 = vmatpush1.bf16.msra.mxu0 %v2286
    %2338 = vmatprep.subr.bf16.mxu0 0
    %2339 = vmatpush1.bf16.msra.mxu0 0
    %2340 = vmatprep.subr.bf16.mxu0 0
    %2341 = vmatpush1.bf16.msra.mxu0 0
    %2342 = vmatprep.subr.bf16.mxu0 0
    %2343 = vmatpush1.bf16.msra.mxu0 0
    %2344 = vmatprep.subr.bf16.mxu0 0
    %2345 = vmatpush1.bf16.msra.mxu0 0
    %2346 = vmatprep.subr.bf16.mxu0 0
    %2347 = vmatpush1.bf16.msra.mxu0 0
    %2348 = vmatprep.subr.bf16.mxu0 0
    %2349 = vmatpush1.bf16.msra.mxu0 0
    %2350 = vmatprep.subr.bf16.mxu0 0
    %2351 = vmatpush1.bf16.msra.mxu0 0
    %2352 = vmatprep.subr.bf16.mxu0 0
    %2353 = vmatpush1.bf16.msra.mxu0 0
    %2354 = vmatprep.mubr.bf16.mxu0 0
    %2355 = vmatmul.mubr.bf16.gmra.mrb[0].mxu0 %v2157
    %v2356 = vpop.f32.mrb[0].mxu0
    %v2357 = vadd.f32 %v2158, %v2356
    %v2358 = vpop.f32.mrb[0].mxu0
    %v2359 = vadd.f32 %v2159, %v2358
    %v2360 = vpop.f32.mrb[0].mxu0
    %v2361 = vpop.f32.mrb[0].mxu0
    %2362 = vdwg.mxu0
    %2363 = vmatprep.subr.bf16.mxu0 %v2261
    %2364 = vmatpush1.bf16.msra.mxu0 %v2260
    %2365 = vmatprep.subr.bf16.mxu0 %v2265
    %2366 = vmatpush1.bf16.msra.mxu0 %v2264
    %2367 = vmatprep.subr.bf16.mxu0 %v2269
    %2368 = vmatpush1.bf16.msra.mxu0 %v2268
    %2369 = vmatprep.subr.bf16.mxu0 %v2273
    %2370 = vmatpush1.bf16.msra.mxu0 %v2272
    %2371 = vmatprep.subr.bf16.mxu0 %v2277
    %2372 = vmatpush1.bf16.msra.mxu0 %v2276
    %2373 = vmatprep.subr.bf16.mxu0 %v2281
    %2374 = vmatpush1.bf16.msra.mxu0 %v2280
    %2375 = vmatprep.subr.bf16.mxu0 %v2285
    %2376 = vmatpush1.bf16.msra.mxu0 %v2284
    %2377 = vmatprep.subr.bf16.mxu0 %v2289
    %2378 = vmatpush1.bf16.msra.mxu0 %v2288
    %2379 = vmatprep.subr.bf16.mxu0 0
    %2380 = vmatpush1.bf16.msra.mxu0 0
    %2381 = vmatprep.subr.bf16.mxu0 0
    %2382 = vmatpush1.bf16.msra.mxu0 0
    %2383 = vmatprep.subr.bf16.mxu0 0
    %2384 = vmatpush1.bf16.msra.mxu0 0
    %2385 = vmatprep.subr.bf16.mxu0 0
    %2386 = vmatpush1.bf16.msra.mxu0 0
    %2387 = vmatprep.subr.bf16.mxu0 0
    %2388 = vmatpush1.bf16.msra.mxu0 0
    %2389 = vmatprep.subr.bf16.mxu0 0
    %2390 = vmatpush1.bf16.msra.mxu0 0
    %2391 = vmatprep.subr.bf16.mxu0 0
    %2392 = vmatpush1.bf16.msra.mxu0 0
    %2393 = vmatprep.subr.bf16.mxu0 0
    %2394 = vmatpush1.bf16.msra.mxu0 0
    %2395 = vmatprep.mubr.bf16.mxu0 0
    %2396 = vmatmul.mubr.bf16.gmra.mrb[0].mxu0 %v2157
    %v2397 = vpop.f32.mrb[0].mxu0
    %v2398 = vadd.f32 %v2160, %v2397
    %v2399 = vpop.f32.mrb[0].mxu0
    %v2400 = vadd.f32 %v2161, %v2399
    %v2401 = vpop.f32.mrb[0].mxu0
    %v2402 = vpop.f32.mrb[0].mxu0
    %2403 = vdwg.mxu0
    %v2404 = vxor.u32 %v2357, 2147483648
    %v2405 = vmul.f32 %v2404, 1.442695
    %v2406 = vpow.pop %v2405
    %v2407 = vadd.f32 %v2406, 1.0
    %v2408 = vrcp.pop %v2407
    %v2409 = vmul.f32 1.0, %v2408
    %v2410 = vxor.u32 %v2359, 2147483648
    %v2411 = vmul.f32 %v2410, 1.442695
    %v2412 = vpow.pop %v2411
    %v2413 = vadd.f32 %v2412, 1.0
    %v2414 = vrcp.pop %v2413
    %v2415 = vmul.f32 1.0, %v2414
    %v2416 = vtanh.pop %v2398
    %v2417 = vxor.u32 %v2400, 2147483648
    %v2418 = vmul.f32 %v2417, 1.442695
    %v2419 = vpow.pop %v2418
    %v2420 = vadd.f32 %v2419, 1.0
    %v2421 = vrcp.pop %v2420
    %v2422 = vmul.f32 1.0, %v2421
    %v2423 = vld [vmem:[#allocation5] sm:$0xff]
    %v2424 = vmul.f32 %v2415, %v2423
    %v2425 = vmul.f32 %v2409, %v2416
    %v2426 = vadd.f32 %v2424, %v2425
    %v2427 = vtanh.pop %v2426
    %v2428 = vmul.f32 %v2422, %v2427
    %2429 = vst [vmem:[#allocation5] sm:$0xff] %v2426
    %2430 = vst [vmem:[#allocation4] sm:$0xff] %v2428
    %v2431 = vld [vmem:[#allocation4] sm:$0xff]
    %v2432 = vpack.c.bf16 %v2431, %v2431
    %v2433 = vld [vmem:[%s875] sm:$0xff]
    %v2434 = vld [vmem:[%s875 + $0x8] sm:$0xff]
    %v2435 = vld [vmem:[%s875 + $0x10] sm:$0xff]
    %v2436 = vld [vmem:[%s875 + $0x18] sm:$0xff]
    %2437 = vmatprep.subr.bf16.mxu0 %v2259
    %2438 = vmatpush1.bf16.msra.mxu0 %v2258
    %2439 = vmatprep.subr.bf16.mxu0 %v2263
    %2440 = vmatpush1.bf16.msra.mxu0 %v2262
    %2441 = vmatprep.subr.bf16.mxu0 %v2267
    %2442 = vmatpush1.bf16.msra.mxu0 %v2266
    %2443 = vmatprep.subr.bf16.mxu0 %v2271
    %2444 = vmatpush1.bf16.msra.mxu0 %v2270
    %2445 = vmatprep.subr.bf16.mxu0 %v2275
    %2446 = vmatpush1.bf16.msra.mxu0 %v2274
    %2447 = vmatprep.subr.bf16.mxu0 %v2279
    %2448 = vmatpush1.bf16.msra.mxu0 %v2278
    %2449 = vmatprep.subr.bf16.mxu0 %v2283
    %2450 = vmatpush1.bf16.msra.mxu0 %v2282
    %2451 = vmatprep.subr.bf16.mxu0 %v2287
    %2452 = vmatpush1.bf16.msra.mxu0 %v2286
    %2453 = vmatprep.subr.bf16.mxu0 0
    %2454 = vmatpush1.bf16.msra.mxu0 0
    %2455 = vmatprep.subr.bf16.mxu0 0
    %2456 = vmatpush1.bf16.msra.mxu0 0
    %2457 = vmatprep.subr.bf16.mxu0 0
    %2458 = vmatpush1.bf16.msra.mxu0 0
    %2459 = vmatprep.subr.bf16.mxu0 0
    %2460 = vmatpush1.bf16.msra.mxu0 0
    %2461 = vmatprep.subr.bf16.mxu0 0
    %2462 = vmatpush1.bf16.msra.mxu0 0
    %2463 = vmatprep.subr.bf16.mxu0 0
    %2464 = vmatpush1.bf16.msra.mxu0 0
    %2465 = vmatprep.subr.bf16.mxu0 0
    %2466 = vmatpush1.bf16.msra.mxu0 0
    %2467 = vmatprep.subr.bf16.mxu0 0
    %2468 = vmatpush1.bf16.msra.mxu0 0
    %2469 = vmatprep.mubr.bf16.mxu0 0
    %2470 = vmatmul.mubr.bf16.gmra.mrb[0].mxu0 %v2432
    %v2471 = vpop.f32.mrb[0].mxu0
    %v2472 = vadd.f32 %v2433, %v2471
    %v2473 = vpop.f32.mrb[0].mxu0
    %v2474 = vadd.f32 %v2434, %v2473
    %v2475 = vpop.f32.mrb[0].mxu0
    %v2476 = vpop.f32.mrb[0].mxu0
    %2477 = vdwg.mxu0
    %2478 = vmatprep.subr.bf16.mxu0 %v2261
    %2479 = vmatpush1.bf16.msra.mxu0 %v2260
    %2480 = vmatprep.subr.bf16.mxu0 %v2265
    %2481 = vmatpush1.bf16.msra.mxu0 %v2264
    %2482 = vmatprep.subr.bf16.mxu0 %v2269
    %2483 = vmatpush1.bf16.msra.mxu0 %v2268
    %2484 = vmatprep.subr.bf16.mxu0 %v2273
    %2485 = vmatpush1.bf16.msra.mxu0 %v2272
    %2486 = vmatprep.subr.bf16.mxu0 %v2277
    %2487 = vmatpush1.bf16.msra.mxu0 %v2276
    %2488 = vmatprep.subr.bf16.mxu0 %v2281
    %2489 = vmatpush1.bf16.msra.mxu0 %v2280
    %2490 = vmatprep.subr.bf16.mxu0 %v2285
    %2491 = vmatpush1.bf16.msra.mxu0 %v2284
    %2492 = vmatprep.subr.bf16.mxu0 %v2289
    %2493 = vmatpush1.bf16.msra.mxu0 %v2288
    %2494 = vmatprep.subr.bf16.mxu0 0
    %2495 = vmatpush1.bf16.msra.mxu0 0
    %2496 = vmatprep.subr.bf16.mxu0 0
    %2497 = vmatpush1.bf16.msra.mxu0 0
    %2498 = vmatprep.subr.bf16.mxu0 0
    %2499 = vmatpush1.bf16.msra.mxu0 0
    %2500 = vmatprep.subr.bf16.mxu0 0
    %2501 = vmatpush1.bf16.msra.mxu0 0
    %2502 = vmatprep.subr.bf16.mxu0 0
    %2503 = vmatpush1.bf16.msra.mxu0 0
    %2504 = vmatprep.subr.bf16.mxu0 0
    %2505 = vmatpush1.bf16.msra.mxu0 0
    %2506 = vmatprep.subr.bf16.mxu0 0
    %2507 = vmatpush1.bf16.msra.mxu0 0
    %2508 = vmatprep.subr.bf16.mxu0 0
    %2509 = vmatpush1.bf16.msra.mxu0 0
    %2510 = vmatprep.mubr.bf16.mxu0 0
    %2511 = vmatmul.mubr.bf16.gmra.mrb[0].mxu0 %v2432
    %v2512 = vpop.f32.mrb[0].mxu0
    %v2513 = vadd.f32 %v2435, %v2512
    %v2514 = vpop.f32.mrb[0].mxu0
    %v2515 = vadd.f32 %v2436, %v2514
    %v2516 = vpop.f32.mrb[0].mxu0
    %v2517 = vpop.f32.mrb[0].mxu0
    %2518 = vdwg.mxu0
    %v2519 = vxor.u32 %v2472, 2147483648
    %v2520 = vmul.f32 %v2519, 1.442695
    %v2521 = vpow.pop %v2520
    %v2522 = vadd.f32 %v2521, 1.0
    %v2523 = vrcp.pop %v2522
    %v2524 = vmul.f32 1.0, %v2523
    %v2525 = vxor.u32 %v2474, 2147483648
    %v2526 = vmul.f32 %v2525, 1.442695
    %v2527 = vpow.pop %v2526
    %v2528 = vadd.f32 %v2527, 1.0
    %v2529 = vrcp.pop %v2528
    %v2530 = vmul.f32 1.0, %v2529
    %v2531 = vtanh.pop %v2513
    %v2532 = vxor.u32 %v2515, 2147483648
    %v2533 = vmul.f32 %v2532, 1.442695
    %v2534 = vpow.pop %v2533
    %v2535 = vadd.f32 %v2534, 1.0
    %v2536 = vrcp.pop %v2535
    %v2537 = vmul.f32 1.0, %v2536
    %v2538 = vld [vmem:[#allocation5] sm:$0xff]
    %v2539 = vmul.f32 %v2530, %v2538
    %v2540 = vmul.f32 %v2524, %v2531
    %v2541 = vadd.f32 %v2539, %v2540
    %v2542 = vtanh.pop %v2541
    %v2543 = vmul.f32 %v2537, %v2542
    %2544 = vst [vmem:[#allocation5] sm:$0xff] %v2541
    %2545 = vst [vmem:[#allocation4] sm:$0xff] %v2543
    %v2546 = vld [vmem:[#allocation4] sm:$0xff]
    %v2547 = vpack.c.bf16 %v2546, %v2546
    %v2548 = vld [vmem:[%s995] sm:$0xff]
    %v2549 = vld [vmem:[%s995 + $0x8] sm:$0xff]
    %v2550 = vld [vmem:[%s995 + $0x10] sm:$0xff]
    %v2551 = vld [vmem:[%s995 + $0x18] sm:$0xff]
    %2552 = vmatprep.subr.bf16.mxu0 %v2259
    %2553 = vmatpush1.bf16.msra.mxu0 %v2258
    %2554 = vmatprep.subr.bf16.mxu0 %v2263
    %2555 = vmatpush1.bf16.msra.mxu0 %v2262
    %2556 = vmatprep.subr.bf16.mxu0 %v2267
    %2557 = vmatpush1.bf16.msra.mxu0 %v2266
    %2558 = vmatprep.subr.bf16.mxu0 %v2271
    %2559 = vmatpush1.bf16.msra.mxu0 %v2270
    %2560 = vmatprep.subr.bf16.mxu0 %v2275
    %2561 = vmatpush1.bf16.msra.mxu0 %v2274
    %2562 = vmatprep.subr.bf16.mxu0 %v2279
    %2563 = vmatpush1.bf16.msra.mxu0 %v2278
    %2564 = vmatprep.subr.bf16.mxu0 %v2283
    %2565 = vmatpush1.bf16.msra.mxu0 %v2282
    %2566 = vmatprep.subr.bf16.mxu0 %v2287
    %2567 = vmatpush1.bf16.msra.mxu0 %v2286
    %2568 = vmatprep.subr.bf16.mxu0 0
    %2569 = vmatpush1.bf16.msra.mxu0 0
    %2570 = vmatprep.subr.bf16.mxu0 0
    %2571 = vmatpush1.bf16.msra.mxu0 0
    %2572 = vmatprep.subr.bf16.mxu0 0
    %2573 = vmatpush1.bf16.msra.mxu0 0
    %2574 = vmatprep.subr.bf16.mxu0 0
    %2575 = vmatpush1.bf16.msra.mxu0 0
    %2576 = vmatprep.subr.bf16.mxu0 0
    %2577 = vmatpush1.bf16.msra.mxu0 0
    %2578 = vmatprep.subr.bf16.mxu0 0
    %2579 = vmatpush1.bf16.msra.mxu0 0
    %2580 = vmatprep.subr.bf16.mxu0 0
    %2581 = vmatpush1.bf16.msra.mxu0 0
    %2582 = vmatprep.subr.bf16.mxu0 0
    %2583 = vmatpush1.bf16.msra.mxu0 0
    %2584 = vmatprep.mubr.bf16.mxu0 0
    %2585 = vmatmul.mubr.bf16.gmra.mrb[0].mxu0 %v2547
    %v2586 = vpop.f32.mrb[0].mxu0
    %v2587 = vadd.f32 %v2548, %v2586
    %v2588 = vpop.f32.mrb[0].mxu0
    %v2589 = vadd.f32 %v2549, %v2588
    %v2590 = vpop.f32.mrb[0].mxu0
    %v2591 = vpop.f32.mrb[0].mxu0
    %2592 = vdwg.mxu0
    %2593 = vmatprep.subr.bf16.mxu0 %v2261
    %2594 = vmatpush1.bf16.msra.mxu0 %v2260
    %2595 = vmatprep.subr.bf16.mxu0 %v2265
    %2596 = vmatpush1.bf16.msra.mxu0 %v2264
    %2597 = vmatprep.subr.bf16.mxu0 %v2269
    %2598 = vmatpush1.bf16.msra.mxu0 %v2268
    %2599 = vmatprep.subr.bf16.mxu0 %v2273
    %2600 = vmatpush1.bf16.msra.mxu0 %v2272
    %2601 = vmatprep.subr.bf16.mxu0 %v2277
    %2602 = vmatpush1.bf16.msra.mxu0 %v2276
    %2603 = vmatprep.subr.bf16.mxu0 %v2281
    %2604 = vmatpush1.bf16.msra.mxu0 %v2280
    %2605 = vmatprep.subr.bf16.mxu0 %v2285
    %2606 = vmatpush1.bf16.msra.mxu0 %v2284
    %2607 = vmatprep.subr.bf16.mxu0 %v2289
    %2608 = vmatpush1.bf16.msra.mxu0 %v2288
    %2609 = vmatprep.subr.bf16.mxu0 0
    %2610 = vmatpush1.bf16.msra.mxu0 0
    %2611 = vmatprep.subr.bf16.mxu0 0
    %2612 = vmatpush1.bf16.msra.mxu0 0
    %2613 = vmatprep.subr.bf16.mxu0 0
    %2614 = vmatpush1.bf16.msra.mxu0 0
    %2615 = vmatprep.subr.bf16.mxu0 0
    %2616 = vmatpush1.bf16.msra.mxu0 0
    %2617 = vmatprep.subr.bf16.mxu0 0
    %2618 = vmatpush1.bf16.msra.mxu0 0
    %2619 = vmatprep.subr.bf16.mxu0 0
    %2620 = vmatpush1.bf16.msra.mxu0 0
    %2621 = vmatprep.subr.bf16.mxu0 0
    %2622 = vmatpush1.bf16.msra.mxu0 0
    %2623 = vmatprep.subr.bf16.mxu0 0
    %2624 = vmatpush1.bf16.msra.mxu0 0
    %2625 = vmatprep.mubr.bf16.mxu0 0
    %2626 = vmatmul.mubr.bf16.gmra.mrb[0].mxu0 %v2547
    %v2627 = vpop.f32.mrb[0].mxu0
    %v2628 = vadd.f32 %v2550, %v2627
    %v2629 = vpop.f32.mrb[0].mxu0
    %v2630 = vadd.f32 %v2551, %v2629
    %v2631 = vpop.f32.mrb[0].mxu0
    %v2632 = vpop.f32.mrb[0].mxu0
    %2633 = vdwg.mxu0
    %v2634 = vxor.u32 %v2587, 2147483648
    %v2635 = vmul.f32 %v2634, 1.442695
    %v2636 = vpow.pop %v2635
    %v2637 = vadd.f32 %v2636, 1.0
    %v2638 = vrcp.pop %v2637
    %v2639 = vmul.f32 1.0, %v2638
    %v2640 = vxor.u32 %v2589, 2147483648
    %v2641 = vmul.f32 %v2640, 1.442695
    %v2642 = vpow.pop %v2641
    %v2643 = vadd.f32 %v2642, 1.0
    %v2644 = vrcp.pop %v2643
    %v2645 = vmul.f32 1.0, %v2644
    %v2646 = vtanh.pop %v2628
    %v2647 = vxor.u32 %v2630, 2147483648
    %v2648 = vmul.f32 %v2647, 1.442695
    %v2649 = vpow.pop %v2648
    %v2650 = vadd.f32 %v2649, 1.0
    %v2651 = vrcp.pop %v2650
    %v2652 = vmul.f32 1.0, %v2651
    %v2653 = vld [vmem:[#allocation5] sm:$0xff]
    %v2654 = vmul.f32 %v2645, %v2653
    %v2655 = vmul.f32 %v2639, %v2646
    %v2656 = vadd.f32 %v2654, %v2655
    %v2657 = vtanh.pop %v2656
    %v2658 = vmul.f32 %v2652, %v2657
    %2659 = vst [vmem:[#allocation5] sm:$0xff] %v2656
    %2660 = vst [vmem:[#allocation4] sm:$0xff] %v2658
    %v2661 = vld [vmem:[#allocation4] sm:$0xff]
    %v2662 = vpack.c.bf16 %v2661, %v2661
    %v2663 = vld [vmem:[%s1115] sm:$0xff]
    %v2664 = vld [vmem:[%s1115 + $0x8] sm:$0xff]
    %v2665 = vld [vmem:[%s1115 + $0x10] sm:$0xff]
    %v2666 = vld [vmem:[%s1115 + $0x18] sm:$0xff]
    %2667 = vmatprep.subr.bf16.mxu0 %v2259
    %2668 = vmatpush1.bf16.msra.mxu0 %v2258
    %2669 = vmatprep.subr.bf16.mxu0 %v2263
    %2670 = vmatpush1.bf16.msra.mxu0 %v2262
    %2671 = vmatprep.subr.bf16.mxu0 %v2267
    %2672 = vmatpush1.bf16.msra.mxu0 %v2266
    %2673 = vmatprep.subr.bf16.mxu0 %v2271
    %2674 = vmatpush1.bf16.msra.mxu0 %v2270
    %2675 = vmatprep.subr.bf16.mxu0 %v2275
    %2676 = vmatpush1.bf16.msra.mxu0 %v2274
    %2677 = vmatprep.subr.bf16.mxu0 %v2279
    %2678 = vmatpush1.bf16.msra.mxu0 %v2278
    %2679 = vmatprep.subr.bf16.mxu0 %v2283
    %2680 = vmatpush1.bf16.msra.mxu0 %v2282
    %2681 = vmatprep.subr.bf16.mxu0 %v2287
    %2682 = vmatpush1.bf16.msra.mxu0 %v2286
    %2683 = vmatprep.subr.bf16.mxu0 0
    %2684 = vmatpush1.bf16.msra.mxu0 0
    %2685 = vmatprep.subr.bf16.mxu0 0
    %2686 = vmatpush1.bf16.msra.mxu0 0
    %2687 = vmatprep.subr.bf16.mxu0 0
    %2688 = vmatpush1.bf16.msra.mxu0 0
    %2689 = vmatprep.subr.bf16.mxu0 0
    %2690 = vmatpush1.bf16.msra.mxu0 0
    %2691 = vmatprep.subr.bf16.mxu0 0
    %2692 = vmatpush1.bf16.msra.mxu0 0
    %2693 = vmatprep.subr.bf16.mxu0 0
    %2694 = vmatpush1.bf16.msra.mxu0 0
    %2695 = vmatprep.subr.bf16.mxu0 0
    %2696 = vmatpush1.bf16.msra.mxu0 0
    %2697 = vmatprep.subr.bf16.mxu0 0
    %2698 = vmatpush1.bf16.msra.mxu0 0
    %2699 = vmatprep.mubr.bf16.mxu0 0
    %2700 = vmatmul.mubr.bf16.gmra.mrb[0].mxu0 %v2662
    %v2701 = vpop.f32.mrb[0].mxu0
    %v2702 = vadd.f32 %v2663, %v2701
    %v2703 = vpop.f32.mrb[0].mxu0
    %v2704 = vadd.f32 %v2664, %v2703
    %v2705 = vpop.f32.mrb[0].mxu0
    %v2706 = vpop.f32.mrb[0].mxu0
    %2707 = vdwg.mxu0
    %2708 = vmatprep.subr.bf16.mxu0 %v2261
    %2709 = vmatpush1.bf16.msra.mxu0 %v2260
    %2710 = vmatprep.subr.bf16.mxu0 %v2265
    %2711 = vmatpush1.bf16.msra.mxu0 %v2264
    %2712 = vmatprep.subr.bf16.mxu0 %v2269
    %2713 = vmatpush1.bf16.msra.mxu0 %v2268
    %2714 = vmatprep.subr.bf16.mxu0 %v2273
    %2715 = vmatpush1.bf16.msra.mxu0 %v2272
    %2716 = vmatprep.subr.bf16.mxu0 %v2277
    %2717 = vmatpush1.bf16.msra.mxu0 %v2276
    %2718 = vmatprep.subr.bf16.mxu0 %v2281
    %2719 = vmatpush1.bf16.msra.mxu0 %v2280
    %2720 = vmatprep.subr.bf16.mxu0 %v2285
    %2721 = vmatpush1.bf16.msra.mxu0 %v2284
    %2722 = vmatprep.subr.bf16.mxu0 %v2289
    %2723 = vmatpush1.bf16.msra.mxu0 %v2288
    %2724 = vmatprep.subr.bf16.mxu0 0
    %2725 = vmatpush1.bf16.msra.mxu0 0
    %2726 = vmatprep.subr.bf16.mxu0 0
    %2727 = vmatpush1.bf16.msra.mxu0 0
    %2728 = vmatprep.subr.bf16.mxu0 0
    %2729 = vmatpush1.bf16.msra.mxu0 0
    %2730 = vmatprep.subr.bf16.mxu0 0
    %2731 = vmatpush1.bf16.msra.mxu0 0
    %2732 = vmatprep.subr.bf16.mxu0 0
    %2733 = vmatpush1.bf16.msra.mxu0 0
    %2734 = vmatprep.subr.bf16.mxu0 0
    %2735 = vmatpush1.bf16.msra.mxu0 0
    %2736 = vmatprep.subr.bf16.mxu0 0
    %2737 = vmatpush1.bf16.msra.mxu0 0
    %2738 = vmatprep.subr.bf16.mxu0 0
    %2739 = vmatpush1.bf16.msra.mxu0 0
    %2740 = vmatprep.mubr.bf16.mxu0 0
    %2741 = vmatmul.mubr.bf16.gmra.mrb[0].mxu0 %v2662
    %v2742 = vpop.f32.mrb[0].mxu0
    %v2743 = vadd.f32 %v2665, %v2742
    %v2744 = vpop.f32.mrb[0].mxu0
    %v2745 = vadd.f32 %v2666, %v2744
    %v2746 = vpop.f32.mrb[0].mxu0
    %v2747 = vpop.f32.mrb[0].mxu0
    %2748 = vdwg.mxu0
    %v2749 = vxor.u32 %v2702, 2147483648
    %v2750 = vmul.f32 %v2749, 1.442695
    %v2751 = vpow.pop %v2750
    %v2752 = vadd.f32 %v2751, 1.0
    %v2753 = vrcp.pop %v2752
    %v2754 = vmul.f32 1.0, %v2753
    %v2755 = vxor.u32 %v2704, 2147483648
    %v2756 = vmul.f32 %v2755, 1.442695
    %v2757 = vpow.pop %v2756
    %v2758 = vadd.f32 %v2757, 1.0
    %v2759 = vrcp.pop %v2758
    %v2760 = vmul.f32 1.0, %v2759
    %v2761 = vtanh.pop %v2743
    %v2762 = vxor.u32 %v2745, 2147483648
    %v2763 = vmul.f32 %v2762, 1.442695
    %v2764 = vpow.pop %v2763
    %v2765 = vadd.f32 %v2764, 1.0
    %v2766 = vrcp.pop %v2765
    %v2767 = vmul.f32 1.0, %v2766
    %v2768 = vld [vmem:[#allocation5] sm:$0xff]
    %v2769 = vmul.f32 %v2760, %v2768
    %v2770 = vmul.f32 %v2754, %v2761
    %v2771 = vadd.f32 %v2769, %v2770
    %v2772 = vtanh.pop %v2771
    %v2773 = vmul.f32 %v2767, %v2772
    %2774 = vst [vmem:[#allocation5] sm:$0xff] %v2771
    %2775 = vst [vmem:[#allocation4] sm:$0xff] %v2773
    %v2776 = vld [vmem:[#allocation4] sm:$0xff]
    %v2777 = vpack.c.bf16 %v2776, %v2776
    %v2778 = vld [vmem:[%s1235] sm:$0xff]
    %v2779 = vld [vmem:[%s1235 + $0x8] sm:$0xff]
    %v2780 = vld [vmem:[%s1235 + $0x10] sm:$0xff]
    %v2781 = vld [vmem:[%s1235 + $0x18] sm:$0xff]
    %2782 = vmatprep.subr.bf16.mxu0 %v2259
    %2783 = vmatpush1.bf16.msra.mxu0 %v2258
    %2784 = vmatprep.subr.bf16.mxu0 %v2263
    %2785 = vmatpush1.bf16.msra.mxu0 %v2262
    %2786 = vmatprep.subr.bf16.mxu0 %v2267
    %2787 = vmatpush1.bf16.msra.mxu0 %v2266
    %2788 = vmatprep.subr.bf16.mxu0 %v2271
    %2789 = vmatpush1.bf16.msra.mxu0 %v2270
    %2790 = vmatprep.subr.bf16.mxu0 %v2275
    %2791 = vmatpush1.bf16.msra.mxu0 %v2274
    %2792 = vmatprep.subr.bf16.mxu0 %v2279
    %2793 = vmatpush1.bf16.msra.mxu0 %v2278
    %2794 = vmatprep.subr.bf16.mxu0 %v2283
    %2795 = vmatpush1.bf16.msra.mxu0 %v2282
    %2796 = vmatprep.subr.bf16.mxu0 %v2287
    %2797 = vmatpush1.bf16.msra.mxu0 %v2286
    %2798 = vmatprep.subr.bf16.mxu0 0
    %2799 = vmatpush1.bf16.msra.mxu0 0
    %2800 = vmatprep.subr.bf16.mxu0 0
    %2801 = vmatpush1.bf16.msra.mxu0 0
    %2802 = vmatprep.subr.bf16.mxu0 0
    %2803 = vmatpush1.bf16.msra.mxu0 0
    %2804 = vmatprep.subr.bf16.mxu0 0
    %2805 = vmatpush1.bf16.msra.mxu0 0
    %2806 = vmatprep.subr.bf16.mxu0 0
    %2807 = vmatpush1.bf16.msra.mxu0 0
    %2808 = vmatprep.subr.bf16.mxu0 0
    %2809 = vmatpush1.bf16.msra.mxu0 0
    %2810 = vmatprep.subr.bf16.mxu0 0
    %2811 = vmatpush1.bf16.msra.mxu0 0
    %2812 = vmatprep.subr.bf16.mxu0 0
    %2813 = vmatpush1.bf16.msra.mxu0 0
    %2814 = vmatprep.mubr.bf16.mxu0 0
    %2815 = vmatmul.mubr.bf16.gmra.mrb[0].mxu0 %v2777
    %v2816 = vpop.f32.mrb[0].mxu0
    %v2817 = vadd.f32 %v2778, %v2816
    %v2818 = vpop.f32.mrb[0].mxu0
    %v2819 = vadd.f32 %v2779, %v2818
    %v2820 = vpop.f32.mrb[0].mxu0
    %v2821 = vpop.f32.mrb[0].mxu0
    %2822 = vdwg.mxu0
    %2823 = vmatprep.subr.bf16.mxu0 %v2261
    %2824 = vmatpush1.bf16.msra.mxu0 %v2260
    %2825 = vmatprep.subr.bf16.mxu0 %v2265
    %2826 = vmatpush1.bf16.msra.mxu0 %v2264
    %2827 = vmatprep.subr.bf16.mxu0 %v2269
    %2828 = vmatpush1.bf16.msra.mxu0 %v2268
    %2829 = vmatprep.subr.bf16.mxu0 %v2273
    %2830 = vmatpush1.bf16.msra.mxu0 %v2272
    %2831 = vmatprep.subr.bf16.mxu0 %v2277
    %2832 = vmatpush1.bf16.msra.mxu0 %v2276
    %2833 = vmatprep.subr.bf16.mxu0 %v2281
    %2834 = vmatpush1.bf16.msra.mxu0 %v2280
    %2835 = vmatprep.subr.bf16.mxu0 %v2285
    %2836 = vmatpush1.bf16.msra.mxu0 %v2284
    %2837 = vmatprep.subr.bf16.mxu0 %v2289
    %2838 = vmatpush1.bf16.msra.mxu0 %v2288
    %2839 = vmatprep.subr.bf16.mxu0 0
    %2840 = vmatpush1.bf16.msra.mxu0 0
    %2841 = vmatprep.subr.bf16.mxu0 0
    %2842 = vmatpush1.bf16.msra.mxu0 0
    %2843 = vmatprep.subr.bf16.mxu0 0
    %2844 = vmatpush1.bf16.msra.mxu0 0
    %2845 = vmatprep.subr.bf16.mxu0 0
    %2846 = vmatpush1.bf16.msra.mxu0 0
    %2847 = vmatprep.subr.bf16.mxu0 0
    %2848 = vmatpush1.bf16.msra.mxu0 0
    %2849 = vmatprep.subr.bf16.mxu0 0
    %2850 = vmatpush1.bf16.msra.mxu0 0
    %2851 = vmatprep.subr.bf16.mxu0 0
    %2852 = vmatpush1.bf16.msra.mxu0 0
    %2853 = vmatprep.subr.bf16.mxu0 0
    %2854 = vmatpush1.bf16.msra.mxu0 0
    %2855 = vmatprep.mubr.bf16.mxu0 0
    %2856 = vmatmul.mubr.bf16.gmra.mrb[0].mxu0 %v2777
    %v2857 = vpop.f32.mrb[0].mxu0
    %v2858 = vadd.f32 %v2780, %v2857
    %v2859 = vpop.f32.mrb[0].mxu0
    %v2860 = vadd.f32 %v2781, %v2859
    %v2861 = vpop.f32.mrb[0].mxu0
    %v2862 = vpop.f32.mrb[0].mxu0
    %2863 = vdwg.mxu0
    %v2864 = vxor.u32 %v2817, 2147483648
    %v2865 = vmul.f32 %v2864, 1.442695
    %v2866 = vpow.pop %v2865
    %v2867 = vadd.f32 %v2866, 1.0
    %v2868 = vrcp.pop %v2867
    %v2869 = vmul.f32 1.0, %v2868
    %v2870 = vxor.u32 %v2819, 2147483648
    %v2871 = vmul.f32 %v2870, 1.442695
    %v2872 = vpow.pop %v2871
    %v2873 = vadd.f32 %v2872, 1.0
    %v2874 = vrcp.pop %v2873
    %v2875 = vmul.f32 1.0, %v2874
    %v2876 = vtanh.pop %v2858
    %v2877 = vxor.u32 %v2860, 2147483648
    %v2878 = vmul.f32 %v2877, 1.442695
    %v2879 = vpow.pop %v2878
    %v2880 = vadd.f32 %v2879, 1.0
    %v2881 = vrcp.pop %v2880
    %v2882 = vmul.f32 1.0, %v2881
    %v2883 = vld [vmem:[#allocation5] sm:$0xff]
    %v2884 = vmul.f32 %v2875, %v2883
    %v2885 = vmul.f32 %v2869, %v2876
    %v2886 = vadd.f32 %v2884, %v2885
    %v2887 = vtanh.pop %v2886
    %v2888 = vmul.f32 %v2882, %v2887
    %2889 = vst [vmem:[#allocation5] sm:$0xff] %v2886
    %2890 = vst [vmem:[#allocation4] sm:$0xff] %v2888
    %v2891 = vld [vmem:[#allocation4] sm:$0xff]
    %v2892 = vpack.c.bf16 %v2891, %v2891
    %v2893 = vld [vmem:[%s1355] sm:$0xff]
    %v2894 = vld [vmem:[%s1355 + $0x8] sm:$0xff]
    %v2895 = vld [vmem:[%s1355 + $0x10] sm:$0xff]
    %v2896 = vld [vmem:[%s1355 + $0x18] sm:$0xff]
    %2897 = vmatprep.subr.bf16.mxu0 %v2259
    %2898 = vmatpush1.bf16.msra.mxu0 %v2258
    %2899 = vmatprep.subr.bf16.mxu0 %v2263
    %2900 = vmatpush1.bf16.msra.mxu0 %v2262
    %2901 = vmatprep.subr.bf16.mxu0 %v2267
    %2902 = vmatpush1.bf16.msra.mxu0 %v2266
    %2903 = vmatprep.subr.bf16.mxu0 %v2271
    %2904 = vmatpush1.bf16.msra.mxu0 %v2270
    %2905 = vmatprep.subr.bf16.mxu0 %v2275
    %2906 = vmatpush1.bf16.msra.mxu0 %v2274
    %2907 = vmatprep.subr.bf16.mxu0 %v2279
    %2908 = vmatpush1.bf16.msra.mxu0 %v2278
    %2909 = vmatprep.subr.bf16.mxu0 %v2283
    %2910 = vmatpush1.bf16.msra.mxu0 %v2282
    %2911 = vmatprep.subr.bf16.mxu0 %v2287
    %2912 = vmatpush1.bf16.msra.mxu0 %v2286
    %2913 = vmatprep.subr.bf16.mxu0 0
    %2914 = vmatpush1.bf16.msra.mxu0 0
    %2915 = vmatprep.subr.bf16.mxu0 0
    %2916 = vmatpush1.bf16.msra.mxu0 0
    %2917 = vmatprep.subr.bf16.mxu0 0
    %2918 = vmatpush1.bf16.msra.mxu0 0
    %2919 = vmatprep.subr.bf16.mxu0 0
    %2920 = vmatpush1.bf16.msra.mxu0 0
    %2921 = vmatprep.subr.bf16.mxu0 0
    %2922 = vmatpush1.bf16.msra.mxu0 0
    %2923 = vmatprep.subr.bf16.mxu0 0
    %2924 = vmatpush1.bf16.msra.mxu0 0
    %2925 = vmatprep.subr.bf16.mxu0 0
    %2926 = vmatpush1.bf16.msra.mxu0 0
    %2927 = vmatprep.subr.bf16.mxu0 0
    %2928 = vmatpush1.bf16.msra.mxu0 0
    %2929 = vmatprep.mubr.bf16.mxu0 0
    %2930 = vmatmul.mubr.bf16.gmra.mrb[0].mxu0 %v2892
    %v2931 = vpop.f32.mrb[0].mxu0
    %v2932 = vadd.f32 %v2893, %v2931
    %v2933 = vpop.f32.mrb[0].mxu0
    %v2934 = vadd.f32 %v2894, %v2933
    %v2935 = vpop.f32.mrb[0].mxu0
    %v2936 = vpop.f32.mrb[0].mxu0
    %2937 = vdwg.mxu0
    %2938 = vmatprep.subr.bf16.mxu0 %v2261
    %2939 = vmatpush1.bf16.msra.mxu0 %v2260
    %2940 = vmatprep.subr.bf16.mxu0 %v2265
    %2941 = vmatpush1.bf16.msra.mxu0 %v2264
    %2942 = vmatprep.subr.bf16.mxu0 %v2269
    %2943 = vmatpush1.bf16.msra.mxu0 %v2268
    %2944 = vmatprep.subr.bf16.mxu0 %v2273
    %2945 = vmatpush1.bf16.msra.mxu0 %v2272
    %2946 = vmatprep.subr.bf16.mxu0 %v2277
    %2947 = vmatpush1.bf16.msra.mxu0 %v2276
    %2948 = vmatprep.subr.bf16.mxu0 %v2281
    %2949 = vmatpush1.bf16.msra.mxu0 %v2280
    %2950 = vmatprep.subr.bf16.mxu0 %v2285
    %2951 = vmatpush1.bf16.msra.mxu0 %v2284
    %2952 = vmatprep.subr.bf16.mxu0 %v2289
    %2953 = vmatpush1.bf16.msra.mxu0 %v2288
    %2954 = vmatprep.subr.bf16.mxu0 0
    %2955 = vmatpush1.bf16.msra.mxu0 0
    %2956 = vmatprep.subr.bf16.mxu0 0
    %2957 = vmatpush1.bf16.msra.mxu0 0
    %2958 = vmatprep.subr.bf16.mxu0 0
    %2959 = vmatpush1.bf16.msra.mxu0 0
    %2960 = vmatprep.subr.bf16.mxu0 0
    %2961 = vmatpush1.bf16.msra.mxu0 0
    %2962 = vmatprep.subr.bf16.mxu0 0
    %2963 = vmatpush1.bf16.msra.mxu0 0
    %2964 = vmatprep.subr.bf16.mxu0 0
    %2965 = vmatpush1.bf16.msra.mxu0 0
    %2966 = vmatprep.subr.bf16.mxu0 0
    %2967 = vmatpush1.bf16.msra.mxu0 0
    %2968 = vmatprep.subr.bf16.mxu0 0
    %2969 = vmatpush1.bf16.msra.mxu0 0
    %2970 = vmatprep.mubr.bf16.mxu0 0
    %2971 = vmatmul.mubr.bf16.gmra.mrb[0].mxu0 %v2892
    %v2972 = vpop.f32.mrb[0].mxu0
    %v2973 = vadd.f32 %v2895, %v2972
    %v2974 = vpop.f32.mrb[0].mxu0
    %v2975 = vadd.f32 %v2896, %v2974
    %v2976 = vpop.f32.mrb[0].mxu0
    %v2977 = vpop.f32.mrb[0].mxu0
    %2978 = vdwg.mxu0
    %v2979 = vxor.u32 %v2932, 2147483648
    %v2980 = vmul.f32 %v2979, 1.442695
    %v2981 = vpow.pop %v2980
    %v2982 = vadd.f32 %v2981, 1.0
    %v2983 = vrcp.pop %v2982
    %v2984 = vmul.f32 1.0, %v2983
    %v2985 = vxor.u32 %v2934, 2147483648
    %v2986 = vmul.f32 %v2985, 1.442695
    %v2987 = vpow.pop %v2986
    %v2988 = vadd.f32 %v2987, 1.0
    %v2989 = vrcp.pop %v2988
    %v2990 = vmul.f32 1.0, %v2989
    %v2991 = vtanh.pop %v2973
    %v2992 = vxor.u32 %v2975, 2147483648
    %v2993 = vmul.f32 %v2992, 1.442695
    %v2994 = vpow.pop %v2993
    %v2995 = vadd.f32 %v2994, 1.0
    %v2996 = vrcp.pop %v2995
    %v2997 = vmul.f32 1.0, %v2996
    %v2998 = vld [vmem:[#allocation5] sm:$0xff]
    %v2999 = vmul.f32 %v2990, %v2998
    %v3000 = vmul.f32 %v2984, %v2991
    %v3001 = vadd.f32 %v2999, %v3000
    %v3002 = vtanh.pop %v3001
    %v3003 = vmul.f32 %v2997, %v3002
    %3004 = vst [vmem:[#allocation5] sm:$0xff] %v3001
    %3005 = vst [vmem:[#allocation4] sm:$0xff] %v3003
    %v3006 = vld [vmem:[#allocation4] sm:$0xff]
    %v3007 = vpack.c.bf16 %v3006, %v3006
    %v3008 = vld [vmem:[%s1475] sm:$0xff]
    %v3009 = vld [vmem:[%s1475 + $0x8] sm:$0xff]
    %v3010 = vld [vmem:[%s1475 + $0x10] sm:$0xff]
    %v3011 = vld [vmem:[%s1475 + $0x18] sm:$0xff]
    %3012 = vmatprep.subr.bf16.mxu0 %v2259
    %3013 = vmatpush1.bf16.msra.mxu0 %v2258
    %3014 = vmatprep.subr.bf16.mxu0 %v2263
    %3015 = vmatpush1.bf16.msra.mxu0 %v2262
    %3016 = vmatprep.subr.bf16.mxu0 %v2267
    %3017 = vmatpush1.bf16.msra.mxu0 %v2266
    %3018 = vmatprep.subr.bf16.mxu0 %v2271
    %3019 = vmatpush1.bf16.msra.mxu0 %v2270
    %3020 = vmatprep.subr.bf16.mxu0 %v2275
    %3021 = vmatpush1.bf16.msra.mxu0 %v2274
    %3022 = vmatprep.subr.bf16.mxu0 %v2279
    %3023 = vmatpush1.bf16.msra.mxu0 %v2278
    %3024 = vmatprep.subr.bf16.mxu0 %v2283
    %3025 = vmatpush1.bf16.msra.mxu0 %v2282
    %3026 = vmatprep.subr.bf16.mxu0 %v2287
    %3027 = vmatpush1.bf16.msra.mxu0 %v2286
    %3028 = vmatprep.subr.bf16.mxu0 0
    %3029 = vmatpush1.bf16.msra.mxu0 0
    %3030 = vmatprep.subr.bf16.mxu0 0
    %3031 = vmatpush1.bf16.msra.mxu0 0
    %3032 = vmatprep.subr.bf16.mxu0 0
    %3033 = vmatpush1.bf16.msra.mxu0 0
    %3034 = vmatprep.subr.bf16.mxu0 0
    %3035 = vmatpush1.bf16.msra.mxu0 0
    %3036 = vmatprep.subr.bf16.mxu0 0
    %3037 = vmatpush1.bf16.msra.mxu0 0
    %3038 = vmatprep.subr.bf16.mxu0 0
    %3039 = vmatpush1.bf16.msra.mxu0 0
    %3040 = vmatprep.subr.bf16.mxu0 0
    %3041 = vmatpush1.bf16.msra.mxu0 0
    %3042 = vmatprep.subr.bf16.mxu0 0
    %3043 = vmatpush1.bf16.msra.mxu0 0
    %3044 = vmatprep.mubr.bf16.mxu0 0
    %3045 = vmatmul.mubr.bf16.gmra.mrb[0].mxu0 %v3007
    %v3046 = vpop.f32.mrb[0].mxu0
    %v3047 = vadd.f32 %v3008, %v3046
    %v3048 = vpop.f32.mrb[0].mxu0
    %v3049 = vadd.f32 %v3009, %v3048
    %v3050 = vpop.f32.mrb[0].mxu0
    %v3051 = vpop.f32.mrb[0].mxu0
    %3052 = vdwg.mxu0
    %3053 = vmatprep.subr.bf16.mxu0 %v2261
    %3054 = vmatpush1.bf16.msra.mxu0 %v2260
    %3055 = vmatprep.subr.bf16.mxu0 %v2265
    %3056 = vmatpush1.bf16.msra.mxu0 %v2264
    %3057 = vmatprep.subr.bf16.mxu0 %v2269
    %3058 = vmatpush1.bf16.msra.mxu0 %v2268
    %3059 = vmatprep.subr.bf16.mxu0 %v2273
    %3060 = vmatpush1.bf16.msra.mxu0 %v2272
    %3061 = vmatprep.subr.bf16.mxu0 %v2277
    %3062 = vmatpush1.bf16.msra.mxu0 %v2276
    %3063 = vmatprep.subr.bf16.mxu0 %v2281
    %3064 = vmatpush1.bf16.msra.mxu0 %v2280
    %3065 = vmatprep.subr.bf16.mxu0 %v2285
    %3066 = vmatpush1.bf16.msra.mxu0 %v2284
    %3067 = vmatprep.subr.bf16.mxu0 %v2289
    %3068 = vmatpush1.bf16.msra.mxu0 %v2288
    %3069 = vmatprep.subr.bf16.mxu0 0
    %3070 = vmatpush1.bf16.msra.mxu0 0
    %3071 = vmatprep.subr.bf16.mxu0 0
    %3072 = vmatpush1.bf16.msra.mxu0 0
    %3073 = vmatprep.subr.bf16.mxu0 0
    %3074 = vmatpush1.bf16.msra.mxu0 0
    %3075 = vmatprep.subr.bf16.mxu0 0
    %3076 = vmatpush1.bf16.msra.mxu0 0
    %3077 = vmatprep.subr.bf16.mxu0 0
    %3078 = vmatpush1.bf16.msra.mxu0 0
    %3079 = vmatprep.subr.bf16.mxu0 0
    %3080 = vmatpush1.bf16.msra.mxu0 0
    %3081 = vmatprep.subr.bf16.mxu0 0
    %3082 = vmatpush1.bf16.msra.mxu0 0
    %3083 = vmatprep.subr.bf16.mxu0 0
    %3084 = vmatpush1.bf16.msra.mxu0 0
    %3085 = vmatprep.mubr.bf16.mxu0 0
    %3086 = vmatmul.mubr.bf16.gmra.mrb[0].mxu0 %v3007
    %v3087 = vpop.f32.mrb[0].mxu0
    %v3088 = vadd.f32 %v3010, %v3087
    %v3089 = vpop.f32.mrb[0].mxu0
    %v3090 = vadd.f32 %v3011, %v3089
    %v3091 = vpop.f32.mrb[0].mxu0
    %v3092 = vpop.f32.mrb[0].mxu0
    %3093 = vdwg.mxu0
    %v3094 = vxor.u32 %v3047, 2147483648
    %v3095 = vmul.f32 %v3094, 1.442695
    %v3096 = vpow.pop %v3095
    %v3097 = vadd.f32 %v3096, 1.0
    %v3098 = vrcp.pop %v3097
    %v3099 = vmul.f32 1.0, %v3098
    %v3100 = vxor.u32 %v3049, 2147483648
    %v3101 = vmul.f32 %v3100, 1.442695
    %v3102 = vpow.pop %v3101
    %v3103 = vadd.f32 %v3102, 1.0
    %v3104 = vrcp.pop %v3103
    %v3105 = vmul.f32 1.0, %v3104
    %v3106 = vtanh.pop %v3088
    %v3107 = vxor.u32 %v3090, 2147483648
    %v3108 = vmul.f32 %v3107, 1.442695
    %v3109 = vpow.pop %v3108
    %v3110 = vadd.f32 %v3109, 1.0
    %v3111 = vrcp.pop %v3110
    %v3112 = vmul.f32 1.0, %v3111
    %v3113 = vld [vmem:[#allocation5] sm:$0xff]
    %v3114 = vmul.f32 %v3105, %v3113
    %v3115 = vmul.f32 %v3099, %v3106
    %v3116 = vadd.f32 %v3114, %v3115
    %v3117 = vtanh.pop %v3116
    %v3118 = vmul.f32 %v3112, %v3117
    %3119 = vst [vmem:[#allocation5] sm:$0xff] %v3116
    %3120 = vst [vmem:[#allocation4] sm:$0xff] %v3118
    %v3121 = vld [vmem:[#allocation4] sm:$0xff]
    %v3122 = vpack.c.bf16 %v3121, %v3121
    %v3123 = vld [vmem:[%s1595] sm:$0xff]
    %v3124 = vld [vmem:[%s1595 + $0x8] sm:$0xff]
    %v3125 = vld [vmem:[%s1595 + $0x10] sm:$0xff]
    %v3126 = vld [vmem:[%s1595 + $0x18] sm:$0xff]
    %3127 = vmatprep.subr.bf16.mxu0 %v2259
    %3128 = vmatpush1.bf16.msra.mxu0 %v2258
    %3129 = vmatprep.subr.bf16.mxu0 %v2263
    %3130 = vmatpush1.bf16.msra.mxu0 %v2262
    %3131 = vmatprep.subr.bf16.mxu0 %v2267
    %3132 = vmatpush1.bf16.msra.mxu0 %v2266
    %3133 = vmatprep.subr.bf16.mxu0 %v2271
    %3134 = vmatpush1.bf16.msra.mxu0 %v2270
    %3135 = vmatprep.subr.bf16.mxu0 %v2275
    %3136 = vmatpush1.bf16.msra.mxu0 %v2274
    %3137 = vmatprep.subr.bf16.mxu0 %v2279
    %3138 = vmatpush1.bf16.msra.mxu0 %v2278
    %3139 = vmatprep.subr.bf16.mxu0 %v2283
    %3140 = vmatpush1.bf16.msra.mxu0 %v2282
    %3141 = vmatprep.subr.bf16.mxu0 %v2287
    %3142 = vmatpush1.bf16.msra.mxu0 %v2286
    %3143 = vmatprep.subr.bf16.mxu0 0
    %3144 = vmatpush1.bf16.msra.mxu0 0
    %3145 = vmatprep.subr.bf16.mxu0 0
    %3146 = vmatpush1.bf16.msra.mxu0 0
    %3147 = vmatprep.subr.bf16.mxu0 0
    %3148 = vmatpush1.bf16.msra.mxu0 0
    %3149 = vmatprep.subr.bf16.mxu0 0
    %3150 = vmatpush1.bf16.msra.mxu0 0
    %3151 = vmatprep.subr.bf16.mxu0 0
    %3152 = vmatpush1.bf16.msra.mxu0 0
    %3153 = vmatprep.subr.bf16.mxu0 0
    %3154 = vmatpush1.bf16.msra.mxu0 0
    %3155 = vmatprep.subr.bf16.mxu0 0
    %3156 = vmatpush1.bf16.msra.mxu0 0
    %3157 = vmatprep.subr.bf16.mxu0 0
    %3158 = vmatpush1.bf16.msra.mxu0 0
    %3159 = vmatprep.mubr.bf16.mxu0 0
    %3160 = vmatmul.mubr.bf16.gmra.mrb[0].mxu0 %v3122
    %v3161 = vpop.f32.mrb[0].mxu0
    %v3162 = vadd.f32 %v3123, %v3161
    %v3163 = vpop.f32.mrb[0].mxu0
    %v3164 = vadd.f32 %v3124, %v3163
    %v3165 = vpop.f32.mrb[0].mxu0
    %v3166 = vpop.f32.mrb[0].mxu0
    %3167 = vdwg.mxu0
    %3168 = vmatprep.subr.bf16.mxu0 %v2261
    %3169 = vmatpush1.bf16.msra.mxu0 %v2260
    %3170 = vmatprep.subr.bf16.mxu0 %v2265
    %3171 = vmatpush1.bf16.msra.mxu0 %v2264
    %3172 = vmatprep.subr.bf16.mxu0 %v2269
    %3173 = vmatpush1.bf16.msra.mxu0 %v2268
    %3174 = vmatprep.subr.bf16.mxu0 %v2273
    %3175 = vmatpush1.bf16.msra.mxu0 %v2272
    %3176 = vmatprep.subr.bf16.mxu0 %v2277
    %3177 = vmatpush1.bf16.msra.mxu0 %v2276
    %3178 = vmatprep.subr.bf16.mxu0 %v2281
    %3179 = vmatpush1.bf16.msra.mxu0 %v2280
    %3180 = vmatprep.subr.bf16.mxu0 %v2285
    %3181 = vmatpush1.bf16.msra.mxu0 %v2284
    %3182 = vmatprep.subr.bf16.mxu0 %v2289
    %3183 = vmatpush1.bf16.msra.mxu0 %v2288
    %3184 = vmatprep.subr.bf16.mxu0 0
    %3185 = vmatpush1.bf16.msra.mxu0 0
    %3186 = vmatprep.subr.bf16.mxu0 0
    %3187 = vmatpush1.bf16.msra.mxu0 0
    %3188 = vmatprep.subr.bf16.mxu0 0
    %3189 = vmatpush1.bf16.msra.mxu0 0
    %3190 = vmatprep.subr.bf16.mxu0 0
    %3191 = vmatpush1.bf16.msra.mxu0 0
    %3192 = vmatprep.subr.bf16.mxu0 0
    %3193 = vmatpush1.bf16.msra.mxu0 0
    %3194 = vmatprep.subr.bf16.mxu0 0
    %3195 = vmatpush1.bf16.msra.mxu0 0
    %3196 = vmatprep.subr.bf16.mxu0 0
    %3197 = vmatpush1.bf16.msra.mxu0 0
    %3198 = vmatprep.subr.bf16.mxu0 0
    %3199 = vmatpush1.bf16.msra.mxu0 0
    %3200 = vmatprep.mubr.bf16.mxu0 0
    %3201 = vmatmul.mubr.bf16.gmra.mrb[0].mxu0 %v3122
    %v3202 = vpop.f32.mrb[0].mxu0
    %v3203 = vadd.f32 %v3125, %v3202
    %v3204 = vpop.f32.mrb[0].mxu0
    %v3205 = vadd.f32 %v3126, %v3204
    %v3206 = vpop.f32.mrb[0].mxu0
    %v3207 = vpop.f32.mrb[0].mxu0
    %3208 = vdwg.mxu0
    %v3209 = vxor.u32 %v3162, 2147483648
    %v3210 = vmul.f32 %v3209, 1.442695
    %v3211 = vpow.pop %v3210
    %v3212 = vadd.f32 %v3211, 1.0
    %v3213 = vrcp.pop %v3212
    %v3214 = vmul.f32 1.0, %v3213
    %v3215 = vxor.u32 %v3164, 2147483648
    %v3216 = vmul.f32 %v3215, 1.442695
    %v3217 = vpow.pop %v3216
    %v3218 = vadd.f32 %v3217, 1.0
    %v3219 = vrcp.pop %v3218
    %v3220 = vmul.f32 1.0, %v3219
    %v3221 = vtanh.pop %v3203
    %v3222 = vxor.u32 %v3205, 2147483648
    %v3223 = vmul.f32 %v3222, 1.442695
    %v3224 = vpow.pop %v3223
    %v3225 = vadd.f32 %v3224, 1.0
    %v3226 = vrcp.pop %v3225
    %v3227 = vmul.f32 1.0, %v3226
    %v3228 = vld [vmem:[#allocation5] sm:$0xff]
    %v3229 = vmul.f32 %v3220, %v3228
    %v3230 = vmul.f32 %v3214, %v3221
    %v3231 = vadd.f32 %v3229, %v3230
    %v3232 = vtanh.pop %v3231
    %v3233 = vmul.f32 %v3227, %v3232
    %3234 = vst [vmem:[#allocation5] sm:$0xff] %v3231
    %3235 = vst [vmem:[#allocation4] sm:$0xff] %v3233
    %v3236 = vld [vmem:[#allocation4] sm:$0xff]
    %v3237 = vpack.c.bf16 %v3236, %v3236
    %v3238 = vld [vmem:[#allocation15] sm:$0xf]
    %v3239 = vld [vmem:[#allocation15 + $0x4] sm:$0xf]
    %v3240 = vld [vmem:[#allocation15 + $0x8] sm:$0xf]
    %v3241 = vld [vmem:[#allocation15 + $0xc] sm:$0xf]
    %v3242 = vld [vmem:[#allocation15 + $0x10] sm:$0xf]
    %v3243 = vld [vmem:[#allocation15 + $0x14] sm:$0xf]
    %v3244 = vld [vmem:[#allocation15 + $0x18] sm:$0xf]
    %v3245 = vld [vmem:[#allocation15 + $0x1c] sm:$0xf]
    %v3246 = vld [vmem:[#allocation15 + $0x20] sm:$0xf]
    %v3247 = vld [vmem:[#allocation15 + $0x24] sm:$0xf]
    %v3248 = vld [vmem:[#allocation15 + $0x28] sm:$0xf]
    %v3249 = vld [vmem:[#allocation15 + $0x2c] sm:$0xf]
    %v3250 = vld [vmem:[#allocation15 + $0x30] sm:$0xf]
    %v3251 = vld [vmem:[#allocation15 + $0x34] sm:$0xf]
    %v3252 = vld [vmem:[#allocation15 + $0x38] sm:$0xf]
    %v3253 = vld [vmem:[#allocation15 + $0x3c] sm:$0xf]
    %v3254 = vld [vmem:[%s7] sm:$0x1]
    %v3256 = vlaneseq
    %v3257 = vshrl.u32 %v3256, 7
    %v3258 = vsub.s32 0, %v3257
    %v3259 = vrot.slane %v3254, %v3258
    %v3277 = vunpack.c.l.b16 %v3238
    %v3278 = vunpack.c.l.b16 %v3239
    %v3279 = vunpack.c.l.b16 %v3240
    %v3280 = vunpack.c.l.b16 %v3241
    %v3281 = vunpack.c.l.b16 %v3242
    %v3282 = vunpack.c.l.b16 %v3243
    %v3283 = vunpack.c.l.b16 %v3244
    %v3284 = vunpack.c.l.b16 %v3245
    %v3285 = vunpack.c.l.b16 %v3246
    %v3286 = vunpack.c.l.b16 %v3247
    %v3287 = vunpack.c.l.b16 %v3248
    %v3288 = vunpack.c.l.b16 %v3249
    %v3289 = vunpack.c.l.b16 %v3250
    %v3290 = vunpack.c.l.b16 %v3251
    %v3291 = vunpack.c.l.b16 %v3252
    %v3292 = vunpack.c.l.b16 %v3253
    %v3293 = vpack.c.b16 %v3278, %v3277
    %v3294 = vpack.c.b16 %v3280, %v3279
    %v3295 = vpack.c.b16 %v3282, %v3281
    %v3296 = vpack.c.b16 %v3284, %v3283
    %v3297 = vpack.c.b16 %v3286, %v3285
    %v3298 = vpack.c.b16 %v3288, %v3287
    %v3299 = vpack.c.b16 %v3290, %v3289
    %v3300 = vpack.c.b16 %v3292, %v3291
    %3309 = vmatprep.subr.bf16.mxu0 0
    %3310 = vmatpush1.bf16.msra.mxu0 %v3293
    %3311 = vmatprep.subr.bf16.mxu0 0
    %3312 = vmatpush1.bf16.msra.mxu0 %v3294
    %3313 = vmatprep.subr.bf16.mxu0 0
    %3314 = vmatpush1.bf16.msra.mxu0 %v3295
    %3315 = vmatprep.subr.bf16.mxu0 0
    %3316 = vmatpush1.bf16.msra.mxu0 %v3296
    %3317 = vmatprep.subr.bf16.mxu0 0
    %3318 = vmatpush1.bf16.msra.mxu0 %v3297
    %3319 = vmatprep.subr.bf16.mxu0 0
    %3320 = vmatpush1.bf16.msra.mxu0 %v3298
    %3321 = vmatprep.subr.bf16.mxu0 0
    %3322 = vmatpush1.bf16.msra.mxu0 %v3299
    %3323 = vmatprep.subr.bf16.mxu0 0
    %3324 = vmatpush1.bf16.msra.mxu0 %v3300
    %3325 = vmatprep.subr.bf16.mxu0 0
    %3326 = vmatpush1.bf16.msra.mxu0 0
    %3327 = vmatprep.subr.bf16.mxu0 0
    %3328 = vmatpush1.bf16.msra.mxu0 0
    %3329 = vmatprep.subr.bf16.mxu0 0
    %3330 = vmatpush1.bf16.msra.mxu0 0
    %3331 = vmatprep.subr.bf16.mxu0 0
    %3332 = vmatpush1.bf16.msra.mxu0 0
    %3333 = vmatprep.subr.bf16.mxu0 0
    %3334 = vmatpush1.bf16.msra.mxu0 0
    %3335 = vmatprep.subr.bf16.mxu0 0
    %3336 = vmatpush1.bf16.msra.mxu0 0
    %3337 = vmatprep.subr.bf16.mxu0 0
    %3338 = vmatpush1.bf16.msra.mxu0 0
    %3339 = vmatprep.subr.bf16.mxu0 0
    %3340 = vmatpush1.bf16.msra.mxu0 0
    %3341 = vmatprep.mubr.bf16.mxu0 0
    %3342 = vmatmul.mubr.bf16.gmra.mrb[0].mxu0 %v3237
    %v3343 = vpop.f32.mrb[0].mxu0
    %v3344 = vadd.f32 %v3259, %v3343
    %v3345 = vpop.f32.mrb[0].mxu0
    %v3346 = vpop.f32.mrb[0].mxu0
    %v3347 = vpop.f32.mrb[0].mxu0
    %3348 = vdwg.mxu0
    %v3349 = vmax.f32 %v3344, 0.0
    %v3350 = vpack.c.bf16 %v3349, %v3349
    %v3351 = vld [vmem:[#allocation17] sm:$0xf]
    %v3352 = vld [vmem:[#allocation17 + $0x4] sm:$0xf]
    %v3353 = vld [vmem:[#allocation17 + $0x8] sm:$0xf]
    %v3354 = vld [vmem:[#allocation17 + $0xc] sm:$0xf]
    %v3355 = vld [vmem:[#allocation17 + $0x10] sm:$0xf]
    %v3356 = vld [vmem:[#allocation17 + $0x14] sm:$0xf]
    %v3357 = vld [vmem:[#allocation17 + $0x18] sm:$0xf]
    %v3358 = vld [vmem:[#allocation17 + $0x1c] sm:$0xf]
    %v3359 = vld [vmem:[#allocation17 + $0x20] sm:$0xf]
    %v3360 = vld [vmem:[#allocation17 + $0x24] sm:$0xf]
    %v3361 = vld [vmem:[#allocation17 + $0x28] sm:$0xf]
    %v3362 = vld [vmem:[#allocation17 + $0x2c] sm:$0xf]
    %v3363 = vld [vmem:[#allocation17 + $0x30] sm:$0xf]
    %v3364 = vld [vmem:[#allocation17 + $0x34] sm:$0xf]
    %v3365 = vld [vmem:[#allocation17 + $0x38] sm:$0xf]
    %v3366 = vld [vmem:[#allocation17 + $0x3c] sm:$0xf]
    %v3367 = vld [vmem:[%s9] sm:$0x1]
    %v3369 = vlaneseq
    %v3370 = vshrl.u32 %v3369, 7
    %v3371 = vsub.s32 0, %v3370
    %v3372 = vrot.slane %v3367, %v3371
    %v3390 = vunpack.c.l.b16 %v3351
    %v3391 = vunpack.c.l.b16 %v3352
    %v3392 = vunpack.c.l.b16 %v3353
    %v3393 = vunpack.c.l.b16 %v3354
    %v3394 = vunpack.c.l.b16 %v3355
    %v3395 = vunpack.c.l.b16 %v3356
    %v3396 = vunpack.c.l.b16 %v3357
    %v3397 = vunpack.c.l.b16 %v3358
    %v3398 = vunpack.c.l.b16 %v3359
    %v3399 = vunpack.c.l.b16 %v3360
    %v3400 = vunpack.c.l.b16 %v3361
    %v3401 = vunpack.c.l.b16 %v3362
    %v3402 = vunpack.c.l.b16 %v3363
    %v3403 = vunpack.c.l.b16 %v3364
    %v3404 = vunpack.c.l.b16 %v3365
    %v3405 = vunpack.c.l.b16 %v3366
    %v3406 = vpack.c.b16 %v3391, %v3390
    %v3407 = vpack.c.b16 %v3393, %v3392
    %v3408 = vpack.c.b16 %v3395, %v3394
    %v3409 = vpack.c.b16 %v3397, %v3396
    %v3410 = vpack.c.b16 %v3399, %v3398
    %v3411 = vpack.c.b16 %v3401, %v3400
    %v3412 = vpack.c.b16 %v3403, %v3402
    %v3413 = vpack.c.b16 %v3405, %v3404
    %3422 = vmatprep.subr.bf16.mxu0 0
    %3423 = vmatpush1.bf16.msra.mxu0 %v3406
    %3424 = vmatprep.subr.bf16.mxu0 0
    %3425 = vmatpush1.bf16.msra.mxu0 %v3407
    %3426 = vmatprep.subr.bf16.mxu0 0
    %3427 = vmatpush1.bf16.msra.mxu0 %v3408
    %3428 = vmatprep.subr.bf16.mxu0 0
    %3429 = vmatpush1.bf16.msra.mxu0 %v3409
    %3430 = vmatprep.subr.bf16.mxu0 0
    %3431 = vmatpush1.bf16.msra.mxu0 %v3410
    %3432 = vmatprep.subr.bf16.mxu0 0
    %3433 = vmatpush1.bf16.msra.mxu0 %v3411
    %3434 = vmatprep.subr.bf16.mxu0 0
    %3435 = vmatpush1.bf16.msra.mxu0 %v3412
    %3436 = vmatprep.subr.bf16.mxu0 0
    %3437 = vmatpush1.bf16.msra.mxu0 %v3413
    %3438 = vmatprep.subr.bf16.mxu0 0
    %3439 = vmatpush1.bf16.msra.mxu0 0
    %3440 = vmatprep.subr.bf16.mxu0 0
    %3441 = vmatpush1.bf16.msra.mxu0 0
    %3442 = vmatprep.subr.bf16.mxu0 0
    %3443 = vmatpush1.bf16.msra.mxu0 0
    %3444 = vmatprep.subr.bf16.mxu0 0
    %3445 = vmatpush1.bf16.msra.mxu0 0
    %3446 = vmatprep.subr.bf16.mxu0 0
    %3447 = vmatpush1.bf16.msra.mxu0 0
    %3448 = vmatprep.subr.bf16.mxu0 0
    %3449 = vmatpush1.bf16.msra.mxu0 0
    %3450 = vmatprep.subr.bf16.mxu0 0
    %3451 = vmatpush1.bf16.msra.mxu0 0
    %3452 = vmatprep.subr.bf16.mxu0 0
    %3453 = vmatpush1.bf16.msra.mxu0 0
    %3454 = vmatprep.mubr.bf16.mxu0 0
    %3455 = vmatmul.mubr.bf16.gmra.mrb[0].mxu0 %v3350
    %v3456 = vpop.f32.mrb[0].mxu0
    %v3457 = vadd.f32 %v3372, %v3456
    %v3458 = vpop.f32.mrb[0].mxu0
    %v3459 = vpop.f32.mrb[0].mxu0
    %v3460 = vpop.f32.mrb[0].mxu0
    %3461 = vdwg.mxu0
    %3462 = vst [vmem:[#allocation18] sm:$0xff] %v3457
    // Predicated region
    $region70: #{tpu_custom_call.1} parent=1 // pred_check
      _
    $region71: #{tpu_custom_call.1} parent=1 // pred_check_branch
      %3464 = sbr.rel (0) target = $region73
    $region72: #{tpu_custom_call.1} parent=1 // pred_region
      %s3466 = ssub.s32 128, 128
      %3467 = vsyncadd [#allocation8], %s3466
      %s3469 = sshll.u32 [#allocation18], 4
      %s3470 = int_to_ptr.vmem [resolvable:$true] %s3469
      %3472 = dma.vmem_to_hbm [thread:$0]  %s3470, 128, %s10, [#allocation8]
    $region73: #{tpu_custom_call.1} parent=1 // pred_fallthru
      _
    // Predicated region
    $region74: #{tpu_custom_call.1} parent=1 // pred_check
      _
    $region75: #{tpu_custom_call.1} parent=1 // pred_check_branch
      %3474 = sbr.rel (0) target = $region77
    $region76: #{tpu_custom_call.1} parent=1 // pred_region
      %3475 = dma.done [#allocation8], 128
    $region77: #{tpu_custom_call.1} parent=1 // pred_fallthru
      _
    %3476 = vsyncpa [#allocation7], 1
    %3477 = vsyncpa [#allocation10], 1
    %3478 = vsyncpa [#allocation13], 1
    %3479 = vsyncpa [#allocation16], 1
    %3480 = vsyncpa [#allocation8], 1

</llo_original>
